<compile_context>
chip_gen: v5e
topology: v5e:2x2
jax: 0.10.0
libtpu: 0.0.40
codegen_flags: <defaults>
</compile_context>

<pallas_src>
import jax
import jax.numpy as jnp
from jax.experimental import pallas as pl
from jax.experimental.pallas import tpu as pltpu

LANE = 128      # vreg lane width
SUBLANE = 8     # f32 sublane count


def _round_up(a, b):
    return ((a + b - 1) // b) * b


# ----------------------------- Pallas kernel ------------------------------- #

def _mlp_fused_kernel(x_ref, w1_ref, b1_ref, w2_ref, b2_ref, o_ref):
    """Fused flatten->FC1->ReLU->FC2 for one row tile.

    x_ref : (TM, Kp)  bf16 flattened input rows (K zero-padded to Kp)
    w1_ref: (Kp, H)   bf16 fc1 weight (in, out), rows zero-padded
    b1_ref: (1, H)    f32  fc1 bias
    w2_ref: (H, Cp)   bf16 fc3 weight (in, out), cols zero-padded to 128
    b2_ref: (1, Cp)   f32  fc3 bias (zero-padded)
    o_ref : (TM, Cp)  f32  logits (padded classes)
    """
    # FC1: bf16 x bf16 -> f32 accumulate on the MXU.
    h = jnp.dot(x_ref[...], w1_ref[...], preferred_element_type=jnp.float32)
    # Bias + ReLU in f32 on the VPU, then back to bf16 to feed the MXU for FC2.
    h = jnp.maximum(h + b1_ref[...], 0.0).astype(jnp.bfloat16)
    # FC2: bf16 x bf16 -> f32 accumulate, bias in f32.
    o = jnp.dot(h, w2_ref[...], preferred_element_type=jnp.float32) + b2_ref[...]
    o_ref[...] = o.astype(o_ref.dtype)


# ------------------------------ JAX wrappers -------------------------------- #

def mlp_forward_2d(x, w1, b1, w2, b2, *, max_row_tile=512):
    """x: (N, K) f32; w1: (K, H); b1: (H,); w2: (H, C); b2: (C,). Returns (N, C) f32."""
    N, K = x.shape
    H = w1.shape[1]
    C = w2.shape[1]

    Kp = _round_up(K, LANE)   # 784 -> 896: aligned loads, full MXU K passes
    Cp = _round_up(C, LANE)   # 10  -> 128: lane-dense unmasked output stores

    # Row tile: >=2 grid steps for N >= 16 so "parallel" can use both v7x TCs;
    # otherwise a single small sublane-padded tile.
    if N >= 16:
        TM = min(max_row_tile, _round_up((N + 1) // 2, SUBLANE))
    else:
        TM = _round_up(max(N, 1), SUBLANE)
    Np = _round_up(N, TM)

    # bf16 MXU inputs + zero padding (pad rows/cols contribute exact zeros).
    xb = jnp.pad(x.astype(jnp.bfloat16), ((0, Np - N), (0, Kp - K)))
    w1b = jnp.pad(w1.astype(jnp.bfloat16), ((0, Kp - K), (0, 0)))
    w2b = jnp.pad(w2.astype(jnp.bfloat16), ((0, 0), (0, Cp - C)))
    b1f = b1.astype(jnp.float32).reshape(1, H)
    b2f = jnp.pad(b2.astype(jnp.float32), (0, Cp - C)).reshape(1, Cp)

    flops = 2 * Np * Kp * H + 2 * Np * H * Cp
    bytes_accessed = (
        2 * (Np * Kp + Kp * H + H * Cp)      # bf16: x, w1, w2
        + 4 * (H + Cp + Np * Cp)             # f32: b1, b2, out
    )

    out = pl.pallas_call(
        _mlp_fused_kernel,
        out_shape=jax.ShapeDtypeStruct((Np, Cp), jnp.float32),
        grid_spec=pltpu.PrefetchScalarGridSpec(
            num_scalar_prefetch=0,
            grid=(Np // TM,),
            in_specs=[
                # x rows: the only operand that changes per grid step.
                pl.BlockSpec((TM, Kp), lambda i: (i, 0)),
                # Grid-invariant, VMEM-resident operands: single-buffered.
                pl.BlockSpec((Kp, H), lambda i: (0, 0),
                             pipeline_mode=pl.Buffered(1)),
                pl.BlockSpec((1, H), lambda i: (0, 0),
                             pipeline_mode=pl.Buffered(1)),
                pl.BlockSpec((H, Cp), lambda i: (0, 0),
                             pipeline_mode=pl.Buffered(1)),
                pl.BlockSpec((1, Cp), lambda i: (0, 0),
                             pipeline_mode=pl.Buffered(1)),
            ],
            out_specs=pl.BlockSpec((TM, Cp), lambda i: (i, 0)),
        ),
        compiler_params=pltpu.CompilerParams(
            dimension_semantics=("parallel",),     # independent row tiles
            vmem_limit_bytes=48 * 1024 * 1024,
        ),
        cost_estimate=pl.CostEstimate(
            flops=flops, transcendentals=0, bytes_accessed=bytes_accessed),
    )(xb, w1b, b1f, w2b, b2f)

    return out[:N, :C]


def init_params(key, input_shape=(1, 28, 28), sz_hids=(1024,), num_classes=10):
    """Matches PyTorch MLP(input_shape, sz_hids=[1024], num_classes=10) init."""
    in_dim = input_shape[0] * input_shape[1] * input_shape[2]
    hid = sz_hids[0]
    k1, k2, k3, k4 = jax.random.split(key, 4)
    s1 = 1.0 / float(in_dim) ** 0.5
    s2 = 1.0 / float(hid) ** 0.5
    return {
        "w1": jax.random.uniform(k1, (in_dim, hid), jnp.float32, -s1, s1),
        "b1": jax.random.uniform(k2, (hid,), jnp.float32, -s1, s1),
        "w2": jax.random.uniform(k3, (hid, num_classes), jnp.float32, -s2, s2),
        "b2": jax.random.uniform(k4, (num_classes,), jnp.float32, -s2, s2),
    }


@jax.jit
def mlp_forward(x_nchw, params):
    # torch.flatten(x, 1) on a contiguous NCHW tensor == row-major reshape.
    N = x_nchw.shape[0]
    x = x_nchw.reshape(N, -1).astype(jnp.float32)
    return mlp_forward_2d(x, params["w1"], params["b1"],
                          params["w2"], params["b2"])


# --------------------------------- checks ----------------------------------- #

def _ref_bf16(xf, params):
    """Plain-JAX reference of the exact bf16-input / f32-accum computation."""
    h = jnp.dot(xf.astype(jnp.bfloat16), params["w1"].astype(jnp.bfloat16),
                preferred_element_type=jnp.float32) + params["b1"]
    h = jnp.maximum(h, 0.0).astype(jnp.bfloat16)
    return jnp.dot(h, params["w2"].astype(jnp.bfloat16),
                   preferred_element_type=jnp.float32) + params["b2"]


def _ref_f32(xf, params):
    """Plain f32 reference of the PyTorch forward pass."""
    h = jnp.maximum(xf @ params["w1"] + params["b1"], 0.0)
    return h @ params["w2"] + params["b2"]


if __name__ == "__main__":
    key = jax.random.PRNGKey(0)
    k_x, k_x2, k_p = jax.random.split(key, 3)
    params = init_params(k_p)

    # Small batch (single row tile, grid=(1,)).
    x = jax.random.normal(k_x, (2, 1, 28, 28), jnp.float32)   # NCHW like PyTorch
    out = mlp_forward(x, params)
    jax.block_until_ready(out)
    assert out.shape == (2, 10), out.shape
    xf = x.reshape(2, -1)
    assert jnp.allclose(out, _ref_bf16(xf, params), atol=2e-3, rtol=2e-3)
    assert jnp.allclose(out, _ref_f32(xf, params), atol=5e-2, rtol=5e-2)

    # Slightly larger batch: exercises the multi-tile (2-step) grid path.
    x2 = jax.random.normal(k_x2, (24, 1, 28, 28), jnp.float32)
    out2 = mlp_forward(x2, params)
    jax.block_until_ready(out2)
    assert out2.shape == (24, 10), out2.shape
    xf2 = x2.reshape(24, -1)
    assert jnp.allclose(out2, _ref_bf16(xf2, params), atol=2e-3, rtol=2e-3)
    assert jnp.allclose(out2, _ref_f32(xf2, params), atol=5e-2, rtol=5e-2)

    print("KERNEL_OK")
</pallas_src>

<mosaic_0001>
module attributes {stable_mosaic.version = 11 : i64} {
  func.func @_mlp_fused_kernel(%arg0: i32, %arg1: memref<8x896xbf16, #tpu.memory_space<vmem>>, %arg2: memref<896x1024xbf16, #tpu.memory_space<vmem>>, %arg3: memref<1x1024xf32, #tpu.memory_space<vmem>>, %arg4: memref<1024x128xbf16, #tpu.memory_space<vmem>>, %arg5: memref<1x128xf32, #tpu.memory_space<vmem>>, %arg6: memref<8x128xf32, #tpu.memory_space<vmem>>) attributes {dimension_semantics = [#tpu.dimension_semantics<parallel>], iteration_bounds = array<i64: 1>, scalar_prefetch = 0 : i64, scratch_operands = 0 : i64, tpu.core_type = #tpu.core_type<tc>, window_params = [{transform_indices = @transform_0, window_bounds = array<i64: 8, 896>}, {pipeline_mode = #tpu.pipeline_mode<synchronous>, transform_indices = @transform_1, window_bounds = array<i64: 896, 1024>}, {pipeline_mode = #tpu.pipeline_mode<synchronous>, transform_indices = @transform_2, window_bounds = array<i64: 1, 1024>}, {pipeline_mode = #tpu.pipeline_mode<synchronous>, transform_indices = @transform_3, window_bounds = array<i64: 1024, 128>}, {pipeline_mode = #tpu.pipeline_mode<synchronous>, transform_indices = @transform_4, window_bounds = array<i64: 1, 128>}, {transform_indices = @transform_5, window_bounds = array<i64: 8, 128>}]} {
    %c0 = arith.constant 0 : index
    %c0_0 = arith.constant 0 : index
    %0 = vector.load %arg1[%c0, %c0_0] : memref<8x896xbf16, #tpu.memory_space<vmem>>, vector<8x896xbf16>
    %c0_1 = arith.constant 0 : index
    %c0_2 = arith.constant 0 : index
    %1 = vector.load %arg2[%c0_1, %c0_2] : memref<896x1024xbf16, #tpu.memory_space<vmem>>, vector<896x1024xbf16>
    %cst = arith.constant dense<0.000000e+00> : vector<8x1024xf32>
    %2 = tpu.matmul %0, %1, %cst {dimension_numbers = #tpu.dot_dimension_numbers<[1], [0], [0], [1], [0, 0, 1, 1], [], []>} : vector<8x896xbf16>, vector<896x1024xbf16>, vector<8x1024xf32> -> vector<8x1024xf32>
    %c0_3 = arith.constant 0 : index
    %c0_4 = arith.constant 0 : index
    %3 = vector.load %arg3[%c0_3, %c0_4] : memref<1x1024xf32, #tpu.memory_space<vmem>>, vector<1x1024xf32>
    %4 = vector.broadcast %3 : vector<1x1024xf32> to vector<8x1024xf32>
    %5 = arith.addf %2, %4 : vector<8x1024xf32>
    %cst_5 = arith.constant 0.000000e+00 : f32
    %6 = vector.broadcast %cst_5 : f32 to vector<8x1024xf32>
    %7 = arith.maximumf %5, %6 : vector<8x1024xf32>
    %8 = arith.truncf %7 : vector<8x1024xf32> to vector<8x1024xbf16>
    %c0_6 = arith.constant 0 : index
    %c0_7 = arith.constant 0 : index
    %9 = vector.load %arg4[%c0_6, %c0_7] : memref<1024x128xbf16, #tpu.memory_space<vmem>>, vector<1024x128xbf16>
    %cst_8 = arith.constant dense<0.000000e+00> : vector<8x128xf32>
    %10 = tpu.matmul %8, %9, %cst_8 {dimension_numbers = #tpu.dot_dimension_numbers<[1], [0], [0], [1], [0, 0, 1, 1], [], []>} : vector<8x1024xbf16>, vector<1024x128xbf16>, vector<8x128xf32> -> vector<8x128xf32>
    %c0_9 = arith.constant 0 : index
    %c0_10 = arith.constant 0 : index
    %11 = vector.load %arg5[%c0_9, %c0_10] : memref<1x128xf32, #tpu.memory_space<vmem>>, vector<1x128xf32>
    %12 = vector.broadcast %11 : vector<1x128xf32> to vector<8x128xf32>
    %13 = arith.addf %10, %12 : vector<8x128xf32>
    %c0_11 = arith.constant 0 : index
    %c0_12 = arith.constant 0 : index
    %14 = vector.load %arg6[%c0_11, %c0_12] : memref<8x128xf32, #tpu.memory_space<vmem>>, vector<8x128xf32>
    tpu.vector_store %arg6[%c0_11, %c0_12], %13 {strides = array<i32>} : memref<8x128xf32, #tpu.memory_space<vmem>>, vector<8x128xf32>,
    return
  }
  func.func @transform_0(%arg0: i32) -> (i32, i32) {
    %c0_i32 = arith.constant 0 : i32
    %c0_i32_0 = arith.constant 0 : i32
    return %arg0, %c0_i32 : i32, i32
  }
  func.func @transform_1(%arg0: i32) -> (i32, i32) {
    %c0_i32 = arith.constant 0 : i32
    %c0_i32_0 = arith.constant 0 : i32
    %c0_i32_1 = arith.constant 0 : i32
    return %c0_i32, %c0_i32_0 : i32, i32
  }
  func.func @transform_2(%arg0: i32) -> (i32, i32) {
    %c0_i32 = arith.constant 0 : i32
    %c0_i32_0 = arith.constant 0 : i32
    %c0_i32_1 = arith.constant 0 : i32
    return %c0_i32, %c0_i32_0 : i32, i32
  }
  func.func @transform_3(%arg0: i32) -> (i32, i32) {
    %c0_i32 = arith.constant 0 : i32
    %c0_i32_0 = arith.constant 0 : i32
    %c0_i32_1 = arith.constant 0 : i32
    return %c0_i32, %c0_i32_0 : i32, i32
  }
  func.func @transform_4(%arg0: i32) -> (i32, i32) {
    %c0_i32 = arith.constant 0 : i32
    %c0_i32_0 = arith.constant 0 : i32
    %c0_i32_1 = arith.constant 0 : i32
    return %c0_i32, %c0_i32_0 : i32, i32
  }
  func.func @transform_5(%arg0: i32) -> (i32, i32) {
    %c0_i32 = arith.constant 0 : i32
    %c0_i32_0 = arith.constant 0 : i32
    return %arg0, %c0_i32 : i32, i32
  }
}

</mosaic_0001>

<llo_original>
// kernel: mlp_forward.1
$region0: #{mlp_forward.1}
  #allocation0 [shape = 'u32[]', space=smem, size = 0x4, offset = 0x4, fixed_abs, tag = 'smem constant byte address 0x4 - core index']
  #allocation1 [shape = 'u32[72,128]{1,0:T(1,128)}', space=vmem, size = 0x9000, scoped, tag = 'internal scratch']
  %s0 = inlined_call_operand.vmem [shape: bf16[8,896], index: 0, kind: input, shape index: {}]
  %s1 = inlined_call_operand.vmem [shape: bf16[896,1024], index: 1, kind: input, shape index: {}]
  %s2 = inlined_call_operand.vmem [shape: f32[1,1024], index: 2, kind: input, shape index: {}]
  %s3 = inlined_call_operand.vmem [shape: bf16[1024,128], index: 3, kind: input, shape index: {}]
  %s4 = inlined_call_operand.vmem [shape: f32[1,128], index: 4, kind: input, shape index: {}]
  %s5 = inlined_call_operand.vmem [shape: f32[8,128], index: 5, kind: output, shape index: {}]
  %s6 = sld [smem:[#allocation0]]
  $region30: #{mlp_forward.1} parent=0
    _
  %s8 = ssub.s32 1, %s6
  %s9 = scalar_select 0, %s8, %s6
  // Predicated region
  $region2: #{mlp_forward.1} parent=0 // pred_check
    _
  $region3: #{mlp_forward.1} parent=0 // pred_check_branch
    %11 = sbr.rel (0) target = $region5
  $region4: #{mlp_forward.1} parent=0 // pred_region
    _
  $region5: #{mlp_forward.1} parent=0 // pred_fallthru
    _
  // Predicated region
  $region6: #{mlp_forward.1} parent=0 // pred_check
    _
  $region7: #{mlp_forward.1} parent=0 // pred_check_branch
    %13 = sbr.rel (0) target = $region9
  $region8: #{mlp_forward.1} parent=0 // pred_region
    _
  $region9: #{mlp_forward.1} parent=0 // pred_fallthru
    _
  // Predicated region
  $region10: #{mlp_forward.1} parent=0 // pred_check
    _
  $region11: #{mlp_forward.1} parent=0 // pred_check_branch
    %15 = sbr.rel (0) target = $region13
  $region12: #{mlp_forward.1} parent=0 // pred_region
    _
  $region13: #{mlp_forward.1} parent=0 // pred_fallthru
    _
  // Predicated region
  $region14: #{mlp_forward.1} parent=0 // pred_check
    _
  $region15: #{mlp_forward.1} parent=0 // pred_check_branch
    %17 = sbr.rel (0) target = $region17
  $region16: #{mlp_forward.1} parent=0 // pred_region
    _
  $region17: #{mlp_forward.1} parent=0 // pred_fallthru
    _
  // Predicated region
  $region18: #{mlp_forward.1} parent=0 // pred_check
    _
  $region19: #{mlp_forward.1} parent=0 // pred_check_branch
    %19 = sbr.rel (0) target = $region21
  $region20: #{mlp_forward.1} parent=0 // pred_region
    _
  $region21: #{mlp_forward.1} parent=0 // pred_fallthru
    _
  %v20 = vld [vmem:[%s0] sm:$0xff]
  %v21 = vld [vmem:[%s0 + $0x8] sm:$0xff]
  %v22 = vld [vmem:[%s0 + $0x10] sm:$0xff]
  %v23 = vld [vmem:[%s0 + $0x18] sm:$0xf]
  %v24 = vld [vmem:[%s1] sm:$0xff]
  %v25 = vld [vmem:[%s1 + $0x8] sm:$0xff]
  %v26 = vld [vmem:[%s1 + $0x10] sm:$0xff]
  %v27 = vld [vmem:[%s1 + $0x18] sm:$0xff]
  %v28 = vld [vmem:[%s1 + $0x20] sm:$0xff]
  %v29 = vld [vmem:[%s1 + $0x28] sm:$0xff]
  %v30 = vld [vmem:[%s1 + $0x30] sm:$0xff]
  %v31 = vld [vmem:[%s1 + $0x38] sm:$0xff]
  %v32 = vld [vmem:[%s1 + $0x40] sm:$0xff]
  %v33 = vld [vmem:[%s1 + $0x48] sm:$0xff]
  %v34 = vld [vmem:[%s1 + $0x50] sm:$0xff]
  %v35 = vld [vmem:[%s1 + $0x58] sm:$0xff]
  %v36 = vld [vmem:[%s1 + $0x60] sm:$0xff]
  %v37 = vld [vmem:[%s1 + $0x68] sm:$0xff]
  %v38 = vld [vmem:[%s1 + $0x70] sm:$0xff]
  %v39 = vld [vmem:[%s1 + $0x78] sm:$0xff]
  %v40 = vld [vmem:[%s1 + $0x80] sm:$0xff]
  %v41 = vld [vmem:[%s1 + $0x88] sm:$0xff]
  %v42 = vld [vmem:[%s1 + $0x90] sm:$0xff]
  %v43 = vld [vmem:[%s1 + $0x98] sm:$0xff]
  %v44 = vld [vmem:[%s1 + $0xa0] sm:$0xff]
  %v45 = vld [vmem:[%s1 + $0xa8] sm:$0xff]
  %v46 = vld [vmem:[%s1 + $0xb0] sm:$0xff]
  %v47 = vld [vmem:[%s1 + $0xb8] sm:$0xff]
  %v48 = vld [vmem:[%s1 + $0xc0] sm:$0xff]
  %v49 = vld [vmem:[%s1 + $0xc8] sm:$0xff]
  %v50 = vld [vmem:[%s1 + $0xd0] sm:$0xff]
  %v51 = vld [vmem:[%s1 + $0xd8] sm:$0xff]
  %v52 = vld [vmem:[%s1 + $0xe0] sm:$0xff]
  %v53 = vld [vmem:[%s1 + $0xe8] sm:$0xff]
  %v54 = vld [vmem:[%s1 + $0xf0] sm:$0xff]
  %v55 = vld [vmem:[%s1 + $0xf8] sm:$0xff]
  %v56 = vld [vmem:[%s1 + $0x100] sm:$0xff]
  %v57 = vld [vmem:[%s1 + $0x108] sm:$0xff]
  %v58 = vld [vmem:[%s1 + $0x110] sm:$0xff]
  %v59 = vld [vmem:[%s1 + $0x118] sm:$0xff]
  %v60 = vld [vmem:[%s1 + $0x120] sm:$0xff]
  %v61 = vld [vmem:[%s1 + $0x128] sm:$0xff]
  %v62 = vld [vmem:[%s1 + $0x130] sm:$0xff]
  %v63 = vld [vmem:[%s1 + $0x138] sm:$0xff]
  %v64 = vld [vmem:[%s1 + $0x140] sm:$0xff]
  %v65 = vld [vmem:[%s1 + $0x148] sm:$0xff]
  %v66 = vld [vmem:[%s1 + $0x150] sm:$0xff]
  %v67 = vld [vmem:[%s1 + $0x158] sm:$0xff]
  %v68 = vld [vmem:[%s1 + $0x160] sm:$0xff]
  %v69 = vld [vmem:[%s1 + $0x168] sm:$0xff]
  %v70 = vld [vmem:[%s1 + $0x170] sm:$0xff]
  %v71 = vld [vmem:[%s1 + $0x178] sm:$0xff]
  %v72 = vld [vmem:[%s1 + $0x180] sm:$0xff]
  %v73 = vld [vmem:[%s1 + $0x188] sm:$0xff]
  %v74 = vld [vmem:[%s1 + $0x190] sm:$0xff]
  %v75 = vld [vmem:[%s1 + $0x198] sm:$0xff]
  %v76 = vld [vmem:[%s1 + $0x1a0] sm:$0xff]
  %v77 = vld [vmem:[%s1 + $0x1a8] sm:$0xff]
  %v78 = vld [vmem:[%s1 + $0x1b0] sm:$0xff]
  %v79 = vld [vmem:[%s1 + $0x1b8] sm:$0xff]
  %v80 = vld [vmem:[%s1 + $0x1c0] sm:$0xff]
  %v81 = vld [vmem:[%s1 + $0x1c8] sm:$0xff]
  %v82 = vld [vmem:[%s1 + $0x1d0] sm:$0xff]
  %v83 = vld [vmem:[%s1 + $0x1d8] sm:$0xff]
  %v84 = vld [vmem:[%s1 + $0x1e0] sm:$0xff]
  %v85 = vld [vmem:[%s1 + $0x1e8] sm:$0xff]
  %v86 = vld [vmem:[%s1 + $0x1f0] sm:$0xff]
  %v87 = vld [vmem:[%s1 + $0x1f8] sm:$0xff]
  %v88 = vld [vmem:[%s1 + $0x200] sm:$0xff]
  %v89 = vld [vmem:[%s1 + $0x208] sm:$0xff]
  %v90 = vld [vmem:[%s1 + $0x210] sm:$0xff]
  %v91 = vld [vmem:[%s1 + $0x218] sm:$0xff]
  %v92 = vld [vmem:[%s1 + $0x220] sm:$0xff]
  %v93 = vld [vmem:[%s1 + $0x228] sm:$0xff]
  %v94 = vld [vmem:[%s1 + $0x230] sm:$0xff]
  %v95 = vld [vmem:[%s1 + $0x238] sm:$0xff]
  %v96 = vld [vmem:[%s1 + $0x240] sm:$0xff]
  %v97 = vld [vmem:[%s1 + $0x248] sm:$0xff]
  %v98 = vld [vmem:[%s1 + $0x250] sm:$0xff]
  %v99 = vld [vmem:[%s1 + $0x258] sm:$0xff]
  %v100 = vld [vmem:[%s1 + $0x260] sm:$0xff]
  %v101 = vld [vmem:[%s1 + $0x268] sm:$0xff]
  %v102 = vld [vmem:[%s1 + $0x270] sm:$0xff]
  %v103 = vld [vmem:[%s1 + $0x278] sm:$0xff]
  %v104 = vld [vmem:[%s1 + $0x280] sm:$0xff]
  %v105 = vld [vmem:[%s1 + $0x288] sm:$0xff]
  %v106 = vld [vmem:[%s1 + $0x290] sm:$0xff]
  %v107 = vld [vmem:[%s1 + $0x298] sm:$0xff]
  %v108 = vld [vmem:[%s1 + $0x2a0] sm:$0xff]
  %v109 = vld [vmem:[%s1 + $0x2a8] sm:$0xff]
  %v110 = vld [vmem:[%s1 + $0x2b0] sm:$0xff]
  %v111 = vld [vmem:[%s1 + $0x2b8] sm:$0xff]
  %v112 = vld [vmem:[%s1 + $0x2c0] sm:$0xff]
  %v113 = vld [vmem:[%s1 + $0x2c8] sm:$0xff]
  %v114 = vld [vmem:[%s1 + $0x2d0] sm:$0xff]
  %v115 = vld [vmem:[%s1 + $0x2d8] sm:$0xff]
  %v116 = vld [vmem:[%s1 + $0x2e0] sm:$0xff]
  %v117 = vld [vmem:[%s1 + $0x2e8] sm:$0xff]
  %v118 = vld [vmem:[%s1 + $0x2f0] sm:$0xff]
  %v119 = vld [vmem:[%s1 + $0x2f8] sm:$0xff]
  %v120 = vld [vmem:[%s1 + $0x300] sm:$0xff]
  %v121 = vld [vmem:[%s1 + $0x308] sm:$0xff]
  %v122 = vld [vmem:[%s1 + $0x310] sm:$0xff]
  %v123 = vld [vmem:[%s1 + $0x318] sm:$0xff]
  %v124 = vld [vmem:[%s1 + $0x320] sm:$0xff]
  %v125 = vld [vmem:[%s1 + $0x328] sm:$0xff]
  %v126 = vld [vmem:[%s1 + $0x330] sm:$0xff]
  %v127 = vld [vmem:[%s1 + $0x338] sm:$0xff]
  %v128 = vld [vmem:[%s1 + $0x340] sm:$0xff]
  %v129 = vld [vmem:[%s1 + $0x348] sm:$0xff]
  %v130 = vld [vmem:[%s1 + $0x350] sm:$0xff]
  %v131 = vld [vmem:[%s1 + $0x358] sm:$0xff]
  %v132 = vld [vmem:[%s1 + $0x360] sm:$0xff]
  %v133 = vld [vmem:[%s1 + $0x368] sm:$0xff]
  %v134 = vld [vmem:[%s1 + $0x370] sm:$0xff]
  %v135 = vld [vmem:[%s1 + $0x378] sm:$0xff]
  %v136 = vld [vmem:[%s1 + $0x380] sm:$0xff]
  %v137 = vld [vmem:[%s1 + $0x388] sm:$0xff]
  %v138 = vld [vmem:[%s1 + $0x390] sm:$0xff]
  %v139 = vld [vmem:[%s1 + $0x398] sm:$0xff]
  %v140 = vld [vmem:[%s1 + $0x3a0] sm:$0xff]
  %v141 = vld [vmem:[%s1 + $0x3a8] sm:$0xff]
  %v142 = vld [vmem:[%s1 + $0x3b0] sm:$0xff]
  %v143 = vld [vmem:[%s1 + $0x3b8] sm:$0xff]
  %v144 = vld [vmem:[%s1 + $0x3c0] sm:$0xff]
  %v145 = vld [vmem:[%s1 + $0x3c8] sm:$0xff]
  %v146 = vld [vmem:[%s1 + $0x3d0] sm:$0xff]
  %v147 = vld [vmem:[%s1 + $0x3d8] sm:$0xff]
  %v148 = vld [vmem:[%s1 + $0x3e0] sm:$0xff]
  %v149 = vld [vmem:[%s1 + $0x3e8] sm:$0xff]
  %v150 = vld [vmem:[%s1 + $0x3f0] sm:$0xff]
  %v151 = vld [vmem:[%s1 + $0x3f8] sm:$0xff]
  %v152 = vld [vmem:[%s1 + $0x400] sm:$0xff]
  %v153 = vld [vmem:[%s1 + $0x408] sm:$0xff]
  %v154 = vld [vmem:[%s1 + $0x410] sm:$0xff]
  %v155 = vld [vmem:[%s1 + $0x418] sm:$0xff]
  %v156 = vld [vmem:[%s1 + $0x420] sm:$0xff]
  %v157 = vld [vmem:[%s1 + $0x428] sm:$0xff]
  %v158 = vld [vmem:[%s1 + $0x430] sm:$0xff]
  %v159 = vld [vmem:[%s1 + $0x438] sm:$0xff]
  %v160 = vld [vmem:[%s1 + $0x440] sm:$0xff]
  %v161 = vld [vmem:[%s1 + $0x448] sm:$0xff]
  %v162 = vld [vmem:[%s1 + $0x450] sm:$0xff]
  %v163 = vld [vmem:[%s1 + $0x458] sm:$0xff]
  %v164 = vld [vmem:[%s1 + $0x460] sm:$0xff]
  %v165 = vld [vmem:[%s1 + $0x468] sm:$0xff]
  %v166 = vld [vmem:[%s1 + $0x470] sm:$0xff]
  %v167 = vld [vmem:[%s1 + $0x478] sm:$0xff]
  %v168 = vld [vmem:[%s1 + $0x480] sm:$0xff]
  %v169 = vld [vmem:[%s1 + $0x488] sm:$0xff]
  %v170 = vld [vmem:[%s1 + $0x490] sm:$0xff]
  %v171 = vld [vmem:[%s1 + $0x498] sm:$0xff]
  %v172 = vld [vmem:[%s1 + $0x4a0] sm:$0xff]
  %v173 = vld [vmem:[%s1 + $0x4a8] sm:$0xff]
  %v174 = vld [vmem:[%s1 + $0x4b0] sm:$0xff]
  %v175 = vld [vmem:[%s1 + $0x4b8] sm:$0xff]
  %v176 = vld [vmem:[%s1 + $0x4c0] sm:$0xff]
  %v177 = vld [vmem:[%s1 + $0x4c8] sm:$0xff]
  %v178 = vld [vmem:[%s1 + $0x4d0] sm:$0xff]
  %v179 = vld [vmem:[%s1 + $0x4d8] sm:$0xff]
  %v180 = vld [vmem:[%s1 + $0x4e0] sm:$0xff]
  %v181 = vld [vmem:[%s1 + $0x4e8] sm:$0xff]
  %v182 = vld [vmem:[%s1 + $0x4f0] sm:$0xff]
  %v183 = vld [vmem:[%s1 + $0x4f8] sm:$0xff]
  %v184 = vld [vmem:[%s1 + $0x500] sm:$0xff]
  %v185 = vld [vmem:[%s1 + $0x508] sm:$0xff]
  %v186 = vld [vmem:[%s1 + $0x510] sm:$0xff]
  %v187 = vld [vmem:[%s1 + $0x518] sm:$0xff]
  %v188 = vld [vmem:[%s1 + $0x520] sm:$0xff]
  %v189 = vld [vmem:[%s1 + $0x528] sm:$0xff]
  %v190 = vld [vmem:[%s1 + $0x530] sm:$0xff]
  %v191 = vld [vmem:[%s1 + $0x538] sm:$0xff]
  %v192 = vld [vmem:[%s1 + $0x540] sm:$0xff]
  %v193 = vld [vmem:[%s1 + $0x548] sm:$0xff]
  %v194 = vld [vmem:[%s1 + $0x550] sm:$0xff]
  %v195 = vld [vmem:[%s1 + $0x558] sm:$0xff]
  %v196 = vld [vmem:[%s1 + $0x560] sm:$0xff]
  %v197 = vld [vmem:[%s1 + $0x568] sm:$0xff]
  %v198 = vld [vmem:[%s1 + $0x570] sm:$0xff]
  %v199 = vld [vmem:[%s1 + $0x578] sm:$0xff]
  %v200 = vld [vmem:[%s1 + $0x580] sm:$0xff]
  %v201 = vld [vmem:[%s1 + $0x588] sm:$0xff]
  %v202 = vld [vmem:[%s1 + $0x590] sm:$0xff]
  %v203 = vld [vmem:[%s1 + $0x598] sm:$0xff]
  %v204 = vld [vmem:[%s1 + $0x5a0] sm:$0xff]
  %v205 = vld [vmem:[%s1 + $0x5a8] sm:$0xff]
  %v206 = vld [vmem:[%s1 + $0x5b0] sm:$0xff]
  %v207 = vld [vmem:[%s1 + $0x5b8] sm:$0xff]
  %v208 = vld [vmem:[%s1 + $0x5c0] sm:$0xff]
  %v209 = vld [vmem:[%s1 + $0x5c8] sm:$0xff]
  %v210 = vld [vmem:[%s1 + $0x5d0] sm:$0xff]
  %v211 = vld [vmem:[%s1 + $0x5d8] sm:$0xff]
  %v212 = vld [vmem:[%s1 + $0x5e0] sm:$0xff]
  %v213 = vld [vmem:[%s1 + $0x5e8] sm:$0xff]
  %v214 = vld [vmem:[%s1 + $0x5f0] sm:$0xff]
  %v215 = vld [vmem:[%s1 + $0x5f8] sm:$0xff]
  %v216 = vld [vmem:[%s1 + $0x600] sm:$0xff]
  %v217 = vld [vmem:[%s1 + $0x608] sm:$0xff]
  %v218 = vld [vmem:[%s1 + $0x610] sm:$0xff]
  %v219 = vld [vmem:[%s1 + $0x618] sm:$0xff]
  %v220 = vld [vmem:[%s1 + $0x620] sm:$0xff]
  %v221 = vld [vmem:[%s1 + $0x628] sm:$0xff]
  %v222 = vld [vmem:[%s1 + $0x630] sm:$0xff]
  %v223 = vld [vmem:[%s1 + $0x638] sm:$0xff]
  %v224 = vld [vmem:[%s1 + $0x640] sm:$0xff]
  %v225 = vld [vmem:[%s1 + $0x648] sm:$0xff]
  %v226 = vld [vmem:[%s1 + $0x650] sm:$0xff]
  %v227 = vld [vmem:[%s1 + $0x658] sm:$0xff]
  %v228 = vld [vmem:[%s1 + $0x660] sm:$0xff]
  %v229 = vld [vmem:[%s1 + $0x668] sm:$0xff]
  %v230 = vld [vmem:[%s1 + $0x670] sm:$0xff]
  %v231 = vld [vmem:[%s1 + $0x678] sm:$0xff]
  %v232 = vld [vmem:[%s1 + $0x680] sm:$0xff]
  %v233 = vld [vmem:[%s1 + $0x688] sm:$0xff]
  %v234 = vld [vmem:[%s1 + $0x690] sm:$0xff]
  %v235 = vld [vmem:[%s1 + $0x698] sm:$0xff]
  %v236 = vld [vmem:[%s1 + $0x6a0] sm:$0xff]
  %v237 = vld [vmem:[%s1 + $0x6a8] sm:$0xff]
  %v238 = vld [vmem:[%s1 + $0x6b0] sm:$0xff]
  %v239 = vld [vmem:[%s1 + $0x6b8] sm:$0xff]
  %v240 = vld [vmem:[%s1 + $0x6c0] sm:$0xff]
  %v241 = vld [vmem:[%s1 + $0x6c8] sm:$0xff]
  %v242 = vld [vmem:[%s1 + $0x6d0] sm:$0xff]
  %v243 = vld [vmem:[%s1 + $0x6d8] sm:$0xff]
  %v244 = vld [vmem:[%s1 + $0x6e0] sm:$0xff]
  %v245 = vld [vmem:[%s1 + $0x6e8] sm:$0xff]
  %v246 = vld [vmem:[%s1 + $0x6f0] sm:$0xff]
  %v247 = vld [vmem:[%s1 + $0x6f8] sm:$0xff]
  %v248 = vld [vmem:[%s1 + $0x700] sm:$0xff]
  %v249 = vld [vmem:[%s1 + $0x708] sm:$0xff]
  %v250 = vld [vmem:[%s1 + $0x710] sm:$0xff]
  %v251 = vld [vmem:[%s1 + $0x718] sm:$0xff]
  %v252 = vld [vmem:[%s1 + $0x720] sm:$0xff]
  %v253 = vld [vmem:[%s1 + $0x728] sm:$0xff]
  %v254 = vld [vmem:[%s1 + $0x730] sm:$0xff]
  %v255 = vld [vmem:[%s1 + $0x738] sm:$0xff]
  %v256 = vld [vmem:[%s1 + $0x740] sm:$0xff]
  %v257 = vld [vmem:[%s1 + $0x748] sm:$0xff]
  %v258 = vld [vmem:[%s1 + $0x750] sm:$0xff]
  %v259 = vld [vmem:[%s1 + $0x758] sm:$0xff]
  %v260 = vld [vmem:[%s1 + $0x760] sm:$0xff]
  %v261 = vld [vmem:[%s1 + $0x768] sm:$0xff]
  %v262 = vld [vmem:[%s1 + $0x770] sm:$0xff]
  %v263 = vld [vmem:[%s1 + $0x778] sm:$0xff]
  %v264 = vld [vmem:[%s1 + $0x780] sm:$0xff]
  %v265 = vld [vmem:[%s1 + $0x788] sm:$0xff]
  %v266 = vld [vmem:[%s1 + $0x790] sm:$0xff]
  %v267 = vld [vmem:[%s1 + $0x798] sm:$0xff]
  %v268 = vld [vmem:[%s1 + $0x7a0] sm:$0xff]
  %v269 = vld [vmem:[%s1 + $0x7a8] sm:$0xff]
  %v270 = vld [vmem:[%s1 + $0x7b0] sm:$0xff]
  %v271 = vld [vmem:[%s1 + $0x7b8] sm:$0xff]
  %v272 = vld [vmem:[%s1 + $0x7c0] sm:$0xff]
  %v273 = vld [vmem:[%s1 + $0x7c8] sm:$0xff]
  %v274 = vld [vmem:[%s1 + $0x7d0] sm:$0xff]
  %v275 = vld [vmem:[%s1 + $0x7d8] sm:$0xff]
  %v276 = vld [vmem:[%s1 + $0x7e0] sm:$0xff]
  %v277 = vld [vmem:[%s1 + $0x7e8] sm:$0xff]
  %v278 = vld [vmem:[%s1 + $0x7f0] sm:$0xff]
  %v279 = vld [vmem:[%s1 + $0x7f8] sm:$0xff]
  %v280 = vld [vmem:[%s1 + $0x800] sm:$0xff]
  %v281 = vld [vmem:[%s1 + $0x808] sm:$0xff]
  %v282 = vld [vmem:[%s1 + $0x810] sm:$0xff]
  %v283 = vld [vmem:[%s1 + $0x818] sm:$0xff]
  %v284 = vld [vmem:[%s1 + $0x820] sm:$0xff]
  %v285 = vld [vmem:[%s1 + $0x828] sm:$0xff]
  %v286 = vld [vmem:[%s1 + $0x830] sm:$0xff]
  %v287 = vld [vmem:[%s1 + $0x838] sm:$0xff]
  %v288 = vld [vmem:[%s1 + $0x840] sm:$0xff]
  %v289 = vld [vmem:[%s1 + $0x848] sm:$0xff]
  %v290 = vld [vmem:[%s1 + $0x850] sm:$0xff]
  %v291 = vld [vmem:[%s1 + $0x858] sm:$0xff]
  %v292 = vld [vmem:[%s1 + $0x860] sm:$0xff]
  %v293 = vld [vmem:[%s1 + $0x868] sm:$0xff]
  %v294 = vld [vmem:[%s1 + $0x870] sm:$0xff]
  %v295 = vld [vmem:[%s1 + $0x878] sm:$0xff]
  %v296 = vld [vmem:[%s1 + $0x880] sm:$0xff]
  %v297 = vld [vmem:[%s1 + $0x888] sm:$0xff]
  %v298 = vld [vmem:[%s1 + $0x890] sm:$0xff]
  %v299 = vld [vmem:[%s1 + $0x898] sm:$0xff]
  %v300 = vld [vmem:[%s1 + $0x8a0] sm:$0xff]
  %v301 = vld [vmem:[%s1 + $0x8a8] sm:$0xff]
  %v302 = vld [vmem:[%s1 + $0x8b0] sm:$0xff]
  %v303 = vld [vmem:[%s1 + $0x8b8] sm:$0xff]
  %v304 = vld [vmem:[%s1 + $0x8c0] sm:$0xff]
  %v305 = vld [vmem:[%s1 + $0x8c8] sm:$0xff]
  %v306 = vld [vmem:[%s1 + $0x8d0] sm:$0xff]
  %v307 = vld [vmem:[%s1 + $0x8d8] sm:$0xff]
  %v308 = vld [vmem:[%s1 + $0x8e0] sm:$0xff]
  %v309 = vld [vmem:[%s1 + $0x8e8] sm:$0xff]
  %v310 = vld [vmem:[%s1 + $0x8f0] sm:$0xff]
  %v311 = vld [vmem:[%s1 + $0x8f8] sm:$0xff]
  %v312 = vld [vmem:[%s1 + $0x900] sm:$0xff]
  %v313 = vld [vmem:[%s1 + $0x908] sm:$0xff]
  %v314 = vld [vmem:[%s1 + $0x910] sm:$0xff]
  %v315 = vld [vmem:[%s1 + $0x918] sm:$0xff]
  %v316 = vld [vmem:[%s1 + $0x920] sm:$0xff]
  %v317 = vld [vmem:[%s1 + $0x928] sm:$0xff]
  %v318 = vld [vmem:[%s1 + $0x930] sm:$0xff]
  %v319 = vld [vmem:[%s1 + $0x938] sm:$0xff]
  %v320 = vld [vmem:[%s1 + $0x940] sm:$0xff]
  %v321 = vld [vmem:[%s1 + $0x948] sm:$0xff]
  %v322 = vld [vmem:[%s1 + $0x950] sm:$0xff]
  %v323 = vld [vmem:[%s1 + $0x958] sm:$0xff]
  %v324 = vld [vmem:[%s1 + $0x960] sm:$0xff]
  %v325 = vld [vmem:[%s1 + $0x968] sm:$0xff]
  %v326 = vld [vmem:[%s1 + $0x970] sm:$0xff]
  %v327 = vld [vmem:[%s1 + $0x978] sm:$0xff]
  %v328 = vld [vmem:[%s1 + $0x980] sm:$0xff]
  %v329 = vld [vmem:[%s1 + $0x988] sm:$0xff]
  %v330 = vld [vmem:[%s1 + $0x990] sm:$0xff]
  %v331 = vld [vmem:[%s1 + $0x998] sm:$0xff]
  %v332 = vld [vmem:[%s1 + $0x9a0] sm:$0xff]
  %v333 = vld [vmem:[%s1 + $0x9a8] sm:$0xff]
  %v334 = vld [vmem:[%s1 + $0x9b0] sm:$0xff]
  %v335 = vld [vmem:[%s1 + $0x9b8] sm:$0xff]
  %v336 = vld [vmem:[%s1 + $0x9c0] sm:$0xff]
  %v337 = vld [vmem:[%s1 + $0x9c8] sm:$0xff]
  %v338 = vld [vmem:[%s1 + $0x9d0] sm:$0xff]
  %v339 = vld [vmem:[%s1 + $0x9d8] sm:$0xff]
  %v340 = vld [vmem:[%s1 + $0x9e0] sm:$0xff]
  %v341 = vld [vmem:[%s1 + $0x9e8] sm:$0xff]
  %v342 = vld [vmem:[%s1 + $0x9f0] sm:$0xff]
  %v343 = vld [vmem:[%s1 + $0x9f8] sm:$0xff]
  %v344 = vld [vmem:[%s1 + $0xa00] sm:$0xff]
  %v345 = vld [vmem:[%s1 + $0xa08] sm:$0xff]
  %v346 = vld [vmem:[%s1 + $0xa10] sm:$0xff]
  %v347 = vld [vmem:[%s1 + $0xa18] sm:$0xff]
  %v348 = vld [vmem:[%s1 + $0xa20] sm:$0xff]
  %v349 = vld [vmem:[%s1 + $0xa28] sm:$0xff]
  %v350 = vld [vmem:[%s1 + $0xa30] sm:$0xff]
  %v351 = vld [vmem:[%s1 + $0xa38] sm:$0xff]
  %v352 = vld [vmem:[%s1 + $0xa40] sm:$0xff]
  %v353 = vld [vmem:[%s1 + $0xa48] sm:$0xff]
  %v354 = vld [vmem:[%s1 + $0xa50] sm:$0xff]
  %v355 = vld [vmem:[%s1 + $0xa58] sm:$0xff]
  %v356 = vld [vmem:[%s1 + $0xa60] sm:$0xff]
  %v357 = vld [vmem:[%s1 + $0xa68] sm:$0xff]
  %v358 = vld [vmem:[%s1 + $0xa70] sm:$0xff]
  %v359 = vld [vmem:[%s1 + $0xa78] sm:$0xff]
  %v360 = vld [vmem:[%s1 + $0xa80] sm:$0xff]
  %v361 = vld [vmem:[%s1 + $0xa88] sm:$0xff]
  %v362 = vld [vmem:[%s1 + $0xa90] sm:$0xff]
  %v363 = vld [vmem:[%s1 + $0xa98] sm:$0xff]
  %v364 = vld [vmem:[%s1 + $0xaa0] sm:$0xff]
  %v365 = vld [vmem:[%s1 + $0xaa8] sm:$0xff]
  %v366 = vld [vmem:[%s1 + $0xab0] sm:$0xff]
  %v367 = vld [vmem:[%s1 + $0xab8] sm:$0xff]
  %v368 = vld [vmem:[%s1 + $0xac0] sm:$0xff]
  %v369 = vld [vmem:[%s1 + $0xac8] sm:$0xff]
  %v370 = vld [vmem:[%s1 + $0xad0] sm:$0xff]
  %v371 = vld [vmem:[%s1 + $0xad8] sm:$0xff]
  %v372 = vld [vmem:[%s1 + $0xae0] sm:$0xff]
  %v373 = vld [vmem:[%s1 + $0xae8] sm:$0xff]
  %v374 = vld [vmem:[%s1 + $0xaf0] sm:$0xff]
  %v375 = vld [vmem:[%s1 + $0xaf8] sm:$0xff]
  %v376 = vld [vmem:[%s1 + $0xb00] sm:$0xff]
  %v377 = vld [vmem:[%s1 + $0xb08] sm:$0xff]
  %v378 = vld [vmem:[%s1 + $0xb10] sm:$0xff]
  %v379 = vld [vmem:[%s1 + $0xb18] sm:$0xff]
  %v380 = vld [vmem:[%s1 + $0xb20] sm:$0xff]
  %v381 = vld [vmem:[%s1 + $0xb28] sm:$0xff]
  %v382 = vld [vmem:[%s1 + $0xb30] sm:$0xff]
  %v383 = vld [vmem:[%s1 + $0xb38] sm:$0xff]
  %v384 = vld [vmem:[%s1 + $0xb40] sm:$0xff]
  %v385 = vld [vmem:[%s1 + $0xb48] sm:$0xff]
  %v386 = vld [vmem:[%s1 + $0xb50] sm:$0xff]
  %v387 = vld [vmem:[%s1 + $0xb58] sm:$0xff]
  %v388 = vld [vmem:[%s1 + $0xb60] sm:$0xff]
  %v389 = vld [vmem:[%s1 + $0xb68] sm:$0xff]
  %v390 = vld [vmem:[%s1 + $0xb70] sm:$0xff]
  %v391 = vld [vmem:[%s1 + $0xb78] sm:$0xff]
  %v392 = vld [vmem:[%s1 + $0xb80] sm:$0xff]
  %v393 = vld [vmem:[%s1 + $0xb88] sm:$0xff]
  %v394 = vld [vmem:[%s1 + $0xb90] sm:$0xff]
  %v395 = vld [vmem:[%s1 + $0xb98] sm:$0xff]
  %v396 = vld [vmem:[%s1 + $0xba0] sm:$0xff]
  %v397 = vld [vmem:[%s1 + $0xba8] sm:$0xff]
  %v398 = vld [vmem:[%s1 + $0xbb0] sm:$0xff]
  %v399 = vld [vmem:[%s1 + $0xbb8] sm:$0xff]
  %v400 = vld [vmem:[%s1 + $0xbc0] sm:$0xff]
  %v401 = vld [vmem:[%s1 + $0xbc8] sm:$0xff]
  %v402 = vld [vmem:[%s1 + $0xbd0] sm:$0xff]
  %v403 = vld [vmem:[%s1 + $0xbd8] sm:$0xff]
  %v404 = vld [vmem:[%s1 + $0xbe0] sm:$0xff]
  %v405 = vld [vmem:[%s1 + $0xbe8] sm:$0xff]
  %v406 = vld [vmem:[%s1 + $0xbf0] sm:$0xff]
  %v407 = vld [vmem:[%s1 + $0xbf8] sm:$0xff]
  %v408 = vld [vmem:[%s1 + $0xc00] sm:$0xff]
  %v409 = vld [vmem:[%s1 + $0xc08] sm:$0xff]
  %v410 = vld [vmem:[%s1 + $0xc10] sm:$0xff]
  %v411 = vld [vmem:[%s1 + $0xc18] sm:$0xff]
  %v412 = vld [vmem:[%s1 + $0xc20] sm:$0xff]
  %v413 = vld [vmem:[%s1 + $0xc28] sm:$0xff]
  %v414 = vld [vmem:[%s1 + $0xc30] sm:$0xff]
  %v415 = vld [vmem:[%s1 + $0xc38] sm:$0xff]
  %v416 = vld [vmem:[%s1 + $0xc40] sm:$0xff]
  %v417 = vld [vmem:[%s1 + $0xc48] sm:$0xff]
  %v418 = vld [vmem:[%s1 + $0xc50] sm:$0xff]
  %v419 = vld [vmem:[%s1 + $0xc58] sm:$0xff]
  %v420 = vld [vmem:[%s1 + $0xc60] sm:$0xff]
  %v421 = vld [vmem:[%s1 + $0xc68] sm:$0xff]
  %v422 = vld [vmem:[%s1 + $0xc70] sm:$0xff]
  %v423 = vld [vmem:[%s1 + $0xc78] sm:$0xff]
  %v424 = vld [vmem:[%s1 + $0xc80] sm:$0xff]
  %v425 = vld [vmem:[%s1 + $0xc88] sm:$0xff]
  %v426 = vld [vmem:[%s1 + $0xc90] sm:$0xff]
  %v427 = vld [vmem:[%s1 + $0xc98] sm:$0xff]
  %v428 = vld [vmem:[%s1 + $0xca0] sm:$0xff]
  %v429 = vld [vmem:[%s1 + $0xca8] sm:$0xff]
  %v430 = vld [vmem:[%s1 + $0xcb0] sm:$0xff]
  %v431 = vld [vmem:[%s1 + $0xcb8] sm:$0xff]
  %v432 = vld [vmem:[%s1 + $0xcc0] sm:$0xff]
  %v433 = vld [vmem:[%s1 + $0xcc8] sm:$0xff]
  %v434 = vld [vmem:[%s1 + $0xcd0] sm:$0xff]
  %v435 = vld [vmem:[%s1 + $0xcd8] sm:$0xff]
  %v436 = vld [vmem:[%s1 + $0xce0] sm:$0xff]
  %v437 = vld [vmem:[%s1 + $0xce8] sm:$0xff]
  %v438 = vld [vmem:[%s1 + $0xcf0] sm:$0xff]
  %v439 = vld [vmem:[%s1 + $0xcf8] sm:$0xff]
  %v440 = vld [vmem:[%s1 + $0xd00] sm:$0xff]
  %v441 = vld [vmem:[%s1 + $0xd08] sm:$0xff]
  %v442 = vld [vmem:[%s1 + $0xd10] sm:$0xff]
  %v443 = vld [vmem:[%s1 + $0xd18] sm:$0xff]
  %v444 = vld [vmem:[%s1 + $0xd20] sm:$0xff]
  %v445 = vld [vmem:[%s1 + $0xd28] sm:$0xff]
  %v446 = vld [vmem:[%s1 + $0xd30] sm:$0xff]
  %v447 = vld [vmem:[%s1 + $0xd38] sm:$0xff]
  %v448 = vld [vmem:[%s1 + $0xd40] sm:$0xff]
  %v449 = vld [vmem:[%s1 + $0xd48] sm:$0xff]
  %v450 = vld [vmem:[%s1 + $0xd50] sm:$0xff]
  %v451 = vld [vmem:[%s1 + $0xd58] sm:$0xff]
  %v452 = vld [vmem:[%s1 + $0xd60] sm:$0xff]
  %v453 = vld [vmem:[%s1 + $0xd68] sm:$0xff]
  %v454 = vld [vmem:[%s1 + $0xd70] sm:$0xff]
  %v455 = vld [vmem:[%s1 + $0xd78] sm:$0xff]
  %v456 = vld [vmem:[%s1 + $0xd80] sm:$0xff]
  %v457 = vld [vmem:[%s1 + $0xd88] sm:$0xff]
  %v458 = vld [vmem:[%s1 + $0xd90] sm:$0xff]
  %v459 = vld [vmem:[%s1 + $0xd98] sm:$0xff]
  %v460 = vld [vmem:[%s1 + $0xda0] sm:$0xff]
  %v461 = vld [vmem:[%s1 + $0xda8] sm:$0xff]
  %v462 = vld [vmem:[%s1 + $0xdb0] sm:$0xff]
  %v463 = vld [vmem:[%s1 + $0xdb8] sm:$0xff]
  %v464 = vld [vmem:[%s1 + $0xdc0] sm:$0xff]
  %v465 = vld [vmem:[%s1 + $0xdc8] sm:$0xff]
  %v466 = vld [vmem:[%s1 + $0xdd0] sm:$0xff]
  %v467 = vld [vmem:[%s1 + $0xdd8] sm:$0xff]
  %v468 = vld [vmem:[%s1 + $0xde0] sm:$0xff]
  %v469 = vld [vmem:[%s1 + $0xde8] sm:$0xff]
  %v470 = vld [vmem:[%s1 + $0xdf0] sm:$0xff]
  %v471 = vld [vmem:[%s1 + $0xdf8] sm:$0xff]
  %v472 = vld [vmem:[%s2] sm:$0xff]
  %v474 = vperm.slane %v472, 0
  %v475 = vperm.slane %v472, 1
  %v476 = vperm.slane %v472, 2
  %v477 = vperm.slane %v472, 3
  %v478 = vperm.slane %v472, 4
  %v479 = vperm.slane %v472, 5
  %v480 = vperm.slane %v472, 6
  %v481 = vperm.slane %v472, 7
  %v494 = vunpack.c.l.b16 %v20
  %v495 = vunpack.c.h.b16 %v20
  %v496 = vunpack.c.l.b16 %v21
  %v497 = vunpack.c.h.b16 %v21
  %v498 = vunpack.c.l.b16 %v22
  %v499 = vunpack.c.h.b16 %v22
  %v500 = vunpack.c.l.b16 %v23
  %v501 = vpack.c.b16 %v494, %v494
  %v502 = vpack.c.b16 %v495, %v495
  %v503 = vpack.c.b16 %v496, %v496
  %v504 = vpack.c.b16 %v497, %v497
  %v505 = vpack.c.b16 %v498, %v498
  %v506 = vpack.c.b16 %v499, %v499
  %v507 = vpack.c.b16 %v500, %v500
  %v963 = vunpack.c.l.b16 %v24
  %v964 = vunpack.c.h.b16 %v24
  %v965 = vunpack.c.l.b16 %v25
  %v966 = vunpack.c.h.b16 %v25
  %v967 = vunpack.c.l.b16 %v26
  %v968 = vunpack.c.h.b16 %v26
  %v969 = vunpack.c.l.b16 %v27
  %v970 = vunpack.c.h.b16 %v27
  %v971 = vunpack.c.l.b16 %v28
  %v972 = vunpack.c.h.b16 %v28
  %v973 = vunpack.c.l.b16 %v29
  %v974 = vunpack.c.h.b16 %v29
  %v975 = vunpack.c.l.b16 %v30
  %v976 = vunpack.c.h.b16 %v30
  %v977 = vunpack.c.l.b16 %v31
  %v978 = vunpack.c.h.b16 %v31
  %v979 = vunpack.c.l.b16 %v32
  %v980 = vunpack.c.h.b16 %v32
  %v981 = vunpack.c.l.b16 %v33
  %v982 = vunpack.c.h.b16 %v33
  %v983 = vunpack.c.l.b16 %v34
  %v984 = vunpack.c.h.b16 %v34
  %v985 = vunpack.c.l.b16 %v35
  %v986 = vunpack.c.h.b16 %v35
  %v987 = vunpack.c.l.b16 %v36
  %v988 = vunpack.c.h.b16 %v36
  %v989 = vunpack.c.l.b16 %v37
  %v990 = vunpack.c.h.b16 %v37
  %v991 = vunpack.c.l.b16 %v38
  %v992 = vunpack.c.h.b16 %v38
  %v993 = vunpack.c.l.b16 %v39
  %v994 = vunpack.c.h.b16 %v39
  %v995 = vunpack.c.l.b16 %v40
  %v996 = vunpack.c.h.b16 %v40
  %v997 = vunpack.c.l.b16 %v41
  %v998 = vunpack.c.h.b16 %v41
  %v999 = vunpack.c.l.b16 %v42
  %v1000 = vunpack.c.h.b16 %v42
  %v1001 = vunpack.c.l.b16 %v43
  %v1002 = vunpack.c.h.b16 %v43
  %v1003 = vunpack.c.l.b16 %v44
  %v1004 = vunpack.c.h.b16 %v44
  %v1005 = vunpack.c.l.b16 %v45
  %v1006 = vunpack.c.h.b16 %v45
  %v1007 = vunpack.c.l.b16 %v46
  %v1008 = vunpack.c.h.b16 %v46
  %v1009 = vunpack.c.l.b16 %v47
  %v1010 = vunpack.c.h.b16 %v47
  %v1011 = vunpack.c.l.b16 %v48
  %v1012 = vunpack.c.h.b16 %v48
  %v1013 = vunpack.c.l.b16 %v49
  %v1014 = vunpack.c.h.b16 %v49
  %v1015 = vunpack.c.l.b16 %v50
  %v1016 = vunpack.c.h.b16 %v50
  %v1017 = vunpack.c.l.b16 %v51
  %v1018 = vunpack.c.h.b16 %v51
  %v1019 = vunpack.c.l.b16 %v52
  %v1020 = vunpack.c.h.b16 %v52
  %v1021 = vunpack.c.l.b16 %v53
  %v1022 = vunpack.c.h.b16 %v53
  %v1023 = vunpack.c.l.b16 %v54
  %v1024 = vunpack.c.h.b16 %v54
  %v1025 = vunpack.c.l.b16 %v55
  %v1026 = vunpack.c.h.b16 %v55
  %v1027 = vunpack.c.l.b16 %v56
  %v1028 = vunpack.c.h.b16 %v56
  %v1029 = vunpack.c.l.b16 %v57
  %v1030 = vunpack.c.h.b16 %v57
  %v1031 = vunpack.c.l.b16 %v58
  %v1032 = vunpack.c.h.b16 %v58
  %v1033 = vunpack.c.l.b16 %v59
  %v1034 = vunpack.c.h.b16 %v59
  %v1035 = vunpack.c.l.b16 %v60
  %v1036 = vunpack.c.h.b16 %v60
  %v1037 = vunpack.c.l.b16 %v61
  %v1038 = vunpack.c.h.b16 %v61
  %v1039 = vunpack.c.l.b16 %v62
  %v1040 = vunpack.c.h.b16 %v62
  %v1041 = vunpack.c.l.b16 %v63
  %v1042 = vunpack.c.h.b16 %v63
  %v1043 = vunpack.c.l.b16 %v64
  %v1044 = vunpack.c.h.b16 %v64
  %v1045 = vunpack.c.l.b16 %v65
  %v1046 = vunpack.c.h.b16 %v65
  %v1047 = vunpack.c.l.b16 %v66
  %v1048 = vunpack.c.h.b16 %v66
  %v1049 = vunpack.c.l.b16 %v67
  %v1050 = vunpack.c.h.b16 %v67
  %v1051 = vunpack.c.l.b16 %v68
  %v1052 = vunpack.c.h.b16 %v68
  %v1053 = vunpack.c.l.b16 %v69
  %v1054 = vunpack.c.h.b16 %v69
  %v1055 = vunpack.c.l.b16 %v70
  %v1056 = vunpack.c.h.b16 %v70
  %v1057 = vunpack.c.l.b16 %v71
  %v1058 = vunpack.c.h.b16 %v71
  %v1059 = vunpack.c.l.b16 %v72
  %v1060 = vunpack.c.h.b16 %v72
  %v1061 = vunpack.c.l.b16 %v73
  %v1062 = vunpack.c.h.b16 %v73
  %v1063 = vunpack.c.l.b16 %v74
  %v1064 = vunpack.c.h.b16 %v74
  %v1065 = vunpack.c.l.b16 %v75
  %v1066 = vunpack.c.h.b16 %v75
  %v1067 = vunpack.c.l.b16 %v76
  %v1068 = vunpack.c.h.b16 %v76
  %v1069 = vunpack.c.l.b16 %v77
  %v1070 = vunpack.c.h.b16 %v77
  %v1071 = vunpack.c.l.b16 %v78
  %v1072 = vunpack.c.h.b16 %v78
  %v1073 = vunpack.c.l.b16 %v79
  %v1074 = vunpack.c.h.b16 %v79
  %v1075 = vunpack.c.l.b16 %v80
  %v1076 = vunpack.c.h.b16 %v80
  %v1077 = vunpack.c.l.b16 %v81
  %v1078 = vunpack.c.h.b16 %v81
  %v1079 = vunpack.c.l.b16 %v82
  %v1080 = vunpack.c.h.b16 %v82
  %v1081 = vunpack.c.l.b16 %v83
  %v1082 = vunpack.c.h.b16 %v83
  %v1083 = vunpack.c.l.b16 %v84
  %v1084 = vunpack.c.h.b16 %v84
  %v1085 = vunpack.c.l.b16 %v85
  %v1086 = vunpack.c.h.b16 %v85
  %v1087 = vunpack.c.l.b16 %v86
  %v1088 = vunpack.c.h.b16 %v86
  %v1089 = vunpack.c.l.b16 %v87
  %v1090 = vunpack.c.h.b16 %v87
  %v1091 = vunpack.c.l.b16 %v88
  %v1092 = vunpack.c.h.b16 %v88
  %v1093 = vunpack.c.l.b16 %v89
  %v1094 = vunpack.c.h.b16 %v89
  %v1095 = vunpack.c.l.b16 %v90
  %v1096 = vunpack.c.h.b16 %v90
  %v1097 = vunpack.c.l.b16 %v91
  %v1098 = vunpack.c.h.b16 %v91
  %v1099 = vunpack.c.l.b16 %v92
  %v1100 = vunpack.c.h.b16 %v92
  %v1101 = vunpack.c.l.b16 %v93
  %v1102 = vunpack.c.h.b16 %v93
  %v1103 = vunpack.c.l.b16 %v94
  %v1104 = vunpack.c.h.b16 %v94
  %v1105 = vunpack.c.l.b16 %v95
  %v1106 = vunpack.c.h.b16 %v95
  %v1107 = vunpack.c.l.b16 %v96
  %v1108 = vunpack.c.h.b16 %v96
  %v1109 = vunpack.c.l.b16 %v97
  %v1110 = vunpack.c.h.b16 %v97
  %v1111 = vunpack.c.l.b16 %v98
  %v1112 = vunpack.c.h.b16 %v98
  %v1113 = vunpack.c.l.b16 %v99
  %v1114 = vunpack.c.h.b16 %v99
  %v1115 = vunpack.c.l.b16 %v100
  %v1116 = vunpack.c.h.b16 %v100
  %v1117 = vunpack.c.l.b16 %v101
  %v1118 = vunpack.c.h.b16 %v101
  %v1119 = vunpack.c.l.b16 %v102
  %v1120 = vunpack.c.h.b16 %v102
  %v1121 = vunpack.c.l.b16 %v103
  %v1122 = vunpack.c.h.b16 %v103
  %v1123 = vunpack.c.l.b16 %v104
  %v1124 = vunpack.c.h.b16 %v104
  %v1125 = vunpack.c.l.b16 %v105
  %v1126 = vunpack.c.h.b16 %v105
  %v1127 = vunpack.c.l.b16 %v106
  %v1128 = vunpack.c.h.b16 %v106
  %v1129 = vunpack.c.l.b16 %v107
  %v1130 = vunpack.c.h.b16 %v107
  %v1131 = vunpack.c.l.b16 %v108
  %v1132 = vunpack.c.h.b16 %v108
  %v1133 = vunpack.c.l.b16 %v109
  %v1134 = vunpack.c.h.b16 %v109
  %v1135 = vunpack.c.l.b16 %v110
  %v1136 = vunpack.c.h.b16 %v110
  %v1137 = vunpack.c.l.b16 %v111
  %v1138 = vunpack.c.h.b16 %v111
  %v1139 = vunpack.c.l.b16 %v112
  %v1140 = vunpack.c.h.b16 %v112
  %v1141 = vunpack.c.l.b16 %v113
  %v1142 = vunpack.c.h.b16 %v113
  %v1143 = vunpack.c.l.b16 %v114
  %v1144 = vunpack.c.h.b16 %v114
  %v1145 = vunpack.c.l.b16 %v115
  %v1146 = vunpack.c.h.b16 %v115
  %v1147 = vunpack.c.l.b16 %v116
  %v1148 = vunpack.c.h.b16 %v116
  %v1149 = vunpack.c.l.b16 %v117
  %v1150 = vunpack.c.h.b16 %v117
  %v1151 = vunpack.c.l.b16 %v118
  %v1152 = vunpack.c.h.b16 %v118
  %v1153 = vunpack.c.l.b16 %v119
  %v1154 = vunpack.c.h.b16 %v119
  %v1155 = vunpack.c.l.b16 %v120
  %v1156 = vunpack.c.h.b16 %v120
  %v1157 = vunpack.c.l.b16 %v121
  %v1158 = vunpack.c.h.b16 %v121
  %v1159 = vunpack.c.l.b16 %v122
  %v1160 = vunpack.c.h.b16 %v122
  %v1161 = vunpack.c.l.b16 %v123
  %v1162 = vunpack.c.h.b16 %v123
  %v1163 = vunpack.c.l.b16 %v124
  %v1164 = vunpack.c.h.b16 %v124
  %v1165 = vunpack.c.l.b16 %v125
  %v1166 = vunpack.c.h.b16 %v125
  %v1167 = vunpack.c.l.b16 %v126
  %v1168 = vunpack.c.h.b16 %v126
  %v1169 = vunpack.c.l.b16 %v127
  %v1170 = vunpack.c.h.b16 %v127
  %v1171 = vunpack.c.l.b16 %v128
  %v1172 = vunpack.c.h.b16 %v128
  %v1173 = vunpack.c.l.b16 %v129
  %v1174 = vunpack.c.h.b16 %v129
  %v1175 = vunpack.c.l.b16 %v130
  %v1176 = vunpack.c.h.b16 %v130
  %v1177 = vunpack.c.l.b16 %v131
  %v1178 = vunpack.c.h.b16 %v131
  %v1179 = vunpack.c.l.b16 %v132
  %v1180 = vunpack.c.h.b16 %v132
  %v1181 = vunpack.c.l.b16 %v133
  %v1182 = vunpack.c.h.b16 %v133
  %v1183 = vunpack.c.l.b16 %v134
  %v1184 = vunpack.c.h.b16 %v134
  %v1185 = vunpack.c.l.b16 %v135
  %v1186 = vunpack.c.h.b16 %v135
  %v1187 = vunpack.c.l.b16 %v136
  %v1188 = vunpack.c.h.b16 %v136
  %v1189 = vunpack.c.l.b16 %v137
  %v1190 = vunpack.c.h.b16 %v137
  %v1191 = vunpack.c.l.b16 %v138
  %v1192 = vunpack.c.h.b16 %v138
  %v1193 = vunpack.c.l.b16 %v139
  %v1194 = vunpack.c.h.b16 %v139
  %v1195 = vunpack.c.l.b16 %v140
  %v1196 = vunpack.c.h.b16 %v140
  %v1197 = vunpack.c.l.b16 %v141
  %v1198 = vunpack.c.h.b16 %v141
  %v1199 = vunpack.c.l.b16 %v142
  %v1200 = vunpack.c.h.b16 %v142
  %v1201 = vunpack.c.l.b16 %v143
  %v1202 = vunpack.c.h.b16 %v143
  %v1203 = vunpack.c.l.b16 %v144
  %v1204 = vunpack.c.h.b16 %v144
  %v1205 = vunpack.c.l.b16 %v145
  %v1206 = vunpack.c.h.b16 %v145
  %v1207 = vunpack.c.l.b16 %v146
  %v1208 = vunpack.c.h.b16 %v146
  %v1209 = vunpack.c.l.b16 %v147
  %v1210 = vunpack.c.h.b16 %v147
  %v1211 = vunpack.c.l.b16 %v148
  %v1212 = vunpack.c.h.b16 %v148
  %v1213 = vunpack.c.l.b16 %v149
  %v1214 = vunpack.c.h.b16 %v149
  %v1215 = vunpack.c.l.b16 %v150
  %v1216 = vunpack.c.h.b16 %v150
  %v1217 = vunpack.c.l.b16 %v151
  %v1218 = vunpack.c.h.b16 %v151
  %v1219 = vunpack.c.l.b16 %v152
  %v1220 = vunpack.c.h.b16 %v152
  %v1221 = vunpack.c.l.b16 %v153
  %v1222 = vunpack.c.h.b16 %v153
  %v1223 = vunpack.c.l.b16 %v154
  %v1224 = vunpack.c.h.b16 %v154
  %v1225 = vunpack.c.l.b16 %v155
  %v1226 = vunpack.c.h.b16 %v155
  %v1227 = vunpack.c.l.b16 %v156
  %v1228 = vunpack.c.h.b16 %v156
  %v1229 = vunpack.c.l.b16 %v157
  %v1230 = vunpack.c.h.b16 %v157
  %v1231 = vunpack.c.l.b16 %v158
  %v1232 = vunpack.c.h.b16 %v158
  %v1233 = vunpack.c.l.b16 %v159
  %v1234 = vunpack.c.h.b16 %v159
  %v1235 = vunpack.c.l.b16 %v160
  %v1236 = vunpack.c.h.b16 %v160
  %v1237 = vunpack.c.l.b16 %v161
  %v1238 = vunpack.c.h.b16 %v161
  %v1239 = vunpack.c.l.b16 %v162
  %v1240 = vunpack.c.h.b16 %v162
  %v1241 = vunpack.c.l.b16 %v163
  %v1242 = vunpack.c.h.b16 %v163
  %v1243 = vunpack.c.l.b16 %v164
  %v1244 = vunpack.c.h.b16 %v164
  %v1245 = vunpack.c.l.b16 %v165
  %v1246 = vunpack.c.h.b16 %v165
  %v1247 = vunpack.c.l.b16 %v166
  %v1248 = vunpack.c.h.b16 %v166
  %v1249 = vunpack.c.l.b16 %v167
  %v1250 = vunpack.c.h.b16 %v167
  %v1251 = vunpack.c.l.b16 %v168
  %v1252 = vunpack.c.h.b16 %v168
  %v1253 = vunpack.c.l.b16 %v169
  %v1254 = vunpack.c.h.b16 %v169
  %v1255 = vunpack.c.l.b16 %v170
  %v1256 = vunpack.c.h.b16 %v170
  %v1257 = vunpack.c.l.b16 %v171
  %v1258 = vunpack.c.h.b16 %v171
  %v1259 = vunpack.c.l.b16 %v172
  %v1260 = vunpack.c.h.b16 %v172
  %v1261 = vunpack.c.l.b16 %v173
  %v1262 = vunpack.c.h.b16 %v173
  %v1263 = vunpack.c.l.b16 %v174
  %v1264 = vunpack.c.h.b16 %v174
  %v1265 = vunpack.c.l.b16 %v175
  %v1266 = vunpack.c.h.b16 %v175
  %v1267 = vunpack.c.l.b16 %v176
  %v1268 = vunpack.c.h.b16 %v176
  %v1269 = vunpack.c.l.b16 %v177
  %v1270 = vunpack.c.h.b16 %v177
  %v1271 = vunpack.c.l.b16 %v178
  %v1272 = vunpack.c.h.b16 %v178
  %v1273 = vunpack.c.l.b16 %v179
  %v1274 = vunpack.c.h.b16 %v179
  %v1275 = vunpack.c.l.b16 %v180
  %v1276 = vunpack.c.h.b16 %v180
  %v1277 = vunpack.c.l.b16 %v181
  %v1278 = vunpack.c.h.b16 %v181
  %v1279 = vunpack.c.l.b16 %v182
  %v1280 = vunpack.c.h.b16 %v182
  %v1281 = vunpack.c.l.b16 %v183
  %v1282 = vunpack.c.h.b16 %v183
  %v1283 = vunpack.c.l.b16 %v184
  %v1284 = vunpack.c.h.b16 %v184
  %v1285 = vunpack.c.l.b16 %v185
  %v1286 = vunpack.c.h.b16 %v185
  %v1287 = vunpack.c.l.b16 %v186
  %v1288 = vunpack.c.h.b16 %v186
  %v1289 = vunpack.c.l.b16 %v187
  %v1290 = vunpack.c.h.b16 %v187
  %v1291 = vunpack.c.l.b16 %v188
  %v1292 = vunpack.c.h.b16 %v188
  %v1293 = vunpack.c.l.b16 %v189
  %v1294 = vunpack.c.h.b16 %v189
  %v1295 = vunpack.c.l.b16 %v190
  %v1296 = vunpack.c.h.b16 %v190
  %v1297 = vunpack.c.l.b16 %v191
  %v1298 = vunpack.c.h.b16 %v191
  %v1299 = vunpack.c.l.b16 %v192
  %v1300 = vunpack.c.h.b16 %v192
  %v1301 = vunpack.c.l.b16 %v193
  %v1302 = vunpack.c.h.b16 %v193
  %v1303 = vunpack.c.l.b16 %v194
  %v1304 = vunpack.c.h.b16 %v194
  %v1305 = vunpack.c.l.b16 %v195
  %v1306 = vunpack.c.h.b16 %v195
  %v1307 = vunpack.c.l.b16 %v196
  %v1308 = vunpack.c.h.b16 %v196
  %v1309 = vunpack.c.l.b16 %v197
  %v1310 = vunpack.c.h.b16 %v197
  %v1311 = vunpack.c.l.b16 %v198
  %v1312 = vunpack.c.h.b16 %v198
  %v1313 = vunpack.c.l.b16 %v199
  %v1314 = vunpack.c.h.b16 %v199
  %v1315 = vunpack.c.l.b16 %v200
  %v1316 = vunpack.c.h.b16 %v200
  %v1317 = vunpack.c.l.b16 %v201
  %v1318 = vunpack.c.h.b16 %v201
  %v1319 = vunpack.c.l.b16 %v202
  %v1320 = vunpack.c.h.b16 %v202
  %v1321 = vunpack.c.l.b16 %v203
  %v1322 = vunpack.c.h.b16 %v203
  %v1323 = vunpack.c.l.b16 %v204
  %v1324 = vunpack.c.h.b16 %v204
  %v1325 = vunpack.c.l.b16 %v205
  %v1326 = vunpack.c.h.b16 %v205
  %v1327 = vunpack.c.l.b16 %v206
  %v1328 = vunpack.c.h.b16 %v206
  %v1329 = vunpack.c.l.b16 %v207
  %v1330 = vunpack.c.h.b16 %v207
  %v1331 = vunpack.c.l.b16 %v208
  %v1332 = vunpack.c.h.b16 %v208
  %v1333 = vunpack.c.l.b16 %v209
  %v1334 = vunpack.c.h.b16 %v209
  %v1335 = vunpack.c.l.b16 %v210
  %v1336 = vunpack.c.h.b16 %v210
  %v1337 = vunpack.c.l.b16 %v211
  %v1338 = vunpack.c.h.b16 %v211
  %v1339 = vunpack.c.l.b16 %v212
  %v1340 = vunpack.c.h.b16 %v212
  %v1341 = vunpack.c.l.b16 %v213
  %v1342 = vunpack.c.h.b16 %v213
  %v1343 = vunpack.c.l.b16 %v214
  %v1344 = vunpack.c.h.b16 %v214
  %v1345 = vunpack.c.l.b16 %v215
  %v1346 = vunpack.c.h.b16 %v215
  %v1347 = vunpack.c.l.b16 %v216
  %v1348 = vunpack.c.h.b16 %v216
  %v1349 = vunpack.c.l.b16 %v217
  %v1350 = vunpack.c.h.b16 %v217
  %v1351 = vunpack.c.l.b16 %v218
  %v1352 = vunpack.c.h.b16 %v218
  %v1353 = vunpack.c.l.b16 %v219
  %v1354 = vunpack.c.h.b16 %v219
  %v1355 = vunpack.c.l.b16 %v220
  %v1356 = vunpack.c.h.b16 %v220
  %v1357 = vunpack.c.l.b16 %v221
  %v1358 = vunpack.c.h.b16 %v221
  %v1359 = vunpack.c.l.b16 %v222
  %v1360 = vunpack.c.h.b16 %v222
  %v1361 = vunpack.c.l.b16 %v223
  %v1362 = vunpack.c.h.b16 %v223
  %v1363 = vunpack.c.l.b16 %v224
  %v1364 = vunpack.c.h.b16 %v224
  %v1365 = vunpack.c.l.b16 %v225
  %v1366 = vunpack.c.h.b16 %v225
  %v1367 = vunpack.c.l.b16 %v226
  %v1368 = vunpack.c.h.b16 %v226
  %v1369 = vunpack.c.l.b16 %v227
  %v1370 = vunpack.c.h.b16 %v227
  %v1371 = vunpack.c.l.b16 %v228
  %v1372 = vunpack.c.h.b16 %v228
  %v1373 = vunpack.c.l.b16 %v229
  %v1374 = vunpack.c.h.b16 %v229
  %v1375 = vunpack.c.l.b16 %v230
  %v1376 = vunpack.c.h.b16 %v230
  %v1377 = vunpack.c.l.b16 %v231
  %v1378 = vunpack.c.h.b16 %v231
  %v1379 = vunpack.c.l.b16 %v232
  %v1380 = vunpack.c.h.b16 %v232
  %v1381 = vunpack.c.l.b16 %v233
  %v1382 = vunpack.c.h.b16 %v233
  %v1383 = vunpack.c.l.b16 %v234
  %v1384 = vunpack.c.h.b16 %v234
  %v1385 = vunpack.c.l.b16 %v235
  %v1386 = vunpack.c.h.b16 %v235
  %v1387 = vunpack.c.l.b16 %v236
  %v1388 = vunpack.c.h.b16 %v236
  %v1389 = vunpack.c.l.b16 %v237
  %v1390 = vunpack.c.h.b16 %v237
  %v1391 = vunpack.c.l.b16 %v238
  %v1392 = vunpack.c.h.b16 %v238
  %v1393 = vunpack.c.l.b16 %v239
  %v1394 = vunpack.c.h.b16 %v239
  %v1395 = vunpack.c.l.b16 %v240
  %v1396 = vunpack.c.h.b16 %v240
  %v1397 = vunpack.c.l.b16 %v241
  %v1398 = vunpack.c.h.b16 %v241
  %v1399 = vunpack.c.l.b16 %v242
  %v1400 = vunpack.c.h.b16 %v242
  %v1401 = vunpack.c.l.b16 %v243
  %v1402 = vunpack.c.h.b16 %v243
  %v1403 = vunpack.c.l.b16 %v244
  %v1404 = vunpack.c.h.b16 %v244
  %v1405 = vunpack.c.l.b16 %v245
  %v1406 = vunpack.c.h.b16 %v245
  %v1407 = vunpack.c.l.b16 %v246
  %v1408 = vunpack.c.h.b16 %v246
  %v1409 = vunpack.c.l.b16 %v247
  %v1410 = vunpack.c.h.b16 %v247
  %v1411 = vunpack.c.l.b16 %v248
  %v1412 = vunpack.c.h.b16 %v248
  %v1413 = vunpack.c.l.b16 %v249
  %v1414 = vunpack.c.h.b16 %v249
  %v1415 = vunpack.c.l.b16 %v250
  %v1416 = vunpack.c.h.b16 %v250
  %v1417 = vunpack.c.l.b16 %v251
  %v1418 = vunpack.c.h.b16 %v251
  %v1419 = vunpack.c.l.b16 %v252
  %v1420 = vunpack.c.h.b16 %v252
  %v1421 = vunpack.c.l.b16 %v253
  %v1422 = vunpack.c.h.b16 %v253
  %v1423 = vunpack.c.l.b16 %v254
  %v1424 = vunpack.c.h.b16 %v254
  %v1425 = vunpack.c.l.b16 %v255
  %v1426 = vunpack.c.h.b16 %v255
  %v1427 = vunpack.c.l.b16 %v256
  %v1428 = vunpack.c.h.b16 %v256
  %v1429 = vunpack.c.l.b16 %v257
  %v1430 = vunpack.c.h.b16 %v257
  %v1431 = vunpack.c.l.b16 %v258
  %v1432 = vunpack.c.h.b16 %v258
  %v1433 = vunpack.c.l.b16 %v259
  %v1434 = vunpack.c.h.b16 %v259
  %v1435 = vunpack.c.l.b16 %v260
  %v1436 = vunpack.c.h.b16 %v260
  %v1437 = vunpack.c.l.b16 %v261
  %v1438 = vunpack.c.h.b16 %v261
  %v1439 = vunpack.c.l.b16 %v262
  %v1440 = vunpack.c.h.b16 %v262
  %v1441 = vunpack.c.l.b16 %v263
  %v1442 = vunpack.c.h.b16 %v263
  %v1443 = vunpack.c.l.b16 %v264
  %v1444 = vunpack.c.h.b16 %v264
  %v1445 = vunpack.c.l.b16 %v265
  %v1446 = vunpack.c.h.b16 %v265
  %v1447 = vunpack.c.l.b16 %v266
  %v1448 = vunpack.c.h.b16 %v266
  %v1449 = vunpack.c.l.b16 %v267
  %v1450 = vunpack.c.h.b16 %v267
  %v1451 = vunpack.c.l.b16 %v268
  %v1452 = vunpack.c.h.b16 %v268
  %v1453 = vunpack.c.l.b16 %v269
  %v1454 = vunpack.c.h.b16 %v269
  %v1455 = vunpack.c.l.b16 %v270
  %v1456 = vunpack.c.h.b16 %v270
  %v1457 = vunpack.c.l.b16 %v271
  %v1458 = vunpack.c.h.b16 %v271
  %v1459 = vunpack.c.l.b16 %v272
  %v1460 = vunpack.c.h.b16 %v272
  %v1461 = vunpack.c.l.b16 %v273
  %v1462 = vunpack.c.h.b16 %v273
  %v1463 = vunpack.c.l.b16 %v274
  %v1464 = vunpack.c.h.b16 %v274
  %v1465 = vunpack.c.l.b16 %v275
  %v1466 = vunpack.c.h.b16 %v275
  %v1467 = vunpack.c.l.b16 %v276
  %v1468 = vunpack.c.h.b16 %v276
  %v1469 = vunpack.c.l.b16 %v277
  %v1470 = vunpack.c.h.b16 %v277
  %v1471 = vunpack.c.l.b16 %v278
  %v1472 = vunpack.c.h.b16 %v278
  %v1473 = vunpack.c.l.b16 %v279
  %v1474 = vunpack.c.h.b16 %v279
  %v1475 = vunpack.c.l.b16 %v280
  %v1476 = vunpack.c.h.b16 %v280
  %v1477 = vunpack.c.l.b16 %v281
  %v1478 = vunpack.c.h.b16 %v281
  %v1479 = vunpack.c.l.b16 %v282
  %v1480 = vunpack.c.h.b16 %v282
  %v1481 = vunpack.c.l.b16 %v283
  %v1482 = vunpack.c.h.b16 %v283
  %v1483 = vunpack.c.l.b16 %v284
  %v1484 = vunpack.c.h.b16 %v284
  %v1485 = vunpack.c.l.b16 %v285
  %v1486 = vunpack.c.h.b16 %v285
  %v1487 = vunpack.c.l.b16 %v286
  %v1488 = vunpack.c.h.b16 %v286
  %v1489 = vunpack.c.l.b16 %v287
  %v1490 = vunpack.c.h.b16 %v287
  %v1491 = vunpack.c.l.b16 %v288
  %v1492 = vunpack.c.h.b16 %v288
  %v1493 = vunpack.c.l.b16 %v289
  %v1494 = vunpack.c.h.b16 %v289
  %v1495 = vunpack.c.l.b16 %v290
  %v1496 = vunpack.c.h.b16 %v290
  %v1497 = vunpack.c.l.b16 %v291
  %v1498 = vunpack.c.h.b16 %v291
  %v1499 = vunpack.c.l.b16 %v292
  %v1500 = vunpack.c.h.b16 %v292
  %v1501 = vunpack.c.l.b16 %v293
  %v1502 = vunpack.c.h.b16 %v293
  %v1503 = vunpack.c.l.b16 %v294
  %v1504 = vunpack.c.h.b16 %v294
  %v1505 = vunpack.c.l.b16 %v295
  %v1506 = vunpack.c.h.b16 %v295
  %v1507 = vunpack.c.l.b16 %v296
  %v1508 = vunpack.c.h.b16 %v296
  %v1509 = vunpack.c.l.b16 %v297
  %v1510 = vunpack.c.h.b16 %v297
  %v1511 = vunpack.c.l.b16 %v298
  %v1512 = vunpack.c.h.b16 %v298
  %v1513 = vunpack.c.l.b16 %v299
  %v1514 = vunpack.c.h.b16 %v299
  %v1515 = vunpack.c.l.b16 %v300
  %v1516 = vunpack.c.h.b16 %v300
  %v1517 = vunpack.c.l.b16 %v301
  %v1518 = vunpack.c.h.b16 %v301
  %v1519 = vunpack.c.l.b16 %v302
  %v1520 = vunpack.c.h.b16 %v302
  %v1521 = vunpack.c.l.b16 %v303
  %v1522 = vunpack.c.h.b16 %v303
  %v1523 = vunpack.c.l.b16 %v304
  %v1524 = vunpack.c.h.b16 %v304
  %v1525 = vunpack.c.l.b16 %v305
  %v1526 = vunpack.c.h.b16 %v305
  %v1527 = vunpack.c.l.b16 %v306
  %v1528 = vunpack.c.h.b16 %v306
  %v1529 = vunpack.c.l.b16 %v307
  %v1530 = vunpack.c.h.b16 %v307
  %v1531 = vunpack.c.l.b16 %v308
  %v1532 = vunpack.c.h.b16 %v308
  %v1533 = vunpack.c.l.b16 %v309
  %v1534 = vunpack.c.h.b16 %v309
  %v1535 = vunpack.c.l.b16 %v310
  %v1536 = vunpack.c.h.b16 %v310
  %v1537 = vunpack.c.l.b16 %v311
  %v1538 = vunpack.c.h.b16 %v311
  %v1539 = vunpack.c.l.b16 %v312
  %v1540 = vunpack.c.h.b16 %v312
  %v1541 = vunpack.c.l.b16 %v313
  %v1542 = vunpack.c.h.b16 %v313
  %v1543 = vunpack.c.l.b16 %v314
  %v1544 = vunpack.c.h.b16 %v314
  %v1545 = vunpack.c.l.b16 %v315
  %v1546 = vunpack.c.h.b16 %v315
  %v1547 = vunpack.c.l.b16 %v316
  %v1548 = vunpack.c.h.b16 %v316
  %v1549 = vunpack.c.l.b16 %v317
  %v1550 = vunpack.c.h.b16 %v317
  %v1551 = vunpack.c.l.b16 %v318
  %v1552 = vunpack.c.h.b16 %v318
  %v1553 = vunpack.c.l.b16 %v319
  %v1554 = vunpack.c.h.b16 %v319
  %v1555 = vunpack.c.l.b16 %v320
  %v1556 = vunpack.c.h.b16 %v320
  %v1557 = vunpack.c.l.b16 %v321
  %v1558 = vunpack.c.h.b16 %v321
  %v1559 = vunpack.c.l.b16 %v322
  %v1560 = vunpack.c.h.b16 %v322
  %v1561 = vunpack.c.l.b16 %v323
  %v1562 = vunpack.c.h.b16 %v323
  %v1563 = vunpack.c.l.b16 %v324
  %v1564 = vunpack.c.h.b16 %v324
  %v1565 = vunpack.c.l.b16 %v325
  %v1566 = vunpack.c.h.b16 %v325
  %v1567 = vunpack.c.l.b16 %v326
  %v1568 = vunpack.c.h.b16 %v326
  %v1569 = vunpack.c.l.b16 %v327
  %v1570 = vunpack.c.h.b16 %v327
  %v1571 = vunpack.c.l.b16 %v328
  %v1572 = vunpack.c.h.b16 %v328
  %v1573 = vunpack.c.l.b16 %v329
  %v1574 = vunpack.c.h.b16 %v329
  %v1575 = vunpack.c.l.b16 %v330
  %v1576 = vunpack.c.h.b16 %v330
  %v1577 = vunpack.c.l.b16 %v331
  %v1578 = vunpack.c.h.b16 %v331
  %v1579 = vunpack.c.l.b16 %v332
  %v1580 = vunpack.c.h.b16 %v332
  %v1581 = vunpack.c.l.b16 %v333
  %v1582 = vunpack.c.h.b16 %v333
  %v1583 = vunpack.c.l.b16 %v334
  %v1584 = vunpack.c.h.b16 %v334
  %v1585 = vunpack.c.l.b16 %v335
  %v1586 = vunpack.c.h.b16 %v335
  %v1587 = vunpack.c.l.b16 %v336
  %v1588 = vunpack.c.h.b16 %v336
  %v1589 = vunpack.c.l.b16 %v337
  %v1590 = vunpack.c.h.b16 %v337
  %v1591 = vunpack.c.l.b16 %v338
  %v1592 = vunpack.c.h.b16 %v338
  %v1593 = vunpack.c.l.b16 %v339
  %v1594 = vunpack.c.h.b16 %v339
  %v1595 = vunpack.c.l.b16 %v340
  %v1596 = vunpack.c.h.b16 %v340
  %v1597 = vunpack.c.l.b16 %v341
  %v1598 = vunpack.c.h.b16 %v341
  %v1599 = vunpack.c.l.b16 %v342
  %v1600 = vunpack.c.h.b16 %v342
  %v1601 = vunpack.c.l.b16 %v343
  %v1602 = vunpack.c.h.b16 %v343
  %v1603 = vunpack.c.l.b16 %v344
  %v1604 = vunpack.c.h.b16 %v344
  %v1605 = vunpack.c.l.b16 %v345
  %v1606 = vunpack.c.h.b16 %v345
  %v1607 = vunpack.c.l.b16 %v346
  %v1608 = vunpack.c.h.b16 %v346
  %v1609 = vunpack.c.l.b16 %v347
  %v1610 = vunpack.c.h.b16 %v347
  %v1611 = vunpack.c.l.b16 %v348
  %v1612 = vunpack.c.h.b16 %v348
  %v1613 = vunpack.c.l.b16 %v349
  %v1614 = vunpack.c.h.b16 %v349
  %v1615 = vunpack.c.l.b16 %v350
  %v1616 = vunpack.c.h.b16 %v350
  %v1617 = vunpack.c.l.b16 %v351
  %v1618 = vunpack.c.h.b16 %v351
  %v1619 = vunpack.c.l.b16 %v352
  %v1620 = vunpack.c.h.b16 %v352
  %v1621 = vunpack.c.l.b16 %v353
  %v1622 = vunpack.c.h.b16 %v353
  %v1623 = vunpack.c.l.b16 %v354
  %v1624 = vunpack.c.h.b16 %v354
  %v1625 = vunpack.c.l.b16 %v355
  %v1626 = vunpack.c.h.b16 %v355
  %v1627 = vunpack.c.l.b16 %v356
  %v1628 = vunpack.c.h.b16 %v356
  %v1629 = vunpack.c.l.b16 %v357
  %v1630 = vunpack.c.h.b16 %v357
  %v1631 = vunpack.c.l.b16 %v358
  %v1632 = vunpack.c.h.b16 %v358
  %v1633 = vunpack.c.l.b16 %v359
  %v1634 = vunpack.c.h.b16 %v359
  %v1635 = vunpack.c.l.b16 %v360
  %v1636 = vunpack.c.h.b16 %v360
  %v1637 = vunpack.c.l.b16 %v361
  %v1638 = vunpack.c.h.b16 %v361
  %v1639 = vunpack.c.l.b16 %v362
  %v1640 = vunpack.c.h.b16 %v362
  %v1641 = vunpack.c.l.b16 %v363
  %v1642 = vunpack.c.h.b16 %v363
  %v1643 = vunpack.c.l.b16 %v364
  %v1644 = vunpack.c.h.b16 %v364
  %v1645 = vunpack.c.l.b16 %v365
  %v1646 = vunpack.c.h.b16 %v365
  %v1647 = vunpack.c.l.b16 %v366
  %v1648 = vunpack.c.h.b16 %v366
  %v1649 = vunpack.c.l.b16 %v367
  %v1650 = vunpack.c.h.b16 %v367
  %v1651 = vunpack.c.l.b16 %v368
  %v1652 = vunpack.c.h.b16 %v368
  %v1653 = vunpack.c.l.b16 %v369
  %v1654 = vunpack.c.h.b16 %v369
  %v1655 = vunpack.c.l.b16 %v370
  %v1656 = vunpack.c.h.b16 %v370
  %v1657 = vunpack.c.l.b16 %v371
  %v1658 = vunpack.c.h.b16 %v371
  %v1659 = vunpack.c.l.b16 %v372
  %v1660 = vunpack.c.h.b16 %v372
  %v1661 = vunpack.c.l.b16 %v373
  %v1662 = vunpack.c.h.b16 %v373
  %v1663 = vunpack.c.l.b16 %v374
  %v1664 = vunpack.c.h.b16 %v374
  %v1665 = vunpack.c.l.b16 %v375
  %v1666 = vunpack.c.h.b16 %v375
  %v1667 = vunpack.c.l.b16 %v376
  %v1668 = vunpack.c.h.b16 %v376
  %v1669 = vunpack.c.l.b16 %v377
  %v1670 = vunpack.c.h.b16 %v377
  %v1671 = vunpack.c.l.b16 %v378
  %v1672 = vunpack.c.h.b16 %v378
  %v1673 = vunpack.c.l.b16 %v379
  %v1674 = vunpack.c.h.b16 %v379
  %v1675 = vunpack.c.l.b16 %v380
  %v1676 = vunpack.c.h.b16 %v380
  %v1677 = vunpack.c.l.b16 %v381
  %v1678 = vunpack.c.h.b16 %v381
  %v1679 = vunpack.c.l.b16 %v382
  %v1680 = vunpack.c.h.b16 %v382
  %v1681 = vunpack.c.l.b16 %v383
  %v1682 = vunpack.c.h.b16 %v383
  %v1683 = vunpack.c.l.b16 %v384
  %v1684 = vunpack.c.h.b16 %v384
  %v1685 = vunpack.c.l.b16 %v385
  %v1686 = vunpack.c.h.b16 %v385
  %v1687 = vunpack.c.l.b16 %v386
  %v1688 = vunpack.c.h.b16 %v386
  %v1689 = vunpack.c.l.b16 %v387
  %v1690 = vunpack.c.h.b16 %v387
  %v1691 = vunpack.c.l.b16 %v388
  %v1692 = vunpack.c.h.b16 %v388
  %v1693 = vunpack.c.l.b16 %v389
  %v1694 = vunpack.c.h.b16 %v389
  %v1695 = vunpack.c.l.b16 %v390
  %v1696 = vunpack.c.h.b16 %v390
  %v1697 = vunpack.c.l.b16 %v391
  %v1698 = vunpack.c.h.b16 %v391
  %v1699 = vunpack.c.l.b16 %v392
  %v1700 = vunpack.c.h.b16 %v392
  %v1701 = vunpack.c.l.b16 %v393
  %v1702 = vunpack.c.h.b16 %v393
  %v1703 = vunpack.c.l.b16 %v394
  %v1704 = vunpack.c.h.b16 %v394
  %v1705 = vunpack.c.l.b16 %v395
  %v1706 = vunpack.c.h.b16 %v395
  %v1707 = vunpack.c.l.b16 %v396
  %v1708 = vunpack.c.h.b16 %v396
  %v1709 = vunpack.c.l.b16 %v397
  %v1710 = vunpack.c.h.b16 %v397
  %v1711 = vunpack.c.l.b16 %v398
  %v1712 = vunpack.c.h.b16 %v398
  %v1713 = vunpack.c.l.b16 %v399
  %v1714 = vunpack.c.h.b16 %v399
  %v1715 = vunpack.c.l.b16 %v400
  %v1716 = vunpack.c.h.b16 %v400
  %v1717 = vunpack.c.l.b16 %v401
  %v1718 = vunpack.c.h.b16 %v401
  %v1719 = vunpack.c.l.b16 %v402
  %v1720 = vunpack.c.h.b16 %v402
  %v1721 = vunpack.c.l.b16 %v403
  %v1722 = vunpack.c.h.b16 %v403
  %v1723 = vunpack.c.l.b16 %v404
  %v1724 = vunpack.c.h.b16 %v404
  %v1725 = vunpack.c.l.b16 %v405
  %v1726 = vunpack.c.h.b16 %v405
  %v1727 = vunpack.c.l.b16 %v406
  %v1728 = vunpack.c.h.b16 %v406
  %v1729 = vunpack.c.l.b16 %v407
  %v1730 = vunpack.c.h.b16 %v407
  %v1731 = vunpack.c.l.b16 %v408
  %v1732 = vunpack.c.h.b16 %v408
  %v1733 = vunpack.c.l.b16 %v409
  %v1734 = vunpack.c.h.b16 %v409
  %v1735 = vunpack.c.l.b16 %v410
  %v1736 = vunpack.c.h.b16 %v410
  %v1737 = vunpack.c.l.b16 %v411
  %v1738 = vunpack.c.h.b16 %v411
  %v1739 = vunpack.c.l.b16 %v412
  %v1740 = vunpack.c.h.b16 %v412
  %v1741 = vunpack.c.l.b16 %v413
  %v1742 = vunpack.c.h.b16 %v413
  %v1743 = vunpack.c.l.b16 %v414
  %v1744 = vunpack.c.h.b16 %v414
  %v1745 = vunpack.c.l.b16 %v415
  %v1746 = vunpack.c.h.b16 %v415
  %v1747 = vunpack.c.l.b16 %v416
  %v1748 = vunpack.c.h.b16 %v416
  %v1749 = vunpack.c.l.b16 %v417
  %v1750 = vunpack.c.h.b16 %v417
  %v1751 = vunpack.c.l.b16 %v418
  %v1752 = vunpack.c.h.b16 %v418
  %v1753 = vunpack.c.l.b16 %v419
  %v1754 = vunpack.c.h.b16 %v419
  %v1755 = vunpack.c.l.b16 %v420
  %v1756 = vunpack.c.h.b16 %v420
  %v1757 = vunpack.c.l.b16 %v421
  %v1758 = vunpack.c.h.b16 %v421
  %v1759 = vunpack.c.l.b16 %v422
  %v1760 = vunpack.c.h.b16 %v422
  %v1761 = vunpack.c.l.b16 %v423
  %v1762 = vunpack.c.h.b16 %v423
  %v1763 = vunpack.c.l.b16 %v424
  %v1764 = vunpack.c.h.b16 %v424
  %v1765 = vunpack.c.l.b16 %v425
  %v1766 = vunpack.c.h.b16 %v425
  %v1767 = vunpack.c.l.b16 %v426
  %v1768 = vunpack.c.h.b16 %v426
  %v1769 = vunpack.c.l.b16 %v427
  %v1770 = vunpack.c.h.b16 %v427
  %v1771 = vunpack.c.l.b16 %v428
  %v1772 = vunpack.c.h.b16 %v428
  %v1773 = vunpack.c.l.b16 %v429
  %v1774 = vunpack.c.h.b16 %v429
  %v1775 = vunpack.c.l.b16 %v430
  %v1776 = vunpack.c.h.b16 %v430
  %v1777 = vunpack.c.l.b16 %v431
  %v1778 = vunpack.c.h.b16 %v431
  %v1779 = vunpack.c.l.b16 %v432
  %v1780 = vunpack.c.h.b16 %v432
  %v1781 = vunpack.c.l.b16 %v433
  %v1782 = vunpack.c.h.b16 %v433
  %v1783 = vunpack.c.l.b16 %v434
  %v1784 = vunpack.c.h.b16 %v434
  %v1785 = vunpack.c.l.b16 %v435
  %v1786 = vunpack.c.h.b16 %v435
  %v1787 = vunpack.c.l.b16 %v436
  %v1788 = vunpack.c.h.b16 %v436
  %v1789 = vunpack.c.l.b16 %v437
  %v1790 = vunpack.c.h.b16 %v437
  %v1791 = vunpack.c.l.b16 %v438
  %v1792 = vunpack.c.h.b16 %v438
  %v1793 = vunpack.c.l.b16 %v439
  %v1794 = vunpack.c.h.b16 %v439
  %v1795 = vunpack.c.l.b16 %v440
  %v1796 = vunpack.c.h.b16 %v440
  %v1797 = vunpack.c.l.b16 %v441
  %v1798 = vunpack.c.h.b16 %v441
  %v1799 = vunpack.c.l.b16 %v442
  %v1800 = vunpack.c.h.b16 %v442
  %v1801 = vunpack.c.l.b16 %v443
  %v1802 = vunpack.c.h.b16 %v443
  %v1803 = vunpack.c.l.b16 %v444
  %v1804 = vunpack.c.h.b16 %v444
  %v1805 = vunpack.c.l.b16 %v445
  %v1806 = vunpack.c.h.b16 %v445
  %v1807 = vunpack.c.l.b16 %v446
  %v1808 = vunpack.c.h.b16 %v446
  %v1809 = vunpack.c.l.b16 %v447
  %v1810 = vunpack.c.h.b16 %v447
  %v1811 = vunpack.c.l.b16 %v448
  %v1812 = vunpack.c.h.b16 %v448
  %v1813 = vunpack.c.l.b16 %v449
  %v1814 = vunpack.c.h.b16 %v449
  %v1815 = vunpack.c.l.b16 %v450
  %v1816 = vunpack.c.h.b16 %v450
  %v1817 = vunpack.c.l.b16 %v451
  %v1818 = vunpack.c.h.b16 %v451
  %v1819 = vunpack.c.l.b16 %v452
  %v1820 = vunpack.c.h.b16 %v452
  %v1821 = vunpack.c.l.b16 %v453
  %v1822 = vunpack.c.h.b16 %v453
  %v1823 = vunpack.c.l.b16 %v454
  %v1824 = vunpack.c.h.b16 %v454
  %v1825 = vunpack.c.l.b16 %v455
  %v1826 = vunpack.c.h.b16 %v455
  %v1827 = vunpack.c.l.b16 %v456
  %v1828 = vunpack.c.h.b16 %v456
  %v1829 = vunpack.c.l.b16 %v457
  %v1830 = vunpack.c.h.b16 %v457
  %v1831 = vunpack.c.l.b16 %v458
  %v1832 = vunpack.c.h.b16 %v458
  %v1833 = vunpack.c.l.b16 %v459
  %v1834 = vunpack.c.h.b16 %v459
  %v1835 = vunpack.c.l.b16 %v460
  %v1836 = vunpack.c.h.b16 %v460
  %v1837 = vunpack.c.l.b16 %v461
  %v1838 = vunpack.c.h.b16 %v461
  %v1839 = vunpack.c.l.b16 %v462
  %v1840 = vunpack.c.h.b16 %v462
  %v1841 = vunpack.c.l.b16 %v463
  %v1842 = vunpack.c.h.b16 %v463
  %v1843 = vunpack.c.l.b16 %v464
  %v1844 = vunpack.c.h.b16 %v464
  %v1845 = vunpack.c.l.b16 %v465
  %v1846 = vunpack.c.h.b16 %v465
  %v1847 = vunpack.c.l.b16 %v466
  %v1848 = vunpack.c.h.b16 %v466
  %v1849 = vunpack.c.l.b16 %v467
  %v1850 = vunpack.c.h.b16 %v467
  %v1851 = vunpack.c.l.b16 %v468
  %v1852 = vunpack.c.h.b16 %v468
  %v1853 = vunpack.c.l.b16 %v469
  %v1854 = vunpack.c.h.b16 %v469
  %v1855 = vunpack.c.l.b16 %v470
  %v1856 = vunpack.c.h.b16 %v470
  %v1857 = vunpack.c.l.b16 %v471
  %v1858 = vunpack.c.h.b16 %v471
  %v1859 = vpack.c.b16 %v971, %v963
  %v1860 = vpack.c.b16 %v972, %v964
  %v1861 = vpack.c.b16 %v973, %v965
  %v1862 = vpack.c.b16 %v974, %v966
  %v1863 = vpack.c.b16 %v975, %v967
  %v1864 = vpack.c.b16 %v976, %v968
  %v1865 = vpack.c.b16 %v977, %v969
  %v1866 = vpack.c.b16 %v978, %v970
  %v1867 = vpack.c.b16 %v987, %v979
  %v1868 = vpack.c.b16 %v988, %v980
  %v1869 = vpack.c.b16 %v989, %v981
  %v1870 = vpack.c.b16 %v990, %v982
  %v1871 = vpack.c.b16 %v991, %v983
  %v1872 = vpack.c.b16 %v992, %v984
  %v1873 = vpack.c.b16 %v993, %v985
  %v1874 = vpack.c.b16 %v994, %v986
  %v1875 = vpack.c.b16 %v1003, %v995
  %v1876 = vpack.c.b16 %v1004, %v996
  %v1877 = vpack.c.b16 %v1005, %v997
  %v1878 = vpack.c.b16 %v1006, %v998
  %v1879 = vpack.c.b16 %v1007, %v999
  %v1880 = vpack.c.b16 %v1008, %v1000
  %v1881 = vpack.c.b16 %v1009, %v1001
  %v1882 = vpack.c.b16 %v1010, %v1002
  %v1883 = vpack.c.b16 %v1019, %v1011
  %v1884 = vpack.c.b16 %v1020, %v1012
  %v1885 = vpack.c.b16 %v1021, %v1013
  %v1886 = vpack.c.b16 %v1022, %v1014
  %v1887 = vpack.c.b16 %v1023, %v1015
  %v1888 = vpack.c.b16 %v1024, %v1016
  %v1889 = vpack.c.b16 %v1025, %v1017
  %v1890 = vpack.c.b16 %v1026, %v1018
  %v1891 = vpack.c.b16 %v1035, %v1027
  %v1892 = vpack.c.b16 %v1036, %v1028
  %v1893 = vpack.c.b16 %v1037, %v1029
  %v1894 = vpack.c.b16 %v1038, %v1030
  %v1895 = vpack.c.b16 %v1039, %v1031
  %v1896 = vpack.c.b16 %v1040, %v1032
  %v1897 = vpack.c.b16 %v1041, %v1033
  %v1898 = vpack.c.b16 %v1042, %v1034
  %v1899 = vpack.c.b16 %v1051, %v1043
  %v1900 = vpack.c.b16 %v1052, %v1044
  %v1901 = vpack.c.b16 %v1053, %v1045
  %v1902 = vpack.c.b16 %v1054, %v1046
  %v1903 = vpack.c.b16 %v1055, %v1047
  %v1904 = vpack.c.b16 %v1056, %v1048
  %v1905 = vpack.c.b16 %v1057, %v1049
  %v1906 = vpack.c.b16 %v1058, %v1050
  %v1907 = vpack.c.b16 %v1067, %v1059
  %v1908 = vpack.c.b16 %v1068, %v1060
  %v1909 = vpack.c.b16 %v1069, %v1061
  %v1910 = vpack.c.b16 %v1070, %v1062
  %v1911 = vpack.c.b16 %v1071, %v1063
  %v1912 = vpack.c.b16 %v1072, %v1064
  %v1913 = vpack.c.b16 %v1073, %v1065
  %v1914 = vpack.c.b16 %v1074, %v1066
  %v1915 = vpack.c.b16 %v1083, %v1075
  %v1916 = vpack.c.b16 %v1084, %v1076
  %v1917 = vpack.c.b16 %v1085, %v1077
  %v1918 = vpack.c.b16 %v1086, %v1078
  %v1919 = vpack.c.b16 %v1087, %v1079
  %v1920 = vpack.c.b16 %v1088, %v1080
  %v1921 = vpack.c.b16 %v1089, %v1081
  %v1922 = vpack.c.b16 %v1090, %v1082
  %v1923 = vpack.c.b16 %v1099, %v1091
  %v1924 = vpack.c.b16 %v1100, %v1092
  %v1925 = vpack.c.b16 %v1101, %v1093
  %v1926 = vpack.c.b16 %v1102, %v1094
  %v1927 = vpack.c.b16 %v1103, %v1095
  %v1928 = vpack.c.b16 %v1104, %v1096
  %v1929 = vpack.c.b16 %v1105, %v1097
  %v1930 = vpack.c.b16 %v1106, %v1098
  %v1931 = vpack.c.b16 %v1115, %v1107
  %v1932 = vpack.c.b16 %v1116, %v1108
  %v1933 = vpack.c.b16 %v1117, %v1109
  %v1934 = vpack.c.b16 %v1118, %v1110
  %v1935 = vpack.c.b16 %v1119, %v1111
  %v1936 = vpack.c.b16 %v1120, %v1112
  %v1937 = vpack.c.b16 %v1121, %v1113
  %v1938 = vpack.c.b16 %v1122, %v1114
  %v1939 = vpack.c.b16 %v1131, %v1123
  %v1940 = vpack.c.b16 %v1132, %v1124
  %v1941 = vpack.c.b16 %v1133, %v1125
  %v1942 = vpack.c.b16 %v1134, %v1126
  %v1943 = vpack.c.b16 %v1135, %v1127
  %v1944 = vpack.c.b16 %v1136, %v1128
  %v1945 = vpack.c.b16 %v1137, %v1129
  %v1946 = vpack.c.b16 %v1138, %v1130
  %v1947 = vpack.c.b16 %v1147, %v1139
  %v1948 = vpack.c.b16 %v1148, %v1140
  %v1949 = vpack.c.b16 %v1149, %v1141
  %v1950 = vpack.c.b16 %v1150, %v1142
  %v1951 = vpack.c.b16 %v1151, %v1143
  %v1952 = vpack.c.b16 %v1152, %v1144
  %v1953 = vpack.c.b16 %v1153, %v1145
  %v1954 = vpack.c.b16 %v1154, %v1146
  %v1955 = vpack.c.b16 %v1163, %v1155
  %v1956 = vpack.c.b16 %v1164, %v1156
  %v1957 = vpack.c.b16 %v1165, %v1157
  %v1958 = vpack.c.b16 %v1166, %v1158
  %v1959 = vpack.c.b16 %v1167, %v1159
  %v1960 = vpack.c.b16 %v1168, %v1160
  %v1961 = vpack.c.b16 %v1169, %v1161
  %v1962 = vpack.c.b16 %v1170, %v1162
  %v1963 = vpack.c.b16 %v1179, %v1171
  %v1964 = vpack.c.b16 %v1180, %v1172
  %v1965 = vpack.c.b16 %v1181, %v1173
  %v1966 = vpack.c.b16 %v1182, %v1174
  %v1967 = vpack.c.b16 %v1183, %v1175
  %v1968 = vpack.c.b16 %v1184, %v1176
  %v1969 = vpack.c.b16 %v1185, %v1177
  %v1970 = vpack.c.b16 %v1186, %v1178
  %v1971 = vpack.c.b16 %v1195, %v1187
  %v1972 = vpack.c.b16 %v1196, %v1188
  %v1973 = vpack.c.b16 %v1197, %v1189
  %v1974 = vpack.c.b16 %v1198, %v1190
  %v1975 = vpack.c.b16 %v1199, %v1191
  %v1976 = vpack.c.b16 %v1200, %v1192
  %v1977 = vpack.c.b16 %v1201, %v1193
  %v1978 = vpack.c.b16 %v1202, %v1194
  %v1979 = vpack.c.b16 %v1211, %v1203
  %v1980 = vpack.c.b16 %v1212, %v1204
  %v1981 = vpack.c.b16 %v1213, %v1205
  %v1982 = vpack.c.b16 %v1214, %v1206
  %v1983 = vpack.c.b16 %v1215, %v1207
  %v1984 = vpack.c.b16 %v1216, %v1208
  %v1985 = vpack.c.b16 %v1217, %v1209
  %v1986 = vpack.c.b16 %v1218, %v1210
  %v1987 = vpack.c.b16 %v1227, %v1219
  %v1988 = vpack.c.b16 %v1228, %v1220
  %v1989 = vpack.c.b16 %v1229, %v1221
  %v1990 = vpack.c.b16 %v1230, %v1222
  %v1991 = vpack.c.b16 %v1231, %v1223
  %v1992 = vpack.c.b16 %v1232, %v1224
  %v1993 = vpack.c.b16 %v1233, %v1225
  %v1994 = vpack.c.b16 %v1234, %v1226
  %v1995 = vpack.c.b16 %v1243, %v1235
  %v1996 = vpack.c.b16 %v1244, %v1236
  %v1997 = vpack.c.b16 %v1245, %v1237
  %v1998 = vpack.c.b16 %v1246, %v1238
  %v1999 = vpack.c.b16 %v1247, %v1239
  %v2000 = vpack.c.b16 %v1248, %v1240
  %v2001 = vpack.c.b16 %v1249, %v1241
  %v2002 = vpack.c.b16 %v1250, %v1242
  %v2003 = vpack.c.b16 %v1259, %v1251
  %v2004 = vpack.c.b16 %v1260, %v1252
  %v2005 = vpack.c.b16 %v1261, %v1253
  %v2006 = vpack.c.b16 %v1262, %v1254
  %v2007 = vpack.c.b16 %v1263, %v1255
  %v2008 = vpack.c.b16 %v1264, %v1256
  %v2009 = vpack.c.b16 %v1265, %v1257
  %v2010 = vpack.c.b16 %v1266, %v1258
  %v2011 = vpack.c.b16 %v1275, %v1267
  %v2012 = vpack.c.b16 %v1276, %v1268
  %v2013 = vpack.c.b16 %v1277, %v1269
  %v2014 = vpack.c.b16 %v1278, %v1270
  %v2015 = vpack.c.b16 %v1279, %v1271
  %v2016 = vpack.c.b16 %v1280, %v1272
  %v2017 = vpack.c.b16 %v1281, %v1273
  %v2018 = vpack.c.b16 %v1282, %v1274
  %v2019 = vpack.c.b16 %v1291, %v1283
  %v2020 = vpack.c.b16 %v1292, %v1284
  %v2021 = vpack.c.b16 %v1293, %v1285
  %v2022 = vpack.c.b16 %v1294, %v1286
  %v2023 = vpack.c.b16 %v1295, %v1287
  %v2024 = vpack.c.b16 %v1296, %v1288
  %v2025 = vpack.c.b16 %v1297, %v1289
  %v2026 = vpack.c.b16 %v1298, %v1290
  %v2027 = vpack.c.b16 %v1307, %v1299
  %v2028 = vpack.c.b16 %v1308, %v1300
  %v2029 = vpack.c.b16 %v1309, %v1301
  %v2030 = vpack.c.b16 %v1310, %v1302
  %v2031 = vpack.c.b16 %v1311, %v1303
  %v2032 = vpack.c.b16 %v1312, %v1304
  %v2033 = vpack.c.b16 %v1313, %v1305
  %v2034 = vpack.c.b16 %v1314, %v1306
  %v2035 = vpack.c.b16 %v1323, %v1315
  %v2036 = vpack.c.b16 %v1324, %v1316
  %v2037 = vpack.c.b16 %v1325, %v1317
  %v2038 = vpack.c.b16 %v1326, %v1318
  %v2039 = vpack.c.b16 %v1327, %v1319
  %v2040 = vpack.c.b16 %v1328, %v1320
  %v2041 = vpack.c.b16 %v1329, %v1321
  %v2042 = vpack.c.b16 %v1330, %v1322
  %v2043 = vpack.c.b16 %v1339, %v1331
  %v2044 = vpack.c.b16 %v1340, %v1332
  %v2045 = vpack.c.b16 %v1341, %v1333
  %v2046 = vpack.c.b16 %v1342, %v1334
  %v2047 = vpack.c.b16 %v1343, %v1335
  %v2048 = vpack.c.b16 %v1344, %v1336
  %v2049 = vpack.c.b16 %v1345, %v1337
  %v2050 = vpack.c.b16 %v1346, %v1338
  %v2051 = vpack.c.b16 %v1355, %v1347
  %v2052 = vpack.c.b16 %v1356, %v1348
  %v2053 = vpack.c.b16 %v1357, %v1349
  %v2054 = vpack.c.b16 %v1358, %v1350
  %v2055 = vpack.c.b16 %v1359, %v1351
  %v2056 = vpack.c.b16 %v1360, %v1352
  %v2057 = vpack.c.b16 %v1361, %v1353
  %v2058 = vpack.c.b16 %v1362, %v1354
  %v2059 = vpack.c.b16 %v1371, %v1363
  %v2060 = vpack.c.b16 %v1372, %v1364
  %v2061 = vpack.c.b16 %v1373, %v1365
  %v2062 = vpack.c.b16 %v1374, %v1366
  %v2063 = vpack.c.b16 %v1375, %v1367
  %v2064 = vpack.c.b16 %v1376, %v1368
  %v2065 = vpack.c.b16 %v1377, %v1369
  %v2066 = vpack.c.b16 %v1378, %v1370
  %v2067 = vpack.c.b16 %v1387, %v1379
  %v2068 = vpack.c.b16 %v1388, %v1380
  %v2069 = vpack.c.b16 %v1389, %v1381
  %v2070 = vpack.c.b16 %v1390, %v1382
  %v2071 = vpack.c.b16 %v1391, %v1383
  %v2072 = vpack.c.b16 %v1392, %v1384
  %v2073 = vpack.c.b16 %v1393, %v1385
  %v2074 = vpack.c.b16 %v1394, %v1386
  %v2075 = vpack.c.b16 %v1403, %v1395
  %v2076 = vpack.c.b16 %v1404, %v1396
  %v2077 = vpack.c.b16 %v1405, %v1397
  %v2078 = vpack.c.b16 %v1406, %v1398
  %v2079 = vpack.c.b16 %v1407, %v1399
  %v2080 = vpack.c.b16 %v1408, %v1400
  %v2081 = vpack.c.b16 %v1409, %v1401
  %v2082 = vpack.c.b16 %v1410, %v1402
  %v2083 = vpack.c.b16 %v1419, %v1411
  %v2084 = vpack.c.b16 %v1420, %v1412
  %v2085 = vpack.c.b16 %v1421, %v1413
  %v2086 = vpack.c.b16 %v1422, %v1414
  %v2087 = vpack.c.b16 %v1423, %v1415
  %v2088 = vpack.c.b16 %v1424, %v1416
  %v2089 = vpack.c.b16 %v1425, %v1417
  %v2090 = vpack.c.b16 %v1426, %v1418
  %v2091 = vpack.c.b16 %v1435, %v1427
  %v2092 = vpack.c.b16 %v1436, %v1428
  %v2093 = vpack.c.b16 %v1437, %v1429
  %v2094 = vpack.c.b16 %v1438, %v1430
  %v2095 = vpack.c.b16 %v1439, %v1431
  %v2096 = vpack.c.b16 %v1440, %v1432
  %v2097 = vpack.c.b16 %v1441, %v1433
  %v2098 = vpack.c.b16 %v1442, %v1434
  %v2099 = vpack.c.b16 %v1451, %v1443
  %v2100 = vpack.c.b16 %v1452, %v1444
  %v2101 = vpack.c.b16 %v1453, %v1445
  %v2102 = vpack.c.b16 %v1454, %v1446
  %v2103 = vpack.c.b16 %v1455, %v1447
  %v2104 = vpack.c.b16 %v1456, %v1448
  %v2105 = vpack.c.b16 %v1457, %v1449
  %v2106 = vpack.c.b16 %v1458, %v1450
  %v2107 = vpack.c.b16 %v1467, %v1459
  %v2108 = vpack.c.b16 %v1468, %v1460
  %v2109 = vpack.c.b16 %v1469, %v1461
  %v2110 = vpack.c.b16 %v1470, %v1462
  %v2111 = vpack.c.b16 %v1471, %v1463
  %v2112 = vpack.c.b16 %v1472, %v1464
  %v2113 = vpack.c.b16 %v1473, %v1465
  %v2114 = vpack.c.b16 %v1474, %v1466
  %v2115 = vpack.c.b16 %v1483, %v1475
  %v2116 = vpack.c.b16 %v1484, %v1476
  %v2117 = vpack.c.b16 %v1485, %v1477
  %v2118 = vpack.c.b16 %v1486, %v1478
  %v2119 = vpack.c.b16 %v1487, %v1479
  %v2120 = vpack.c.b16 %v1488, %v1480
  %v2121 = vpack.c.b16 %v1489, %v1481
  %v2122 = vpack.c.b16 %v1490, %v1482
  %v2123 = vpack.c.b16 %v1499, %v1491
  %v2124 = vpack.c.b16 %v1500, %v1492
  %v2125 = vpack.c.b16 %v1501, %v1493
  %v2126 = vpack.c.b16 %v1502, %v1494
  %v2127 = vpack.c.b16 %v1503, %v1495
  %v2128 = vpack.c.b16 %v1504, %v1496
  %v2129 = vpack.c.b16 %v1505, %v1497
  %v2130 = vpack.c.b16 %v1506, %v1498
  %v2131 = vpack.c.b16 %v1515, %v1507
  %v2132 = vpack.c.b16 %v1516, %v1508
  %v2133 = vpack.c.b16 %v1517, %v1509
  %v2134 = vpack.c.b16 %v1518, %v1510
  %v2135 = vpack.c.b16 %v1519, %v1511
  %v2136 = vpack.c.b16 %v1520, %v1512
  %v2137 = vpack.c.b16 %v1521, %v1513
  %v2138 = vpack.c.b16 %v1522, %v1514
  %v2139 = vpack.c.b16 %v1531, %v1523
  %v2140 = vpack.c.b16 %v1532, %v1524
  %v2141 = vpack.c.b16 %v1533, %v1525
  %v2142 = vpack.c.b16 %v1534, %v1526
  %v2143 = vpack.c.b16 %v1535, %v1527
  %v2144 = vpack.c.b16 %v1536, %v1528
  %v2145 = vpack.c.b16 %v1537, %v1529
  %v2146 = vpack.c.b16 %v1538, %v1530
  %v2147 = vpack.c.b16 %v1547, %v1539
  %v2148 = vpack.c.b16 %v1548, %v1540
  %v2149 = vpack.c.b16 %v1549, %v1541
  %v2150 = vpack.c.b16 %v1550, %v1542
  %v2151 = vpack.c.b16 %v1551, %v1543
  %v2152 = vpack.c.b16 %v1552, %v1544
  %v2153 = vpack.c.b16 %v1553, %v1545
  %v2154 = vpack.c.b16 %v1554, %v1546
  %v2155 = vpack.c.b16 %v1563, %v1555
  %v2156 = vpack.c.b16 %v1564, %v1556
  %v2157 = vpack.c.b16 %v1565, %v1557
  %v2158 = vpack.c.b16 %v1566, %v1558
  %v2159 = vpack.c.b16 %v1567, %v1559
  %v2160 = vpack.c.b16 %v1568, %v1560
  %v2161 = vpack.c.b16 %v1569, %v1561
  %v2162 = vpack.c.b16 %v1570, %v1562
  %v2163 = vpack.c.b16 %v1579, %v1571
  %v2164 = vpack.c.b16 %v1580, %v1572
  %v2165 = vpack.c.b16 %v1581, %v1573
  %v2166 = vpack.c.b16 %v1582, %v1574
  %v2167 = vpack.c.b16 %v1583, %v1575
  %v2168 = vpack.c.b16 %v1584, %v1576
  %v2169 = vpack.c.b16 %v1585, %v1577
  %v2170 = vpack.c.b16 %v1586, %v1578
  %v2171 = vpack.c.b16 %v1595, %v1587
  %v2172 = vpack.c.b16 %v1596, %v1588
  %v2173 = vpack.c.b16 %v1597, %v1589
  %v2174 = vpack.c.b16 %v1598, %v1590
  %v2175 = vpack.c.b16 %v1599, %v1591
  %v2176 = vpack.c.b16 %v1600, %v1592
  %v2177 = vpack.c.b16 %v1601, %v1593
  %v2178 = vpack.c.b16 %v1602, %v1594
  %v2179 = vpack.c.b16 %v1611, %v1603
  %v2180 = vpack.c.b16 %v1612, %v1604
  %v2181 = vpack.c.b16 %v1613, %v1605
  %v2182 = vpack.c.b16 %v1614, %v1606
  %v2183 = vpack.c.b16 %v1615, %v1607
  %v2184 = vpack.c.b16 %v1616, %v1608
  %v2185 = vpack.c.b16 %v1617, %v1609
  %v2186 = vpack.c.b16 %v1618, %v1610
  %v2187 = vpack.c.b16 %v1627, %v1619
  %v2188 = vpack.c.b16 %v1628, %v1620
  %v2189 = vpack.c.b16 %v1629, %v1621
  %v2190 = vpack.c.b16 %v1630, %v1622
  %v2191 = vpack.c.b16 %v1631, %v1623
  %v2192 = vpack.c.b16 %v1632, %v1624
  %v2193 = vpack.c.b16 %v1633, %v1625
  %v2194 = vpack.c.b16 %v1634, %v1626
  %v2195 = vpack.c.b16 %v1643, %v1635
  %v2196 = vpack.c.b16 %v1644, %v1636
  %v2197 = vpack.c.b16 %v1645, %v1637
  %v2198 = vpack.c.b16 %v1646, %v1638
  %v2199 = vpack.c.b16 %v1647, %v1639
  %v2200 = vpack.c.b16 %v1648, %v1640
  %v2201 = vpack.c.b16 %v1649, %v1641
  %v2202 = vpack.c.b16 %v1650, %v1642
  %v2203 = vpack.c.b16 %v1659, %v1651
  %v2204 = vpack.c.b16 %v1660, %v1652
  %v2205 = vpack.c.b16 %v1661, %v1653
  %v2206 = vpack.c.b16 %v1662, %v1654
  %v2207 = vpack.c.b16 %v1663, %v1655
  %v2208 = vpack.c.b16 %v1664, %v1656
  %v2209 = vpack.c.b16 %v1665, %v1657
  %v2210 = vpack.c.b16 %v1666, %v1658
  %v2211 = vpack.c.b16 %v1675, %v1667
  %v2212 = vpack.c.b16 %v1676, %v1668
  %v2213 = vpack.c.b16 %v1677, %v1669
  %v2214 = vpack.c.b16 %v1678, %v1670
  %v2215 = vpack.c.b16 %v1679, %v1671
  %v2216 = vpack.c.b16 %v1680, %v1672
  %v2217 = vpack.c.b16 %v1681, %v1673
  %v2218 = vpack.c.b16 %v1682, %v1674
  %v2219 = vpack.c.b16 %v1691, %v1683
  %v2220 = vpack.c.b16 %v1692, %v1684
  %v2221 = vpack.c.b16 %v1693, %v1685
  %v2222 = vpack.c.b16 %v1694, %v1686
  %v2223 = vpack.c.b16 %v1695, %v1687
  %v2224 = vpack.c.b16 %v1696, %v1688
  %v2225 = vpack.c.b16 %v1697, %v1689
  %v2226 = vpack.c.b16 %v1698, %v1690
  %v2227 = vpack.c.b16 %v1707, %v1699
  %v2228 = vpack.c.b16 %v1708, %v1700
  %v2229 = vpack.c.b16 %v1709, %v1701
  %v2230 = vpack.c.b16 %v1710, %v1702
  %v2231 = vpack.c.b16 %v1711, %v1703
  %v2232 = vpack.c.b16 %v1712, %v1704
  %v2233 = vpack.c.b16 %v1713, %v1705
  %v2234 = vpack.c.b16 %v1714, %v1706
  %v2235 = vpack.c.b16 %v1723, %v1715
  %v2236 = vpack.c.b16 %v1724, %v1716
  %v2237 = vpack.c.b16 %v1725, %v1717
  %v2238 = vpack.c.b16 %v1726, %v1718
  %v2239 = vpack.c.b16 %v1727, %v1719
  %v2240 = vpack.c.b16 %v1728, %v1720
  %v2241 = vpack.c.b16 %v1729, %v1721
  %v2242 = vpack.c.b16 %v1730, %v1722
  %v2243 = vpack.c.b16 %v1739, %v1731
  %v2244 = vpack.c.b16 %v1740, %v1732
  %v2245 = vpack.c.b16 %v1741, %v1733
  %v2246 = vpack.c.b16 %v1742, %v1734
  %v2247 = vpack.c.b16 %v1743, %v1735
  %v2248 = vpack.c.b16 %v1744, %v1736
  %v2249 = vpack.c.b16 %v1745, %v1737
  %v2250 = vpack.c.b16 %v1746, %v1738
  %v2251 = vpack.c.b16 %v1755, %v1747
  %v2252 = vpack.c.b16 %v1756, %v1748
  %v2253 = vpack.c.b16 %v1757, %v1749
  %v2254 = vpack.c.b16 %v1758, %v1750
  %v2255 = vpack.c.b16 %v1759, %v1751
  %v2256 = vpack.c.b16 %v1760, %v1752
  %v2257 = vpack.c.b16 %v1761, %v1753
  %v2258 = vpack.c.b16 %v1762, %v1754
  %v2259 = vpack.c.b16 %v1771, %v1763
  %v2260 = vpack.c.b16 %v1772, %v1764
  %v2261 = vpack.c.b16 %v1773, %v1765
  %v2262 = vpack.c.b16 %v1774, %v1766
  %v2263 = vpack.c.b16 %v1775, %v1767
  %v2264 = vpack.c.b16 %v1776, %v1768
  %v2265 = vpack.c.b16 %v1777, %v1769
  %v2266 = vpack.c.b16 %v1778, %v1770
  %v2267 = vpack.c.b16 %v1787, %v1779
  %v2268 = vpack.c.b16 %v1788, %v1780
  %v2269 = vpack.c.b16 %v1789, %v1781
  %v2270 = vpack.c.b16 %v1790, %v1782
  %v2271 = vpack.c.b16 %v1791, %v1783
  %v2272 = vpack.c.b16 %v1792, %v1784
  %v2273 = vpack.c.b16 %v1793, %v1785
  %v2274 = vpack.c.b16 %v1794, %v1786
  %v2275 = vpack.c.b16 %v1803, %v1795
  %v2276 = vpack.c.b16 %v1804, %v1796
  %v2277 = vpack.c.b16 %v1805, %v1797
  %v2278 = vpack.c.b16 %v1806, %v1798
  %v2279 = vpack.c.b16 %v1807, %v1799
  %v2280 = vpack.c.b16 %v1808, %v1800
  %v2281 = vpack.c.b16 %v1809, %v1801
  %v2282 = vpack.c.b16 %v1810, %v1802
  %v2283 = vpack.c.b16 %v1819, %v1811
  %v2284 = vpack.c.b16 %v1820, %v1812
  %v2285 = vpack.c.b16 %v1821, %v1813
  %v2286 = vpack.c.b16 %v1822, %v1814
  %v2287 = vpack.c.b16 %v1823, %v1815
  %v2288 = vpack.c.b16 %v1824, %v1816
  %v2289 = vpack.c.b16 %v1825, %v1817
  %v2290 = vpack.c.b16 %v1826, %v1818
  %v2291 = vpack.c.b16 %v1835, %v1827
  %v2292 = vpack.c.b16 %v1836, %v1828
  %v2293 = vpack.c.b16 %v1837, %v1829
  %v2294 = vpack.c.b16 %v1838, %v1830
  %v2295 = vpack.c.b16 %v1839, %v1831
  %v2296 = vpack.c.b16 %v1840, %v1832
  %v2297 = vpack.c.b16 %v1841, %v1833
  %v2298 = vpack.c.b16 %v1842, %v1834
  %v2299 = vpack.c.b16 %v1851, %v1843
  %v2300 = vpack.c.b16 %v1852, %v1844
  %v2301 = vpack.c.b16 %v1853, %v1845
  %v2302 = vpack.c.b16 %v1854, %v1846
  %v2303 = vpack.c.b16 %v1855, %v1847
  %v2304 = vpack.c.b16 %v1856, %v1848
  %v2305 = vpack.c.b16 %v1857, %v1849
  %v2306 = vpack.c.b16 %v1858, %v1850
  %2755 = vmatpush.bf16.msra.mxu0 %v1915
  %2756 = vmatpush.bf16.msra.mxu0 %v1907
  %2757 = vmatpush.bf16.msra.mxu0 %v1899
  %2758 = vmatpush.bf16.msra.mxu0 %v1891
  %2759 = vmatpush.bf16.msra.mxu0 %v1883
  %2760 = vmatpush.bf16.msra.mxu0 %v1875
  %2761 = vmatpush.bf16.msra.mxu0 %v1867
  %2762 = vmatpush.bf16.msra.mxu0 %v1859
  %2763 = vmatmul.bf16.gmra.mxu0 %v501
  %v2764 = vpop.f32.mrf.mxu0
  %v2765 = vadd.f32 %v474, %v2764
  %v2766 = vpop.f32.mrf.mxu0
  %2767 = vdwg.mxu0
  %2768 = vmatpush.bf16.msra.mxu0 %v1979
  %2769 = vmatpush.bf16.msra.mxu0 %v1971
  %2770 = vmatpush.bf16.msra.mxu0 %v1963
  %2771 = vmatpush.bf16.msra.mxu0 %v1955
  %2772 = vmatpush.bf16.msra.mxu0 %v1947
  %2773 = vmatpush.bf16.msra.mxu0 %v1939
  %2774 = vmatpush.bf16.msra.mxu0 %v1931
  %2775 = vmatpush.bf16.msra.mxu0 %v1923
  %2776 = vmatmul.bf16.gmra.mxu0 %v502
  %v2777 = vpop.f32.mrf.mxu0
  %v2778 = vadd.f32 %v2765, %v2777
  %v2779 = vpop.f32.mrf.mxu0
  %2780 = vdwg.mxu0
  %2781 = vmatpush.bf16.msra.mxu0 %v2043
  %2782 = vmatpush.bf16.msra.mxu0 %v2035
  %2783 = vmatpush.bf16.msra.mxu0 %v2027
  %2784 = vmatpush.bf16.msra.mxu0 %v2019
  %2785 = vmatpush.bf16.msra.mxu0 %v2011
  %2786 = vmatpush.bf16.msra.mxu0 %v2003
  %2787 = vmatpush.bf16.msra.mxu0 %v1995
  %2788 = vmatpush.bf16.msra.mxu0 %v1987
  %2789 = vmatmul.bf16.gmra.mxu0 %v503
  %v2790 = vpop.f32.mrf.mxu0
  %v2791 = vadd.f32 %v2778, %v2790
  %v2792 = vpop.f32.mrf.mxu0
  %2793 = vdwg.mxu0
  %2794 = vmatpush.bf16.msra.mxu0 %v2107
  %2795 = vmatpush.bf16.msra.mxu0 %v2099
  %2796 = vmatpush.bf16.msra.mxu0 %v2091
  %2797 = vmatpush.bf16.msra.mxu0 %v2083
  %2798 = vmatpush.bf16.msra.mxu0 %v2075
  %2799 = vmatpush.bf16.msra.mxu0 %v2067
  %2800 = vmatpush.bf16.msra.mxu0 %v2059
  %2801 = vmatpush.bf16.msra.mxu0 %v2051
  %2802 = vmatmul.bf16.gmra.mxu0 %v504
  %v2803 = vpop.f32.mrf.mxu0
  %v2804 = vadd.f32 %v2791, %v2803
  %v2805 = vpop.f32.mrf.mxu0
  %2806 = vdwg.mxu0
  %2807 = vmatpush.bf16.msra.mxu0 %v2171
  %2808 = vmatpush.bf16.msra.mxu0 %v2163
  %2809 = vmatpush.bf16.msra.mxu0 %v2155
  %2810 = vmatpush.bf16.msra.mxu0 %v2147
  %2811 = vmatpush.bf16.msra.mxu0 %v2139
  %2812 = vmatpush.bf16.msra.mxu0 %v2131
  %2813 = vmatpush.bf16.msra.mxu0 %v2123
  %2814 = vmatpush.bf16.msra.mxu0 %v2115
  %2815 = vmatmul.bf16.gmra.mxu0 %v505
  %v2816 = vpop.f32.mrf.mxu0
  %v2817 = vadd.f32 %v2804, %v2816
  %v2818 = vpop.f32.mrf.mxu0
  %2819 = vdwg.mxu0
  %2820 = vmatpush.bf16.msra.mxu0 %v2235
  %2821 = vmatpush.bf16.msra.mxu0 %v2227
  %2822 = vmatpush.bf16.msra.mxu0 %v2219
  %2823 = vmatpush.bf16.msra.mxu0 %v2211
  %2824 = vmatpush.bf16.msra.mxu0 %v2203
  %2825 = vmatpush.bf16.msra.mxu0 %v2195
  %2826 = vmatpush.bf16.msra.mxu0 %v2187
  %2827 = vmatpush.bf16.msra.mxu0 %v2179
  %2828 = vmatmul.bf16.gmra.mxu0 %v506
  %v2829 = vpop.f32.mrf.mxu0
  %v2830 = vadd.f32 %v2817, %v2829
  %v2831 = vpop.f32.mrf.mxu0
  %2832 = vdwg.mxu0
  %2833 = vmatpush.bf16.msra.mxu0 %v2299
  %2834 = vmatpush.bf16.msra.mxu0 %v2291
  %2835 = vmatpush.bf16.msra.mxu0 %v2283
  %2836 = vmatpush.bf16.msra.mxu0 %v2275
  %2837 = vmatpush.bf16.msra.mxu0 %v2267
  %2838 = vmatpush.bf16.msra.mxu0 %v2259
  %2839 = vmatpush.bf16.msra.mxu0 %v2251
  %2840 = vmatpush.bf16.msra.mxu0 %v2243
  %2841 = vmatmul.bf16.gmra.mxu0 %v507
  %v2842 = vpop.f32.mrf.mxu0
  %v2843 = vadd.f32 %v2830, %v2842
  %v2844 = vpop.f32.mrf.mxu0
  %2845 = vdwg.mxu0
  %2846 = vmatpush.bf16.msra.mxu0 %v1916
  %2847 = vmatpush.bf16.msra.mxu0 %v1908
  %2848 = vmatpush.bf16.msra.mxu0 %v1900
  %2849 = vmatpush.bf16.msra.mxu0 %v1892
  %2850 = vmatpush.bf16.msra.mxu0 %v1884
  %2851 = vmatpush.bf16.msra.mxu0 %v1876
  %2852 = vmatpush.bf16.msra.mxu0 %v1868
  %2853 = vmatpush.bf16.msra.mxu0 %v1860
  %2854 = vmatmul.bf16.gmra.mxu0 %v501
  %v2855 = vpop.f32.mrf.mxu0
  %v2856 = vadd.f32 %v475, %v2855
  %v2857 = vpop.f32.mrf.mxu0
  %2858 = vdwg.mxu0
  %2859 = vmatpush.bf16.msra.mxu0 %v1980
  %2860 = vmatpush.bf16.msra.mxu0 %v1972
  %2861 = vmatpush.bf16.msra.mxu0 %v1964
  %2862 = vmatpush.bf16.msra.mxu0 %v1956
  %2863 = vmatpush.bf16.msra.mxu0 %v1948
  %2864 = vmatpush.bf16.msra.mxu0 %v1940
  %2865 = vmatpush.bf16.msra.mxu0 %v1932
  %2866 = vmatpush.bf16.msra.mxu0 %v1924
  %2867 = vmatmul.bf16.gmra.mxu0 %v502
  %v2868 = vpop.f32.mrf.mxu0
  %v2869 = vadd.f32 %v2856, %v2868
  %v2870 = vpop.f32.mrf.mxu0
  %2871 = vdwg.mxu0
  %2872 = vmatpush.bf16.msra.mxu0 %v2044
  %2873 = vmatpush.bf16.msra.mxu0 %v2036
  %2874 = vmatpush.bf16.msra.mxu0 %v2028
  %2875 = vmatpush.bf16.msra.mxu0 %v2020
  %2876 = vmatpush.bf16.msra.mxu0 %v2012
  %2877 = vmatpush.bf16.msra.mxu0 %v2004
  %2878 = vmatpush.bf16.msra.mxu0 %v1996
  %2879 = vmatpush.bf16.msra.mxu0 %v1988
  %2880 = vmatmul.bf16.gmra.mxu0 %v503
  %v2881 = vpop.f32.mrf.mxu0
  %v2882 = vadd.f32 %v2869, %v2881
  %v2883 = vpop.f32.mrf.mxu0
  %2884 = vdwg.mxu0
  %2885 = vmatpush.bf16.msra.mxu0 %v2108
  %2886 = vmatpush.bf16.msra.mxu0 %v2100
  %2887 = vmatpush.bf16.msra.mxu0 %v2092
  %2888 = vmatpush.bf16.msra.mxu0 %v2084
  %2889 = vmatpush.bf16.msra.mxu0 %v2076
  %2890 = vmatpush.bf16.msra.mxu0 %v2068
  %2891 = vmatpush.bf16.msra.mxu0 %v2060
  %2892 = vmatpush.bf16.msra.mxu0 %v2052
  %2893 = vmatmul.bf16.gmra.mxu0 %v504
  %v2894 = vpop.f32.mrf.mxu0
  %v2895 = vadd.f32 %v2882, %v2894
  %v2896 = vpop.f32.mrf.mxu0
  %2897 = vdwg.mxu0
  %2898 = vmatpush.bf16.msra.mxu0 %v2172
  %2899 = vmatpush.bf16.msra.mxu0 %v2164
  %2900 = vmatpush.bf16.msra.mxu0 %v2156
  %2901 = vmatpush.bf16.msra.mxu0 %v2148
  %2902 = vmatpush.bf16.msra.mxu0 %v2140
  %2903 = vmatpush.bf16.msra.mxu0 %v2132
  %2904 = vmatpush.bf16.msra.mxu0 %v2124
  %2905 = vmatpush.bf16.msra.mxu0 %v2116
  %2906 = vmatmul.bf16.gmra.mxu0 %v505
  %v2907 = vpop.f32.mrf.mxu0
  %v2908 = vadd.f32 %v2895, %v2907
  %v2909 = vpop.f32.mrf.mxu0
  %2910 = vdwg.mxu0
  %2911 = vmatpush.bf16.msra.mxu0 %v2236
  %2912 = vmatpush.bf16.msra.mxu0 %v2228
  %2913 = vmatpush.bf16.msra.mxu0 %v2220
  %2914 = vmatpush.bf16.msra.mxu0 %v2212
  %2915 = vmatpush.bf16.msra.mxu0 %v2204
  %2916 = vmatpush.bf16.msra.mxu0 %v2196
  %2917 = vmatpush.bf16.msra.mxu0 %v2188
  %2918 = vmatpush.bf16.msra.mxu0 %v2180
  %2919 = vmatmul.bf16.gmra.mxu0 %v506
  %v2920 = vpop.f32.mrf.mxu0
  %v2921 = vadd.f32 %v2908, %v2920
  %v2922 = vpop.f32.mrf.mxu0
  %2923 = vdwg.mxu0
  %2924 = vmatpush.bf16.msra.mxu0 %v2300
  %2925 = vmatpush.bf16.msra.mxu0 %v2292
  %2926 = vmatpush.bf16.msra.mxu0 %v2284
  %2927 = vmatpush.bf16.msra.mxu0 %v2276
  %2928 = vmatpush.bf16.msra.mxu0 %v2268
  %2929 = vmatpush.bf16.msra.mxu0 %v2260
  %2930 = vmatpush.bf16.msra.mxu0 %v2252
  %2931 = vmatpush.bf16.msra.mxu0 %v2244
  %2932 = vmatmul.bf16.gmra.mxu0 %v507
  %v2933 = vpop.f32.mrf.mxu0
  %v2934 = vadd.f32 %v2921, %v2933
  %v2935 = vpop.f32.mrf.mxu0
  %2936 = vdwg.mxu0
  %2937 = vmatpush.bf16.msra.mxu0 %v1917
  %2938 = vmatpush.bf16.msra.mxu0 %v1909
  %2939 = vmatpush.bf16.msra.mxu0 %v1901
  %2940 = vmatpush.bf16.msra.mxu0 %v1893
  %2941 = vmatpush.bf16.msra.mxu0 %v1885
  %2942 = vmatpush.bf16.msra.mxu0 %v1877
  %2943 = vmatpush.bf16.msra.mxu0 %v1869
  %2944 = vmatpush.bf16.msra.mxu0 %v1861
  %2945 = vmatmul.bf16.gmra.mxu0 %v501
  %v2946 = vpop.f32.mrf.mxu0
  %v2947 = vadd.f32 %v476, %v2946
  %v2948 = vpop.f32.mrf.mxu0
  %2949 = vdwg.mxu0
  %2950 = vmatpush.bf16.msra.mxu0 %v1981
  %2951 = vmatpush.bf16.msra.mxu0 %v1973
  %2952 = vmatpush.bf16.msra.mxu0 %v1965
  %2953 = vmatpush.bf16.msra.mxu0 %v1957
  %2954 = vmatpush.bf16.msra.mxu0 %v1949
  %2955 = vmatpush.bf16.msra.mxu0 %v1941
  %2956 = vmatpush.bf16.msra.mxu0 %v1933
  %2957 = vmatpush.bf16.msra.mxu0 %v1925
  %2958 = vmatmul.bf16.gmra.mxu0 %v502
  %v2959 = vpop.f32.mrf.mxu0
  %v2960 = vadd.f32 %v2947, %v2959
  %v2961 = vpop.f32.mrf.mxu0
  %2962 = vdwg.mxu0
  %2963 = vmatpush.bf16.msra.mxu0 %v2045
  %2964 = vmatpush.bf16.msra.mxu0 %v2037
  %2965 = vmatpush.bf16.msra.mxu0 %v2029
  %2966 = vmatpush.bf16.msra.mxu0 %v2021
  %2967 = vmatpush.bf16.msra.mxu0 %v2013
  %2968 = vmatpush.bf16.msra.mxu0 %v2005
  %2969 = vmatpush.bf16.msra.mxu0 %v1997
  %2970 = vmatpush.bf16.msra.mxu0 %v1989
  %2971 = vmatmul.bf16.gmra.mxu0 %v503
  %v2972 = vpop.f32.mrf.mxu0
  %v2973 = vadd.f32 %v2960, %v2972
  %v2974 = vpop.f32.mrf.mxu0
  %2975 = vdwg.mxu0
  %2976 = vmatpush.bf16.msra.mxu0 %v2109
  %2977 = vmatpush.bf16.msra.mxu0 %v2101
  %2978 = vmatpush.bf16.msra.mxu0 %v2093
  %2979 = vmatpush.bf16.msra.mxu0 %v2085
  %2980 = vmatpush.bf16.msra.mxu0 %v2077
  %2981 = vmatpush.bf16.msra.mxu0 %v2069
  %2982 = vmatpush.bf16.msra.mxu0 %v2061
  %2983 = vmatpush.bf16.msra.mxu0 %v2053
  %2984 = vmatmul.bf16.gmra.mxu0 %v504
  %v2985 = vpop.f32.mrf.mxu0
  %v2986 = vadd.f32 %v2973, %v2985
  %v2987 = vpop.f32.mrf.mxu0
  %2988 = vdwg.mxu0
  %2989 = vmatpush.bf16.msra.mxu0 %v2173
  %2990 = vmatpush.bf16.msra.mxu0 %v2165
  %2991 = vmatpush.bf16.msra.mxu0 %v2157
  %2992 = vmatpush.bf16.msra.mxu0 %v2149
  %2993 = vmatpush.bf16.msra.mxu0 %v2141
  %2994 = vmatpush.bf16.msra.mxu0 %v2133
  %2995 = vmatpush.bf16.msra.mxu0 %v2125
  %2996 = vmatpush.bf16.msra.mxu0 %v2117
  %2997 = vmatmul.bf16.gmra.mxu0 %v505
  %v2998 = vpop.f32.mrf.mxu0
  %v2999 = vadd.f32 %v2986, %v2998
  %v3000 = vpop.f32.mrf.mxu0
  %3001 = vdwg.mxu0
  %3002 = vmatpush.bf16.msra.mxu0 %v2237
  %3003 = vmatpush.bf16.msra.mxu0 %v2229
  %3004 = vmatpush.bf16.msra.mxu0 %v2221
  %3005 = vmatpush.bf16.msra.mxu0 %v2213
  %3006 = vmatpush.bf16.msra.mxu0 %v2205
  %3007 = vmatpush.bf16.msra.mxu0 %v2197
  %3008 = vmatpush.bf16.msra.mxu0 %v2189
  %3009 = vmatpush.bf16.msra.mxu0 %v2181
  %3010 = vmatmul.bf16.gmra.mxu0 %v506
  %v3011 = vpop.f32.mrf.mxu0
  %v3012 = vadd.f32 %v2999, %v3011
  %v3013 = vpop.f32.mrf.mxu0
  %3014 = vdwg.mxu0
  %3015 = vmatpush.bf16.msra.mxu0 %v2301
  %3016 = vmatpush.bf16.msra.mxu0 %v2293
  %3017 = vmatpush.bf16.msra.mxu0 %v2285
  %3018 = vmatpush.bf16.msra.mxu0 %v2277
  %3019 = vmatpush.bf16.msra.mxu0 %v2269
  %3020 = vmatpush.bf16.msra.mxu0 %v2261
  %3021 = vmatpush.bf16.msra.mxu0 %v2253
  %3022 = vmatpush.bf16.msra.mxu0 %v2245
  %3023 = vmatmul.bf16.gmra.mxu0 %v507
  %v3024 = vpop.f32.mrf.mxu0
  %v3025 = vadd.f32 %v3012, %v3024
  %v3026 = vpop.f32.mrf.mxu0
  %3027 = vdwg.mxu0
  %3028 = vmatpush.bf16.msra.mxu0 %v1918
  %3029 = vmatpush.bf16.msra.mxu0 %v1910
  %3030 = vmatpush.bf16.msra.mxu0 %v1902
  %3031 = vmatpush.bf16.msra.mxu0 %v1894
  %3032 = vmatpush.bf16.msra.mxu0 %v1886
  %3033 = vmatpush.bf16.msra.mxu0 %v1878
  %3034 = vmatpush.bf16.msra.mxu0 %v1870
  %3035 = vmatpush.bf16.msra.mxu0 %v1862
  %3036 = vmatmul.bf16.gmra.mxu0 %v501
  %v3037 = vpop.f32.mrf.mxu0
  %v3038 = vadd.f32 %v477, %v3037
  %v3039 = vpop.f32.mrf.mxu0
  %3040 = vdwg.mxu0
  %3041 = vmatpush.bf16.msra.mxu0 %v1982
  %3042 = vmatpush.bf16.msra.mxu0 %v1974
  %3043 = vmatpush.bf16.msra.mxu0 %v1966
  %3044 = vmatpush.bf16.msra.mxu0 %v1958
  %3045 = vmatpush.bf16.msra.mxu0 %v1950
  %3046 = vmatpush.bf16.msra.mxu0 %v1942
  %3047 = vmatpush.bf16.msra.mxu0 %v1934
  %3048 = vmatpush.bf16.msra.mxu0 %v1926
  %3049 = vmatmul.bf16.gmra.mxu0 %v502
  %v3050 = vpop.f32.mrf.mxu0
  %v3051 = vadd.f32 %v3038, %v3050
  %v3052 = vpop.f32.mrf.mxu0
  %3053 = vdwg.mxu0
  %3054 = vmatpush.bf16.msra.mxu0 %v2046
  %3055 = vmatpush.bf16.msra.mxu0 %v2038
  %3056 = vmatpush.bf16.msra.mxu0 %v2030
  %3057 = vmatpush.bf16.msra.mxu0 %v2022
  %3058 = vmatpush.bf16.msra.mxu0 %v2014
  %3059 = vmatpush.bf16.msra.mxu0 %v2006
  %3060 = vmatpush.bf16.msra.mxu0 %v1998
  %3061 = vmatpush.bf16.msra.mxu0 %v1990
  %3062 = vmatmul.bf16.gmra.mxu0 %v503
  %v3063 = vpop.f32.mrf.mxu0
  %v3064 = vadd.f32 %v3051, %v3063
  %v3065 = vpop.f32.mrf.mxu0
  %3066 = vdwg.mxu0
  %3067 = vmatpush.bf16.msra.mxu0 %v2110
  %3068 = vmatpush.bf16.msra.mxu0 %v2102
  %3069 = vmatpush.bf16.msra.mxu0 %v2094
  %3070 = vmatpush.bf16.msra.mxu0 %v2086
  %3071 = vmatpush.bf16.msra.mxu0 %v2078
  %3072 = vmatpush.bf16.msra.mxu0 %v2070
  %3073 = vmatpush.bf16.msra.mxu0 %v2062
  %3074 = vmatpush.bf16.msra.mxu0 %v2054
  %3075 = vmatmul.bf16.gmra.mxu0 %v504
  %v3076 = vpop.f32.mrf.mxu0
  %v3077 = vadd.f32 %v3064, %v3076
  %v3078 = vpop.f32.mrf.mxu0
  %3079 = vdwg.mxu0
  %3080 = vmatpush.bf16.msra.mxu0 %v2174
  %3081 = vmatpush.bf16.msra.mxu0 %v2166
  %3082 = vmatpush.bf16.msra.mxu0 %v2158
  %3083 = vmatpush.bf16.msra.mxu0 %v2150
  %3084 = vmatpush.bf16.msra.mxu0 %v2142
  %3085 = vmatpush.bf16.msra.mxu0 %v2134
  %3086 = vmatpush.bf16.msra.mxu0 %v2126
  %3087 = vmatpush.bf16.msra.mxu0 %v2118
  %3088 = vmatmul.bf16.gmra.mxu0 %v505
  %v3089 = vpop.f32.mrf.mxu0
  %v3090 = vadd.f32 %v3077, %v3089
  %v3091 = vpop.f32.mrf.mxu0
  %3092 = vdwg.mxu0
  %3093 = vmatpush.bf16.msra.mxu0 %v2238
  %3094 = vmatpush.bf16.msra.mxu0 %v2230
  %3095 = vmatpush.bf16.msra.mxu0 %v2222
  %3096 = vmatpush.bf16.msra.mxu0 %v2214
  %3097 = vmatpush.bf16.msra.mxu0 %v2206
  %3098 = vmatpush.bf16.msra.mxu0 %v2198
  %3099 = vmatpush.bf16.msra.mxu0 %v2190
  %3100 = vmatpush.bf16.msra.mxu0 %v2182
  %3101 = vmatmul.bf16.gmra.mxu0 %v506
  %v3102 = vpop.f32.mrf.mxu0
  %v3103 = vadd.f32 %v3090, %v3102
  %v3104 = vpop.f32.mrf.mxu0
  %3105 = vdwg.mxu0
  %3106 = vmatpush.bf16.msra.mxu0 %v2302
  %3107 = vmatpush.bf16.msra.mxu0 %v2294
  %3108 = vmatpush.bf16.msra.mxu0 %v2286
  %3109 = vmatpush.bf16.msra.mxu0 %v2278
  %3110 = vmatpush.bf16.msra.mxu0 %v2270
  %3111 = vmatpush.bf16.msra.mxu0 %v2262
  %3112 = vmatpush.bf16.msra.mxu0 %v2254
  %3113 = vmatpush.bf16.msra.mxu0 %v2246
  %3114 = vmatmul.bf16.gmra.mxu0 %v507
  %v3115 = vpop.f32.mrf.mxu0
  %v3116 = vadd.f32 %v3103, %v3115
  %v3117 = vpop.f32.mrf.mxu0
  %3118 = vdwg.mxu0
  %3119 = vmatpush.bf16.msra.mxu0 %v1919
  %3120 = vmatpush.bf16.msra.mxu0 %v1911
  %3121 = vmatpush.bf16.msra.mxu0 %v1903
  %3122 = vmatpush.bf16.msra.mxu0 %v1895
  %3123 = vmatpush.bf16.msra.mxu0 %v1887
  %3124 = vmatpush.bf16.msra.mxu0 %v1879
  %3125 = vmatpush.bf16.msra.mxu0 %v1871
  %3126 = vmatpush.bf16.msra.mxu0 %v1863
  %3127 = vmatmul.bf16.gmra.mxu0 %v501
  %v3128 = vpop.f32.mrf.mxu0
  %v3129 = vadd.f32 %v478, %v3128
  %v3130 = vpop.f32.mrf.mxu0
  %3131 = vdwg.mxu0
  %3132 = vmatpush.bf16.msra.mxu0 %v1983
  %3133 = vmatpush.bf16.msra.mxu0 %v1975
  %3134 = vmatpush.bf16.msra.mxu0 %v1967
  %3135 = vmatpush.bf16.msra.mxu0 %v1959
  %3136 = vmatpush.bf16.msra.mxu0 %v1951
  %3137 = vmatpush.bf16.msra.mxu0 %v1943
  %3138 = vmatpush.bf16.msra.mxu0 %v1935
  %3139 = vmatpush.bf16.msra.mxu0 %v1927
  %3140 = vmatmul.bf16.gmra.mxu0 %v502
  %v3141 = vpop.f32.mrf.mxu0
  %v3142 = vadd.f32 %v3129, %v3141
  %v3143 = vpop.f32.mrf.mxu0
  %3144 = vdwg.mxu0
  %3145 = vmatpush.bf16.msra.mxu0 %v2047
  %3146 = vmatpush.bf16.msra.mxu0 %v2039
  %3147 = vmatpush.bf16.msra.mxu0 %v2031
  %3148 = vmatpush.bf16.msra.mxu0 %v2023
  %3149 = vmatpush.bf16.msra.mxu0 %v2015
  %3150 = vmatpush.bf16.msra.mxu0 %v2007
  %3151 = vmatpush.bf16.msra.mxu0 %v1999
  %3152 = vmatpush.bf16.msra.mxu0 %v1991
  %3153 = vmatmul.bf16.gmra.mxu0 %v503
  %v3154 = vpop.f32.mrf.mxu0
  %v3155 = vadd.f32 %v3142, %v3154
  %v3156 = vpop.f32.mrf.mxu0
  %3157 = vdwg.mxu0
  %3158 = vmatpush.bf16.msra.mxu0 %v2111
  %3159 = vmatpush.bf16.msra.mxu0 %v2103
  %3160 = vmatpush.bf16.msra.mxu0 %v2095
  %3161 = vmatpush.bf16.msra.mxu0 %v2087
  %3162 = vmatpush.bf16.msra.mxu0 %v2079
  %3163 = vmatpush.bf16.msra.mxu0 %v2071
  %3164 = vmatpush.bf16.msra.mxu0 %v2063
  %3165 = vmatpush.bf16.msra.mxu0 %v2055
  %3166 = vmatmul.bf16.gmra.mxu0 %v504
  %v3167 = vpop.f32.mrf.mxu0
  %v3168 = vadd.f32 %v3155, %v3167
  %v3169 = vpop.f32.mrf.mxu0
  %3170 = vdwg.mxu0
  %3171 = vmatpush.bf16.msra.mxu0 %v2175
  %3172 = vmatpush.bf16.msra.mxu0 %v2167
  %3173 = vmatpush.bf16.msra.mxu0 %v2159
  %3174 = vmatpush.bf16.msra.mxu0 %v2151
  %3175 = vmatpush.bf16.msra.mxu0 %v2143
  %3176 = vmatpush.bf16.msra.mxu0 %v2135
  %3177 = vmatpush.bf16.msra.mxu0 %v2127
  %3178 = vmatpush.bf16.msra.mxu0 %v2119
  %3179 = vmatmul.bf16.gmra.mxu0 %v505
  %v3180 = vpop.f32.mrf.mxu0
  %v3181 = vadd.f32 %v3168, %v3180
  %v3182 = vpop.f32.mrf.mxu0
  %3183 = vdwg.mxu0
  %3184 = vmatpush.bf16.msra.mxu0 %v2239
  %3185 = vmatpush.bf16.msra.mxu0 %v2231
  %3186 = vmatpush.bf16.msra.mxu0 %v2223
  %3187 = vmatpush.bf16.msra.mxu0 %v2215
  %3188 = vmatpush.bf16.msra.mxu0 %v2207
  %3189 = vmatpush.bf16.msra.mxu0 %v2199
  %3190 = vmatpush.bf16.msra.mxu0 %v2191
  %3191 = vmatpush.bf16.msra.mxu0 %v2183
  %3192 = vmatmul.bf16.gmra.mxu0 %v506
  %v3193 = vpop.f32.mrf.mxu0
  %v3194 = vadd.f32 %v3181, %v3193
  %v3195 = vpop.f32.mrf.mxu0
  %3196 = vdwg.mxu0
  %3197 = vmatpush.bf16.msra.mxu0 %v2303
  %3198 = vmatpush.bf16.msra.mxu0 %v2295
  %3199 = vmatpush.bf16.msra.mxu0 %v2287
  %3200 = vmatpush.bf16.msra.mxu0 %v2279
  %3201 = vmatpush.bf16.msra.mxu0 %v2271
  %3202 = vmatpush.bf16.msra.mxu0 %v2263
  %3203 = vmatpush.bf16.msra.mxu0 %v2255
  %3204 = vmatpush.bf16.msra.mxu0 %v2247
  %3205 = vmatmul.bf16.gmra.mxu0 %v507
  %v3206 = vpop.f32.mrf.mxu0
  %v3207 = vadd.f32 %v3194, %v3206
  %v3208 = vpop.f32.mrf.mxu0
  %3209 = vdwg.mxu0
  %3210 = vmatpush.bf16.msra.mxu0 %v1920
  %3211 = vmatpush.bf16.msra.mxu0 %v1912
  %3212 = vmatpush.bf16.msra.mxu0 %v1904
  %3213 = vmatpush.bf16.msra.mxu0 %v1896
  %3214 = vmatpush.bf16.msra.mxu0 %v1888
  %3215 = vmatpush.bf16.msra.mxu0 %v1880
  %3216 = vmatpush.bf16.msra.mxu0 %v1872
  %3217 = vmatpush.bf16.msra.mxu0 %v1864
  %3218 = vmatmul.bf16.gmra.mxu0 %v501
  %v3219 = vpop.f32.mrf.mxu0
  %v3220 = vadd.f32 %v479, %v3219
  %v3221 = vpop.f32.mrf.mxu0
  %3222 = vdwg.mxu0
  %3223 = vmatpush.bf16.msra.mxu0 %v1984
  %3224 = vmatpush.bf16.msra.mxu0 %v1976
  %3225 = vmatpush.bf16.msra.mxu0 %v1968
  %3226 = vmatpush.bf16.msra.mxu0 %v1960
  %3227 = vmatpush.bf16.msra.mxu0 %v1952
  %3228 = vmatpush.bf16.msra.mxu0 %v1944
  %3229 = vmatpush.bf16.msra.mxu0 %v1936
  %3230 = vmatpush.bf16.msra.mxu0 %v1928
  %3231 = vmatmul.bf16.gmra.mxu0 %v502
  %v3232 = vpop.f32.mrf.mxu0
  %v3233 = vadd.f32 %v3220, %v3232
  %v3234 = vpop.f32.mrf.mxu0
  %3235 = vdwg.mxu0
  %3236 = vmatpush.bf16.msra.mxu0 %v2048
  %3237 = vmatpush.bf16.msra.mxu0 %v2040
  %3238 = vmatpush.bf16.msra.mxu0 %v2032
  %3239 = vmatpush.bf16.msra.mxu0 %v2024
  %3240 = vmatpush.bf16.msra.mxu0 %v2016
  %3241 = vmatpush.bf16.msra.mxu0 %v2008
  %3242 = vmatpush.bf16.msra.mxu0 %v2000
  %3243 = vmatpush.bf16.msra.mxu0 %v1992
  %3244 = vmatmul.bf16.gmra.mxu0 %v503
  %v3245 = vpop.f32.mrf.mxu0
  %v3246 = vadd.f32 %v3233, %v3245
  %v3247 = vpop.f32.mrf.mxu0
  %3248 = vdwg.mxu0
  %3249 = vmatpush.bf16.msra.mxu0 %v2112
  %3250 = vmatpush.bf16.msra.mxu0 %v2104
  %3251 = vmatpush.bf16.msra.mxu0 %v2096
  %3252 = vmatpush.bf16.msra.mxu0 %v2088
  %3253 = vmatpush.bf16.msra.mxu0 %v2080
  %3254 = vmatpush.bf16.msra.mxu0 %v2072
  %3255 = vmatpush.bf16.msra.mxu0 %v2064
  %3256 = vmatpush.bf16.msra.mxu0 %v2056
  %3257 = vmatmul.bf16.gmra.mxu0 %v504
  %v3258 = vpop.f32.mrf.mxu0
  %v3259 = vadd.f32 %v3246, %v3258
  %v3260 = vpop.f32.mrf.mxu0
  %3261 = vdwg.mxu0
  %3262 = vmatpush.bf16.msra.mxu0 %v2176
  %3263 = vmatpush.bf16.msra.mxu0 %v2168
  %3264 = vmatpush.bf16.msra.mxu0 %v2160
  %3265 = vmatpush.bf16.msra.mxu0 %v2152
  %3266 = vmatpush.bf16.msra.mxu0 %v2144
  %3267 = vmatpush.bf16.msra.mxu0 %v2136
  %3268 = vmatpush.bf16.msra.mxu0 %v2128
  %3269 = vmatpush.bf16.msra.mxu0 %v2120
  %3270 = vmatmul.bf16.gmra.mxu0 %v505
  %v3271 = vpop.f32.mrf.mxu0
  %v3272 = vadd.f32 %v3259, %v3271
  %v3273 = vpop.f32.mrf.mxu0
  %3274 = vdwg.mxu0
  %3275 = vmatpush.bf16.msra.mxu0 %v2240
  %3276 = vmatpush.bf16.msra.mxu0 %v2232
  %3277 = vmatpush.bf16.msra.mxu0 %v2224
  %3278 = vmatpush.bf16.msra.mxu0 %v2216
  %3279 = vmatpush.bf16.msra.mxu0 %v2208
  %3280 = vmatpush.bf16.msra.mxu0 %v2200
  %3281 = vmatpush.bf16.msra.mxu0 %v2192
  %3282 = vmatpush.bf16.msra.mxu0 %v2184
  %3283 = vmatmul.bf16.gmra.mxu0 %v506
  %v3284 = vpop.f32.mrf.mxu0
  %v3285 = vadd.f32 %v3272, %v3284
  %v3286 = vpop.f32.mrf.mxu0
  %3287 = vdwg.mxu0
  %3288 = vmatpush.bf16.msra.mxu0 %v2304
  %3289 = vmatpush.bf16.msra.mxu0 %v2296
  %3290 = vmatpush.bf16.msra.mxu0 %v2288
  %3291 = vmatpush.bf16.msra.mxu0 %v2280
  %3292 = vmatpush.bf16.msra.mxu0 %v2272
  %3293 = vmatpush.bf16.msra.mxu0 %v2264
  %3294 = vmatpush.bf16.msra.mxu0 %v2256
  %3295 = vmatpush.bf16.msra.mxu0 %v2248
  %3296 = vmatmul.bf16.gmra.mxu0 %v507
  %v3297 = vpop.f32.mrf.mxu0
  %v3298 = vadd.f32 %v3285, %v3297
  %v3299 = vpop.f32.mrf.mxu0
  %3300 = vdwg.mxu0
  %3301 = vmatpush.bf16.msra.mxu0 %v1921
  %3302 = vmatpush.bf16.msra.mxu0 %v1913
  %3303 = vmatpush.bf16.msra.mxu0 %v1905
  %3304 = vmatpush.bf16.msra.mxu0 %v1897
  %3305 = vmatpush.bf16.msra.mxu0 %v1889
  %3306 = vmatpush.bf16.msra.mxu0 %v1881
  %3307 = vmatpush.bf16.msra.mxu0 %v1873
  %3308 = vmatpush.bf16.msra.mxu0 %v1865
  %3309 = vmatmul.bf16.gmra.mxu0 %v501
  %v3310 = vpop.f32.mrf.mxu0
  %v3311 = vadd.f32 %v480, %v3310
  %v3312 = vpop.f32.mrf.mxu0
  %3313 = vdwg.mxu0
  %3314 = vmatpush.bf16.msra.mxu0 %v1985
  %3315 = vmatpush.bf16.msra.mxu0 %v1977
  %3316 = vmatpush.bf16.msra.mxu0 %v1969
  %3317 = vmatpush.bf16.msra.mxu0 %v1961
  %3318 = vmatpush.bf16.msra.mxu0 %v1953
  %3319 = vmatpush.bf16.msra.mxu0 %v1945
  %3320 = vmatpush.bf16.msra.mxu0 %v1937
  %3321 = vmatpush.bf16.msra.mxu0 %v1929
  %3322 = vmatmul.bf16.gmra.mxu0 %v502
  %v3323 = vpop.f32.mrf.mxu0
  %v3324 = vadd.f32 %v3311, %v3323
  %v3325 = vpop.f32.mrf.mxu0
  %3326 = vdwg.mxu0
  %3327 = vmatpush.bf16.msra.mxu0 %v2049
  %3328 = vmatpush.bf16.msra.mxu0 %v2041
  %3329 = vmatpush.bf16.msra.mxu0 %v2033
  %3330 = vmatpush.bf16.msra.mxu0 %v2025
  %3331 = vmatpush.bf16.msra.mxu0 %v2017
  %3332 = vmatpush.bf16.msra.mxu0 %v2009
  %3333 = vmatpush.bf16.msra.mxu0 %v2001
  %3334 = vmatpush.bf16.msra.mxu0 %v1993
  %3335 = vmatmul.bf16.gmra.mxu0 %v503
  %v3336 = vpop.f32.mrf.mxu0
  %v3337 = vadd.f32 %v3324, %v3336
  %v3338 = vpop.f32.mrf.mxu0
  %3339 = vdwg.mxu0
  %3340 = vmatpush.bf16.msra.mxu0 %v2113
  %3341 = vmatpush.bf16.msra.mxu0 %v2105
  %3342 = vmatpush.bf16.msra.mxu0 %v2097
  %3343 = vmatpush.bf16.msra.mxu0 %v2089
  %3344 = vmatpush.bf16.msra.mxu0 %v2081
  %3345 = vmatpush.bf16.msra.mxu0 %v2073
  %3346 = vmatpush.bf16.msra.mxu0 %v2065
  %3347 = vmatpush.bf16.msra.mxu0 %v2057
  %3348 = vmatmul.bf16.gmra.mxu0 %v504
  %v3349 = vpop.f32.mrf.mxu0
  %v3350 = vadd.f32 %v3337, %v3349
  %v3351 = vpop.f32.mrf.mxu0
  %3352 = vdwg.mxu0
  %3353 = vmatpush.bf16.msra.mxu0 %v2177
  %3354 = vmatpush.bf16.msra.mxu0 %v2169
  %3355 = vmatpush.bf16.msra.mxu0 %v2161
  %3356 = vmatpush.bf16.msra.mxu0 %v2153
  %3357 = vmatpush.bf16.msra.mxu0 %v2145
  %3358 = vmatpush.bf16.msra.mxu0 %v2137
  %3359 = vmatpush.bf16.msra.mxu0 %v2129
  %3360 = vmatpush.bf16.msra.mxu0 %v2121
  %3361 = vmatmul.bf16.gmra.mxu0 %v505
  %v3362 = vpop.f32.mrf.mxu0
  %v3363 = vadd.f32 %v3350, %v3362
  %v3364 = vpop.f32.mrf.mxu0
  %3365 = vdwg.mxu0
  %3366 = vmatpush.bf16.msra.mxu0 %v2241
  %3367 = vmatpush.bf16.msra.mxu0 %v2233
  %3368 = vmatpush.bf16.msra.mxu0 %v2225
  %3369 = vmatpush.bf16.msra.mxu0 %v2217
  %3370 = vmatpush.bf16.msra.mxu0 %v2209
  %3371 = vmatpush.bf16.msra.mxu0 %v2201
  %3372 = vmatpush.bf16.msra.mxu0 %v2193
  %3373 = vmatpush.bf16.msra.mxu0 %v2185
  %3374 = vmatmul.bf16.gmra.mxu0 %v506
  %v3375 = vpop.f32.mrf.mxu0
  %v3376 = vadd.f32 %v3363, %v3375
  %v3377 = vpop.f32.mrf.mxu0
  %3378 = vdwg.mxu0
  %3379 = vmatpush.bf16.msra.mxu0 %v2305
  %3380 = vmatpush.bf16.msra.mxu0 %v2297
  %3381 = vmatpush.bf16.msra.mxu0 %v2289
  %3382 = vmatpush.bf16.msra.mxu0 %v2281
  %3383 = vmatpush.bf16.msra.mxu0 %v2273
  %3384 = vmatpush.bf16.msra.mxu0 %v2265
  %3385 = vmatpush.bf16.msra.mxu0 %v2257
  %3386 = vmatpush.bf16.msra.mxu0 %v2249
  %3387 = vmatmul.bf16.gmra.mxu0 %v507
  %v3388 = vpop.f32.mrf.mxu0
  %v3389 = vadd.f32 %v3376, %v3388
  %v3390 = vpop.f32.mrf.mxu0
  %3391 = vdwg.mxu0
  %3392 = vmatpush.bf16.msra.mxu0 %v1922
  %3393 = vmatpush.bf16.msra.mxu0 %v1914
  %3394 = vmatpush.bf16.msra.mxu0 %v1906
  %3395 = vmatpush.bf16.msra.mxu0 %v1898
  %3396 = vmatpush.bf16.msra.mxu0 %v1890
  %3397 = vmatpush.bf16.msra.mxu0 %v1882
  %3398 = vmatpush.bf16.msra.mxu0 %v1874
  %3399 = vmatpush.bf16.msra.mxu0 %v1866
  %3400 = vmatmul.bf16.gmra.mxu0 %v501
  %v3401 = vpop.f32.mrf.mxu0
  %v3402 = vadd.f32 %v481, %v3401
  %v3403 = vpop.f32.mrf.mxu0
  %3404 = vdwg.mxu0
  %3405 = vmatpush.bf16.msra.mxu0 %v1986
  %3406 = vmatpush.bf16.msra.mxu0 %v1978
  %3407 = vmatpush.bf16.msra.mxu0 %v1970
  %3408 = vmatpush.bf16.msra.mxu0 %v1962
  %3409 = vmatpush.bf16.msra.mxu0 %v1954
  %3410 = vmatpush.bf16.msra.mxu0 %v1946
  %3411 = vmatpush.bf16.msra.mxu0 %v1938
  %3412 = vmatpush.bf16.msra.mxu0 %v1930
  %3413 = vmatmul.bf16.gmra.mxu0 %v502
  %v3414 = vpop.f32.mrf.mxu0
  %v3415 = vadd.f32 %v3402, %v3414
  %v3416 = vpop.f32.mrf.mxu0
  %3417 = vdwg.mxu0
  %3418 = vmatpush.bf16.msra.mxu0 %v2050
  %3419 = vmatpush.bf16.msra.mxu0 %v2042
  %3420 = vmatpush.bf16.msra.mxu0 %v2034
  %3421 = vmatpush.bf16.msra.mxu0 %v2026
  %3422 = vmatpush.bf16.msra.mxu0 %v2018
  %3423 = vmatpush.bf16.msra.mxu0 %v2010
  %3424 = vmatpush.bf16.msra.mxu0 %v2002
  %3425 = vmatpush.bf16.msra.mxu0 %v1994
  %3426 = vmatmul.bf16.gmra.mxu0 %v503
  %v3427 = vpop.f32.mrf.mxu0
  %v3428 = vadd.f32 %v3415, %v3427
  %v3429 = vpop.f32.mrf.mxu0
  %3430 = vdwg.mxu0
  %3431 = vmatpush.bf16.msra.mxu0 %v2114
  %3432 = vmatpush.bf16.msra.mxu0 %v2106
  %3433 = vmatpush.bf16.msra.mxu0 %v2098
  %3434 = vmatpush.bf16.msra.mxu0 %v2090
  %3435 = vmatpush.bf16.msra.mxu0 %v2082
  %3436 = vmatpush.bf16.msra.mxu0 %v2074
  %3437 = vmatpush.bf16.msra.mxu0 %v2066
  %3438 = vmatpush.bf16.msra.mxu0 %v2058
  %3439 = vmatmul.bf16.gmra.mxu0 %v504
  %v3440 = vpop.f32.mrf.mxu0
  %v3441 = vadd.f32 %v3428, %v3440
  %v3442 = vpop.f32.mrf.mxu0
  %3443 = vdwg.mxu0
  %3444 = vmatpush.bf16.msra.mxu0 %v2178
  %3445 = vmatpush.bf16.msra.mxu0 %v2170
  %3446 = vmatpush.bf16.msra.mxu0 %v2162
  %3447 = vmatpush.bf16.msra.mxu0 %v2154
  %3448 = vmatpush.bf16.msra.mxu0 %v2146
  %3449 = vmatpush.bf16.msra.mxu0 %v2138
  %3450 = vmatpush.bf16.msra.mxu0 %v2130
  %3451 = vmatpush.bf16.msra.mxu0 %v2122
  %3452 = vmatmul.bf16.gmra.mxu0 %v505
  %v3453 = vpop.f32.mrf.mxu0
  %v3454 = vadd.f32 %v3441, %v3453
  %v3455 = vpop.f32.mrf.mxu0
  %3456 = vdwg.mxu0
  %3457 = vmatpush.bf16.msra.mxu0 %v2242
  %3458 = vmatpush.bf16.msra.mxu0 %v2234
  %3459 = vmatpush.bf16.msra.mxu0 %v2226
  %3460 = vmatpush.bf16.msra.mxu0 %v2218
  %3461 = vmatpush.bf16.msra.mxu0 %v2210
  %3462 = vmatpush.bf16.msra.mxu0 %v2202
  %3463 = vmatpush.bf16.msra.mxu0 %v2194
  %3464 = vmatpush.bf16.msra.mxu0 %v2186
  %3465 = vmatmul.bf16.gmra.mxu0 %v506
  %v3466 = vpop.f32.mrf.mxu0
  %v3467 = vadd.f32 %v3454, %v3466
  %v3468 = vpop.f32.mrf.mxu0
  %3469 = vdwg.mxu0
  %3470 = vmatpush.bf16.msra.mxu0 %v2306
  %3471 = vmatpush.bf16.msra.mxu0 %v2298
  %3472 = vmatpush.bf16.msra.mxu0 %v2290
  %3473 = vmatpush.bf16.msra.mxu0 %v2282
  %3474 = vmatpush.bf16.msra.mxu0 %v2274
  %3475 = vmatpush.bf16.msra.mxu0 %v2266
  %3476 = vmatpush.bf16.msra.mxu0 %v2258
  %3477 = vmatpush.bf16.msra.mxu0 %v2250
  %3478 = vmatmul.bf16.gmra.mxu0 %v507
  %v3479 = vpop.f32.mrf.mxu0
  %v3480 = vadd.f32 %v3467, %v3479
  %v3481 = vpop.f32.mrf.mxu0
  %3482 = vdwg.mxu0
  %v3483 = vmax.f32 %v2843, 0.0
  %v3484 = vmax.f32 %v2934, 0.0
  %v3485 = vmax.f32 %v3025, 0.0
  %v3486 = vmax.f32 %v3116, 0.0
  %v3487 = vmax.f32 %v3207, 0.0
  %v3488 = vmax.f32 %v3298, 0.0
  %v3489 = vmax.f32 %v3389, 0.0
  %v3490 = vmax.f32 %v3480, 0.0
  %v3491 = vpack.c.bf16 %v3483, %v3483
  %v3492 = vpack.c.bf16 %v3484, %v3484
  %v3493 = vpack.c.bf16 %v3485, %v3485
  %v3494 = vpack.c.bf16 %v3486, %v3486
  %v3495 = vpack.c.bf16 %v3487, %v3487
  %v3496 = vpack.c.bf16 %v3488, %v3488
  %v3497 = vpack.c.bf16 %v3489, %v3489
  %v3498 = vpack.c.bf16 %v3490, %v3490
  %v3499 = vld [vmem:[%s3] sm:$0xf]
  %v3500 = vld [vmem:[%s3 + $0x4] sm:$0xf]
  %v3501 = vld [vmem:[%s3 + $0x8] sm:$0xf]
  %v3502 = vld [vmem:[%s3 + $0xc] sm:$0xf]
  %v3503 = vld [vmem:[%s3 + $0x10] sm:$0xf]
  %v3504 = vld [vmem:[%s3 + $0x14] sm:$0xf]
  %v3505 = vld [vmem:[%s3 + $0x18] sm:$0xf]
  %v3506 = vld [vmem:[%s3 + $0x1c] sm:$0xf]
  %v3507 = vld [vmem:[%s3 + $0x20] sm:$0xf]
  %v3508 = vld [vmem:[%s3 + $0x24] sm:$0xf]
  %v3509 = vld [vmem:[%s3 + $0x28] sm:$0xf]
  %v3510 = vld [vmem:[%s3 + $0x2c] sm:$0xf]
  %v3511 = vld [vmem:[%s3 + $0x30] sm:$0xf]
  %v3512 = vld [vmem:[%s3 + $0x34] sm:$0xf]
  %v3513 = vld [vmem:[%s3 + $0x38] sm:$0xf]
  %v3514 = vld [vmem:[%s3 + $0x3c] sm:$0xf]
  %v3515 = vld [vmem:[%s3 + $0x40] sm:$0xf]
  %v3516 = vld [vmem:[%s3 + $0x44] sm:$0xf]
  %v3517 = vld [vmem:[%s3 + $0x48] sm:$0xf]
  %v3518 = vld [vmem:[%s3 + $0x4c] sm:$0xf]
  %v3519 = vld [vmem:[%s3 + $0x50] sm:$0xf]
  %v3520 = vld [vmem:[%s3 + $0x54] sm:$0xf]
  %v3521 = vld [vmem:[%s3 + $0x58] sm:$0xf]
  %v3522 = vld [vmem:[%s3 + $0x5c] sm:$0xf]
  %v3523 = vld [vmem:[%s3 + $0x60] sm:$0xf]
  %v3524 = vld [vmem:[%s3 + $0x64] sm:$0xf]
  %v3525 = vld [vmem:[%s3 + $0x68] sm:$0xf]
  %v3526 = vld [vmem:[%s3 + $0x6c] sm:$0xf]
  %v3527 = vld [vmem:[%s3 + $0x70] sm:$0xf]
  %v3528 = vld [vmem:[%s3 + $0x74] sm:$0xf]
  %v3529 = vld [vmem:[%s3 + $0x78] sm:$0xf]
  %v3530 = vld [vmem:[%s3 + $0x7c] sm:$0xf]
  %v3531 = vld [vmem:[%s3 + $0x80] sm:$0xf]
  %v3532 = vld [vmem:[%s3 + $0x84] sm:$0xf]
  %v3533 = vld [vmem:[%s3 + $0x88] sm:$0xf]
  %v3534 = vld [vmem:[%s3 + $0x8c] sm:$0xf]
  %v3535 = vld [vmem:[%s3 + $0x90] sm:$0xf]
  %v3536 = vld [vmem:[%s3 + $0x94] sm:$0xf]
  %v3537 = vld [vmem:[%s3 + $0x98] sm:$0xf]
  %v3538 = vld [vmem:[%s3 + $0x9c] sm:$0xf]
  %v3539 = vld [vmem:[%s3 + $0xa0] sm:$0xf]
  %v3540 = vld [vmem:[%s3 + $0xa4] sm:$0xf]
  %v3541 = vld [vmem:[%s3 + $0xa8] sm:$0xf]
  %v3542 = vld [vmem:[%s3 + $0xac] sm:$0xf]
  %v3543 = vld [vmem:[%s3 + $0xb0] sm:$0xf]
  %v3544 = vld [vmem:[%s3 + $0xb4] sm:$0xf]
  %v3545 = vld [vmem:[%s3 + $0xb8] sm:$0xf]
  %v3546 = vld [vmem:[%s3 + $0xbc] sm:$0xf]
  %v3547 = vld [vmem:[%s3 + $0xc0] sm:$0xf]
  %v3548 = vld [vmem:[%s3 + $0xc4] sm:$0xf]
  %v3549 = vld [vmem:[%s3 + $0xc8] sm:$0xf]
  %v3550 = vld [vmem:[%s3 + $0xcc] sm:$0xf]
  %v3551 = vld [vmem:[%s3 + $0xd0] sm:$0xf]
  %v3552 = vld [vmem:[%s3 + $0xd4] sm:$0xf]
  %v3553 = vld [vmem:[%s3 + $0xd8] sm:$0xf]
  %v3554 = vld [vmem:[%s3 + $0xdc] sm:$0xf]
  %v3555 = vld [vmem:[%s3 + $0xe0] sm:$0xf]
  %v3556 = vld [vmem:[%s3 + $0xe4] sm:$0xf]
  %v3557 = vld [vmem:[%s3 + $0xe8] sm:$0xf]
  %v3558 = vld [vmem:[%s3 + $0xec] sm:$0xf]
  %v3559 = vld [vmem:[%s3 + $0xf0] sm:$0xf]
  %v3560 = vld [vmem:[%s3 + $0xf4] sm:$0xf]
  %v3561 = vld [vmem:[%s3 + $0xf8] sm:$0xf]
  %v3562 = vld [vmem:[%s3 + $0xfc] sm:$0xf]
  %v3563 = vld [vmem:[%s3 + $0x100] sm:$0xf]
  %v3564 = vld [vmem:[%s3 + $0x104] sm:$0xf]
  %v3565 = vld [vmem:[%s3 + $0x108] sm:$0xf]
  %v3566 = vld [vmem:[%s3 + $0x10c] sm:$0xf]
  %v3567 = vld [vmem:[%s3 + $0x110] sm:$0xf]
  %v3568 = vld [vmem:[%s3 + $0x114] sm:$0xf]
  %v3569 = vld [vmem:[%s3 + $0x118] sm:$0xf]
  %v3570 = vld [vmem:[%s3 + $0x11c] sm:$0xf]
  %v3571 = vld [vmem:[%s3 + $0x120] sm:$0xf]
  %v3572 = vld [vmem:[%s3 + $0x124] sm:$0xf]
  %v3573 = vld [vmem:[%s3 + $0x128] sm:$0xf]
  %v3574 = vld [vmem:[%s3 + $0x12c] sm:$0xf]
  %v3575 = vld [vmem:[%s3 + $0x130] sm:$0xf]
  %v3576 = vld [vmem:[%s3 + $0x134] sm:$0xf]
  %v3577 = vld [vmem:[%s3 + $0x138] sm:$0xf]
  %v3578 = vld [vmem:[%s3 + $0x13c] sm:$0xf]
  %v3579 = vld [vmem:[%s3 + $0x140] sm:$0xf]
  %v3580 = vld [vmem:[%s3 + $0x144] sm:$0xf]
  %v3581 = vld [vmem:[%s3 + $0x148] sm:$0xf]
  %v3582 = vld [vmem:[%s3 + $0x14c] sm:$0xf]
  %v3583 = vld [vmem:[%s3 + $0x150] sm:$0xf]
  %v3584 = vld [vmem:[%s3 + $0x154] sm:$0xf]
  %v3585 = vld [vmem:[%s3 + $0x158] sm:$0xf]
  %v3586 = vld [vmem:[%s3 + $0x15c] sm:$0xf]
  %v3587 = vld [vmem:[%s3 + $0x160] sm:$0xf]
  %v3588 = vld [vmem:[%s3 + $0x164] sm:$0xf]
  %v3589 = vld [vmem:[%s3 + $0x168] sm:$0xf]
  %v3590 = vld [vmem:[%s3 + $0x16c] sm:$0xf]
  %v3591 = vld [vmem:[%s3 + $0x170] sm:$0xf]
  %v3592 = vld [vmem:[%s3 + $0x174] sm:$0xf]
  %v3593 = vld [vmem:[%s3 + $0x178] sm:$0xf]
  %v3594 = vld [vmem:[%s3 + $0x17c] sm:$0xf]
  %v3595 = vld [vmem:[%s3 + $0x180] sm:$0xf]
  %v3596 = vld [vmem:[%s3 + $0x184] sm:$0xf]
  %v3597 = vld [vmem:[%s3 + $0x188] sm:$0xf]
  %v3598 = vld [vmem:[%s3 + $0x18c] sm:$0xf]
  %v3599 = vld [vmem:[%s3 + $0x190] sm:$0xf]
  %v3600 = vld [vmem:[%s3 + $0x194] sm:$0xf]
  %v3601 = vld [vmem:[%s3 + $0x198] sm:$0xf]
  %v3602 = vld [vmem:[%s3 + $0x19c] sm:$0xf]
  %v3603 = vld [vmem:[%s3 + $0x1a0] sm:$0xf]
  %v3604 = vld [vmem:[%s3 + $0x1a4] sm:$0xf]
  %v3605 = vld [vmem:[%s3 + $0x1a8] sm:$0xf]
  %v3606 = vld [vmem:[%s3 + $0x1ac] sm:$0xf]
  %v3607 = vld [vmem:[%s3 + $0x1b0] sm:$0xf]
  %v3608 = vld [vmem:[%s3 + $0x1b4] sm:$0xf]
  %v3609 = vld [vmem:[%s3 + $0x1b8] sm:$0xf]
  %v3610 = vld [vmem:[%s3 + $0x1bc] sm:$0xf]
  %v3611 = vld [vmem:[%s3 + $0x1c0] sm:$0xf]
  %v3612 = vld [vmem:[%s3 + $0x1c4] sm:$0xf]
  %v3613 = vld [vmem:[%s3 + $0x1c8] sm:$0xf]
  %v3614 = vld [vmem:[%s3 + $0x1cc] sm:$0xf]
  %v3615 = vld [vmem:[%s3 + $0x1d0] sm:$0xf]
  %v3616 = vld [vmem:[%s3 + $0x1d4] sm:$0xf]
  %v3617 = vld [vmem:[%s3 + $0x1d8] sm:$0xf]
  %v3618 = vld [vmem:[%s3 + $0x1dc] sm:$0xf]
  %v3619 = vld [vmem:[%s3 + $0x1e0] sm:$0xf]
  %v3620 = vld [vmem:[%s3 + $0x1e4] sm:$0xf]
  %v3621 = vld [vmem:[%s3 + $0x1e8] sm:$0xf]
  %v3622 = vld [vmem:[%s3 + $0x1ec] sm:$0xf]
  %v3623 = vld [vmem:[%s3 + $0x1f0] sm:$0xf]
  %v3624 = vld [vmem:[%s3 + $0x1f4] sm:$0xf]
  %v3625 = vld [vmem:[%s3 + $0x1f8] sm:$0xf]
  %v3626 = vld [vmem:[%s3 + $0x1fc] sm:$0xf]
  %v3627 = vld [vmem:[%s4] sm:$0x1]
  %v3629 = vperm.slane %v3627, 0
  %v3759 = vunpack.c.l.b16 %v3499
  %v3760 = vunpack.c.l.b16 %v3500
  %v3761 = vunpack.c.l.b16 %v3501
  %v3762 = vunpack.c.l.b16 %v3502
  %v3763 = vunpack.c.l.b16 %v3503
  %v3764 = vunpack.c.l.b16 %v3504
  %v3765 = vunpack.c.l.b16 %v3505
  %v3766 = vunpack.c.l.b16 %v3506
  %v3767 = vunpack.c.l.b16 %v3507
  %v3768 = vunpack.c.l.b16 %v3508
  %v3769 = vunpack.c.l.b16 %v3509
  %v3770 = vunpack.c.l.b16 %v3510
  %v3771 = vunpack.c.l.b16 %v3511
  %v3772 = vunpack.c.l.b16 %v3512
  %v3773 = vunpack.c.l.b16 %v3513
  %v3774 = vunpack.c.l.b16 %v3514
  %v3775 = vunpack.c.l.b16 %v3515
  %v3776 = vunpack.c.l.b16 %v3516
  %v3777 = vunpack.c.l.b16 %v3517
  %v3778 = vunpack.c.l.b16 %v3518
  %v3779 = vunpack.c.l.b16 %v3519
  %v3780 = vunpack.c.l.b16 %v3520
  %v3781 = vunpack.c.l.b16 %v3521
  %v3782 = vunpack.c.l.b16 %v3522
  %v3783 = vunpack.c.l.b16 %v3523
  %v3784 = vunpack.c.l.b16 %v3524
  %v3785 = vunpack.c.l.b16 %v3525
  %v3786 = vunpack.c.l.b16 %v3526
  %v3787 = vunpack.c.l.b16 %v3527
  %v3788 = vunpack.c.l.b16 %v3528
  %v3789 = vunpack.c.l.b16 %v3529
  %v3790 = vunpack.c.l.b16 %v3530
  %v3791 = vunpack.c.l.b16 %v3531
  %v3792 = vunpack.c.l.b16 %v3532
  %v3793 = vunpack.c.l.b16 %v3533
  %v3794 = vunpack.c.l.b16 %v3534
  %v3795 = vunpack.c.l.b16 %v3535
  %v3796 = vunpack.c.l.b16 %v3536
  %v3797 = vunpack.c.l.b16 %v3537
  %v3798 = vunpack.c.l.b16 %v3538
  %v3799 = vunpack.c.l.b16 %v3539
  %v3800 = vunpack.c.l.b16 %v3540
  %v3801 = vunpack.c.l.b16 %v3541
  %v3802 = vunpack.c.l.b16 %v3542
  %v3803 = vunpack.c.l.b16 %v3543
  %v3804 = vunpack.c.l.b16 %v3544
  %v3805 = vunpack.c.l.b16 %v3545
  %v3806 = vunpack.c.l.b16 %v3546
  %v3807 = vunpack.c.l.b16 %v3547
  %v3808 = vunpack.c.l.b16 %v3548
  %v3809 = vunpack.c.l.b16 %v3549
  %v3810 = vunpack.c.l.b16 %v3550
  %v3811 = vunpack.c.l.b16 %v3551
  %v3812 = vunpack.c.l.b16 %v3552
  %v3813 = vunpack.c.l.b16 %v3553
  %v3814 = vunpack.c.l.b16 %v3554
  %v3815 = vunpack.c.l.b16 %v3555
  %v3816 = vunpack.c.l.b16 %v3556
  %v3817 = vunpack.c.l.b16 %v3557
  %v3818 = vunpack.c.l.b16 %v3558
  %v3819 = vunpack.c.l.b16 %v3559
  %v3820 = vunpack.c.l.b16 %v3560
  %v3821 = vunpack.c.l.b16 %v3561
  %v3822 = vunpack.c.l.b16 %v3562
  %v3823 = vunpack.c.l.b16 %v3563
  %v3824 = vunpack.c.l.b16 %v3564
  %v3825 = vunpack.c.l.b16 %v3565
  %v3826 = vunpack.c.l.b16 %v3566
  %v3827 = vunpack.c.l.b16 %v3567
  %v3828 = vunpack.c.l.b16 %v3568
  %v3829 = vunpack.c.l.b16 %v3569
  %v3830 = vunpack.c.l.b16 %v3570
  %v3831 = vunpack.c.l.b16 %v3571
  %v3832 = vunpack.c.l.b16 %v3572
  %v3833 = vunpack.c.l.b16 %v3573
  %v3834 = vunpack.c.l.b16 %v3574
  %v3835 = vunpack.c.l.b16 %v3575
  %v3836 = vunpack.c.l.b16 %v3576
  %v3837 = vunpack.c.l.b16 %v3577
  %v3838 = vunpack.c.l.b16 %v3578
  %v3839 = vunpack.c.l.b16 %v3579
  %v3840 = vunpack.c.l.b16 %v3580
  %v3841 = vunpack.c.l.b16 %v3581
  %v3842 = vunpack.c.l.b16 %v3582
  %v3843 = vunpack.c.l.b16 %v3583
  %v3844 = vunpack.c.l.b16 %v3584
  %v3845 = vunpack.c.l.b16 %v3585
  %v3846 = vunpack.c.l.b16 %v3586
  %v3847 = vunpack.c.l.b16 %v3587
  %v3848 = vunpack.c.l.b16 %v3588
  %v3849 = vunpack.c.l.b16 %v3589
  %v3850 = vunpack.c.l.b16 %v3590
  %v3851 = vunpack.c.l.b16 %v3591
  %v3852 = vunpack.c.l.b16 %v3592
  %v3853 = vunpack.c.l.b16 %v3593
  %v3854 = vunpack.c.l.b16 %v3594
  %v3855 = vunpack.c.l.b16 %v3595
  %v3856 = vunpack.c.l.b16 %v3596
  %v3857 = vunpack.c.l.b16 %v3597
  %v3858 = vunpack.c.l.b16 %v3598
  %v3859 = vunpack.c.l.b16 %v3599
  %v3860 = vunpack.c.l.b16 %v3600
  %v3861 = vunpack.c.l.b16 %v3601
  %v3862 = vunpack.c.l.b16 %v3602
  %v3863 = vunpack.c.l.b16 %v3603
  %v3864 = vunpack.c.l.b16 %v3604
  %v3865 = vunpack.c.l.b16 %v3605
  %v3866 = vunpack.c.l.b16 %v3606
  %v3867 = vunpack.c.l.b16 %v3607
  %v3868 = vunpack.c.l.b16 %v3608
  %v3869 = vunpack.c.l.b16 %v3609
  %v3870 = vunpack.c.l.b16 %v3610
  %v3871 = vunpack.c.l.b16 %v3611
  %v3872 = vunpack.c.l.b16 %v3612
  %v3873 = vunpack.c.l.b16 %v3613
  %v3874 = vunpack.c.l.b16 %v3614
  %v3875 = vunpack.c.l.b16 %v3615
  %v3876 = vunpack.c.l.b16 %v3616
  %v3877 = vunpack.c.l.b16 %v3617
  %v3878 = vunpack.c.l.b16 %v3618
  %v3879 = vunpack.c.l.b16 %v3619
  %v3880 = vunpack.c.l.b16 %v3620
  %v3881 = vunpack.c.l.b16 %v3621
  %v3882 = vunpack.c.l.b16 %v3622
  %v3883 = vunpack.c.l.b16 %v3623
  %v3884 = vunpack.c.l.b16 %v3624
  %v3885 = vunpack.c.l.b16 %v3625
  %v3886 = vunpack.c.l.b16 %v3626
  %v3887 = vpack.c.b16 %v3760, %v3759
  %v3888 = vpack.c.b16 %v3762, %v3761
  %v3889 = vpack.c.b16 %v3764, %v3763
  %v3890 = vpack.c.b16 %v3766, %v3765
  %v3891 = vpack.c.b16 %v3768, %v3767
  %v3892 = vpack.c.b16 %v3770, %v3769
  %v3893 = vpack.c.b16 %v3772, %v3771
  %v3894 = vpack.c.b16 %v3774, %v3773
  %v3895 = vpack.c.b16 %v3776, %v3775
  %v3896 = vpack.c.b16 %v3778, %v3777
  %v3897 = vpack.c.b16 %v3780, %v3779
  %v3898 = vpack.c.b16 %v3782, %v3781
  %v3899 = vpack.c.b16 %v3784, %v3783
  %v3900 = vpack.c.b16 %v3786, %v3785
  %v3901 = vpack.c.b16 %v3788, %v3787
  %v3902 = vpack.c.b16 %v3790, %v3789
  %v3903 = vpack.c.b16 %v3792, %v3791
  %v3904 = vpack.c.b16 %v3794, %v3793
  %v3905 = vpack.c.b16 %v3796, %v3795
  %v3906 = vpack.c.b16 %v3798, %v3797
  %v3907 = vpack.c.b16 %v3800, %v3799
  %v3908 = vpack.c.b16 %v3802, %v3801
  %v3909 = vpack.c.b16 %v3804, %v3803
  %v3910 = vpack.c.b16 %v3806, %v3805
  %v3911 = vpack.c.b16 %v3808, %v3807
  %v3912 = vpack.c.b16 %v3810, %v3809
  %v3913 = vpack.c.b16 %v3812, %v3811
  %v3914 = vpack.c.b16 %v3814, %v3813
  %v3915 = vpack.c.b16 %v3816, %v3815
  %v3916 = vpack.c.b16 %v3818, %v3817
  %v3917 = vpack.c.b16 %v3820, %v3819
  %v3918 = vpack.c.b16 %v3822, %v3821
  %v3919 = vpack.c.b16 %v3824, %v3823
  %v3920 = vpack.c.b16 %v3826, %v3825
  %v3921 = vpack.c.b16 %v3828, %v3827
  %v3922 = vpack.c.b16 %v3830, %v3829
  %v3923 = vpack.c.b16 %v3832, %v3831
  %v3924 = vpack.c.b16 %v3834, %v3833
  %v3925 = vpack.c.b16 %v3836, %v3835
  %v3926 = vpack.c.b16 %v3838, %v3837
  %v3927 = vpack.c.b16 %v3840, %v3839
  %v3928 = vpack.c.b16 %v3842, %v3841
  %v3929 = vpack.c.b16 %v3844, %v3843
  %v3930 = vpack.c.b16 %v3846, %v3845
  %v3931 = vpack.c.b16 %v3848, %v3847
  %v3932 = vpack.c.b16 %v3850, %v3849
  %v3933 = vpack.c.b16 %v3852, %v3851
  %v3934 = vpack.c.b16 %v3854, %v3853
  %v3935 = vpack.c.b16 %v3856, %v3855
  %v3936 = vpack.c.b16 %v3858, %v3857
  %v3937 = vpack.c.b16 %v3860, %v3859
  %v3938 = vpack.c.b16 %v3862, %v3861
  %v3939 = vpack.c.b16 %v3864, %v3863
  %v3940 = vpack.c.b16 %v3866, %v3865
  %v3941 = vpack.c.b16 %v3868, %v3867
  %v3942 = vpack.c.b16 %v3870, %v3869
  %v3943 = vpack.c.b16 %v3872, %v3871
  %v3944 = vpack.c.b16 %v3874, %v3873
  %v3945 = vpack.c.b16 %v3876, %v3875
  %v3946 = vpack.c.b16 %v3878, %v3877
  %v3947 = vpack.c.b16 %v3880, %v3879
  %v3948 = vpack.c.b16 %v3882, %v3881
  %v3949 = vpack.c.b16 %v3884, %v3883
  %v3950 = vpack.c.b16 %v3886, %v3885
  %4015 = vmatpush.bf16.msra.mxu0 %v3894
  %4016 = vmatpush.bf16.msra.mxu0 %v3893
  %4017 = vmatpush.bf16.msra.mxu0 %v3892
  %4018 = vmatpush.bf16.msra.mxu0 %v3891
  %4019 = vmatpush.bf16.msra.mxu0 %v3890
  %4020 = vmatpush.bf16.msra.mxu0 %v3889
  %4021 = vmatpush.bf16.msra.mxu0 %v3888
  %4022 = vmatpush.bf16.msra.mxu0 %v3887
  %4023 = vmatmul.bf16.gmra.mxu0 %v3491
  %v4024 = vpop.f32.mrf.mxu0
  %v4025 = vadd.f32 %v3629, %v4024
  %v4026 = vpop.f32.mrf.mxu0
  %4027 = vdwg.mxu0
  %4028 = vmatpush.bf16.msra.mxu0 %v3902
  %4029 = vmatpush.bf16.msra.mxu0 %v3901
  %4030 = vmatpush.bf16.msra.mxu0 %v3900
  %4031 = vmatpush.bf16.msra.mxu0 %v3899
  %4032 = vmatpush.bf16.msra.mxu0 %v3898
  %4033 = vmatpush.bf16.msra.mxu0 %v3897
  %4034 = vmatpush.bf16.msra.mxu0 %v3896
  %4035 = vmatpush.bf16.msra.mxu0 %v3895
  %4036 = vmatmul.bf16.gmra.mxu0 %v3492
  %v4037 = vpop.f32.mrf.mxu0
  %v4038 = vadd.f32 %v4025, %v4037
  %v4039 = vpop.f32.mrf.mxu0
  %4040 = vdwg.mxu0
  %4041 = vmatpush.bf16.msra.mxu0 %v3910
  %4042 = vmatpush.bf16.msra.mxu0 %v3909
  %4043 = vmatpush.bf16.msra.mxu0 %v3908
  %4044 = vmatpush.bf16.msra.mxu0 %v3907
  %4045 = vmatpush.bf16.msra.mxu0 %v3906
  %4046 = vmatpush.bf16.msra.mxu0 %v3905
  %4047 = vmatpush.bf16.msra.mxu0 %v3904
  %4048 = vmatpush.bf16.msra.mxu0 %v3903
  %4049 = vmatmul.bf16.gmra.mxu0 %v3493
  %v4050 = vpop.f32.mrf.mxu0
  %v4051 = vadd.f32 %v4038, %v4050
  %v4052 = vpop.f32.mrf.mxu0
  %4053 = vdwg.mxu0
  %4054 = vmatpush.bf16.msra.mxu0 %v3918
  %4055 = vmatpush.bf16.msra.mxu0 %v3917
  %4056 = vmatpush.bf16.msra.mxu0 %v3916
  %4057 = vmatpush.bf16.msra.mxu0 %v3915
  %4058 = vmatpush.bf16.msra.mxu0 %v3914
  %4059 = vmatpush.bf16.msra.mxu0 %v3913
  %4060 = vmatpush.bf16.msra.mxu0 %v3912
  %4061 = vmatpush.bf16.msra.mxu0 %v3911
  %4062 = vmatmul.bf16.gmra.mxu0 %v3494
  %v4063 = vpop.f32.mrf.mxu0
  %v4064 = vadd.f32 %v4051, %v4063
  %v4065 = vpop.f32.mrf.mxu0
  %4066 = vdwg.mxu0
  %4067 = vmatpush.bf16.msra.mxu0 %v3926
  %4068 = vmatpush.bf16.msra.mxu0 %v3925
  %4069 = vmatpush.bf16.msra.mxu0 %v3924
  %4070 = vmatpush.bf16.msra.mxu0 %v3923
  %4071 = vmatpush.bf16.msra.mxu0 %v3922
  %4072 = vmatpush.bf16.msra.mxu0 %v3921
  %4073 = vmatpush.bf16.msra.mxu0 %v3920
  %4074 = vmatpush.bf16.msra.mxu0 %v3919
  %4075 = vmatmul.bf16.gmra.mxu0 %v3495
  %v4076 = vpop.f32.mrf.mxu0
  %v4077 = vadd.f32 %v4064, %v4076
  %v4078 = vpop.f32.mrf.mxu0
  %4079 = vdwg.mxu0
  %4080 = vmatpush.bf16.msra.mxu0 %v3934
  %4081 = vmatpush.bf16.msra.mxu0 %v3933
  %4082 = vmatpush.bf16.msra.mxu0 %v3932
  %4083 = vmatpush.bf16.msra.mxu0 %v3931
  %4084 = vmatpush.bf16.msra.mxu0 %v3930
  %4085 = vmatpush.bf16.msra.mxu0 %v3929
  %4086 = vmatpush.bf16.msra.mxu0 %v3928
  %4087 = vmatpush.bf16.msra.mxu0 %v3927
  %4088 = vmatmul.bf16.gmra.mxu0 %v3496
  %v4089 = vpop.f32.mrf.mxu0
  %v4090 = vadd.f32 %v4077, %v4089
  %v4091 = vpop.f32.mrf.mxu0
  %4092 = vdwg.mxu0
  %4093 = vmatpush.bf16.msra.mxu0 %v3942
  %4094 = vmatpush.bf16.msra.mxu0 %v3941
  %4095 = vmatpush.bf16.msra.mxu0 %v3940
  %4096 = vmatpush.bf16.msra.mxu0 %v3939
  %4097 = vmatpush.bf16.msra.mxu0 %v3938
  %4098 = vmatpush.bf16.msra.mxu0 %v3937
  %4099 = vmatpush.bf16.msra.mxu0 %v3936
  %4100 = vmatpush.bf16.msra.mxu0 %v3935
  %4101 = vmatmul.bf16.gmra.mxu0 %v3497
  %v4102 = vpop.f32.mrf.mxu0
  %v4103 = vadd.f32 %v4090, %v4102
  %v4104 = vpop.f32.mrf.mxu0
  %4105 = vdwg.mxu0
  %4106 = vmatpush.bf16.msra.mxu0 %v3950
  %4107 = vmatpush.bf16.msra.mxu0 %v3949
  %4108 = vmatpush.bf16.msra.mxu0 %v3948
  %4109 = vmatpush.bf16.msra.mxu0 %v3947
  %4110 = vmatpush.bf16.msra.mxu0 %v3946
  %4111 = vmatpush.bf16.msra.mxu0 %v3945
  %4112 = vmatpush.bf16.msra.mxu0 %v3944
  %4113 = vmatpush.bf16.msra.mxu0 %v3943
  %4114 = vmatmul.bf16.gmra.mxu0 %v3498
  %v4115 = vpop.f32.mrf.mxu0
  %v4116 = vadd.f32 %v4103, %v4115
  %v4117 = vpop.f32.mrf.mxu0
  %4118 = vdwg.mxu0
  %4119 = vst [vmem:[%s5] sm:$0xff] %v4116
  // Predicated region
  $region22: #{mlp_forward.1} parent=0 // pred_check
    _
  $region23: #{mlp_forward.1} parent=0 // pred_check_branch
    %4121 = sbr.rel (0) target = $region25
  $region24: #{mlp_forward.1} parent=0 // pred_region
    _
  $region25: #{mlp_forward.1} parent=0 // pred_fallthru
    _
  // Predicated region
  $region26: #{mlp_forward.1} parent=0 // pred_check
    _
  $region27: #{mlp_forward.1} parent=0 // pred_check_branch
    %4123 = sbr.rel (0) target = $region29
  $region28: #{mlp_forward.1} parent=0 // pred_region
    _
  $region29: #{mlp_forward.1} parent=0 // pred_fallthru
    _

</llo_original>
